<compile_context>
chip_gen: v6e
topology: v6e:2x2x1
jax: 0.10.0
libtpu: 0.0.40
codegen_flags: <defaults>
</compile_context>

<pallas_src>
import numpy as np
import jax
import jax.numpy as jnp
from jax.experimental import pallas as pl
from jax.experimental.pallas import tpu as pltpu

# ---------------- configuration (matches the PyTorch module) ----------------
N_BLK = 2
DIM_X = 16
DIM_Z = 2
MIN_GEN_NODES = 30
DD = DIM_X
dd = DD // 2                        # 8
S_DIM = DD - dd - 1                 # 7
H = max(MIN_GEN_NODES, DIM_X // 4)  # 30
ST_OUT = 2 * (DD - dd) - 1          # 15
FIRST_OUT = DIM_X - DIM_Z           # 14
OUTPUT_SCALE = 1.0
N_COUPLING = 2 * N_BLK              # 4 coupling layers total
LANES = 128
TILE_B = 256                        # batch tile (lanes); multiple of 128


# ---------------- parameter construction (deterministic) ----------------
def linear_init(key, fan_in, fan_out):
    k1, k2 = jax.random.split(key)
    bound = 1.0 / np.sqrt(fan_in)
    W = jax.random.uniform(k1, (fan_in, fan_out), jnp.float32, -bound, bound)
    b = jax.random.uniform(k2, (1, fan_out), jnp.float32, -bound, bound)
    return W, b


def build_params(key):
    keys = jax.random.split(key, 3 + 3 * N_COUPLING)
    # first_nflow_layer MLP
    fw1, fb1 = linear_init(keys[0], DIM_Z, H)
    fw2, fb2 = linear_init(keys[1], H, H)
    fw3, fb3 = linear_init(keys[2], H, FIRST_OUT)
    # coupling-layer MLPs
    cw1, cb1, cw2, cb2, cw3, cb3 = [], [], [], [], [], []
    for k in range(N_COUPLING):
        w1, b1 = linear_init(keys[3 + 3 * k + 0], dd, H)
        w2, b2 = linear_init(keys[3 + 3 * k + 1], H, H)
        w3, b3 = linear_init(keys[3 + 3 * k + 2], H, ST_OUT)
        cw1.append(w1); cb1.append(b1)
        cw2.append(w2); cb2.append(b2)
        cw3.append(w3); cb3.append(b3)
    cw1 = jnp.stack(cw1); cb1 = jnp.stack(cb1)
    cw2 = jnp.stack(cw2); cb2 = jnp.stack(cb2)
    cw3 = jnp.stack(cw3); cb3 = jnp.stack(cb3)

    # fixed permutations exactly as the PyTorch module builds them
    # perm_mats[ii] is used as x @ P (batch, features layout): P[perm[j], j] = 1
    perm_mats = np.zeros((N_BLK, DIM_X, DIM_X), np.float32)
    for ii in range(N_BLK):
        np.random.seed(ii)
        p = np.random.permutation(DIM_X)
        perm_mats[ii, p, np.arange(DIM_X)] = 1.0
    perm_mats = jnp.asarray(perm_mats)

    return (fw1, fb1, fw2, fb2, fw3, fb3,
            cw1, cb1, cw2, cb2, cw3, cb3, perm_mats)


# ---------------- host-side parameter slab packer ----------------
def pack_slab(params):
    """Pack every parameter (in transposed, (out, in) orientation) into one
    (rows, 128) f32 slab; each entry starts on an 8-row (sublane-tile) boundary."""
    (fw1, fb1, fw2, fb2, fw3, fb3,
     cw1, cb1, cw2, cb2, cw3, cb3, perm) = params

    entries = {}
    chunks = []
    row = 0

    def add(name, arr):
        nonlocal row
        a = np.asarray(arr, np.float32)
        assert a.ndim == 2 and a.shape[1] <= LANES, (name, a.shape)
        entries[name] = (row, a.shape[0], a.shape[1])
        chunks.append((row, a))
        row += ((a.shape[0] + 7) // 8) * 8   # keep 8-row alignment for clean sub-tile loads

    # first flow MLP (store W^T so the kernel computes y = W^T @ x + b)
    add('fw1', np.asarray(fw1).T); add('fb1', np.asarray(fb1).T)
    add('fw2', np.asarray(fw2).T); add('fb2', np.asarray(fb2).T)
    add('fw3', np.asarray(fw3).T); add('fb3', np.asarray(fb3).T)

    # coupling MLPs; split the last layer into the s-branch (7 rows) and t-branch (8 rows)
    for k in range(N_COUPLING):
        add(f'cw1_{k}', np.asarray(cw1[k]).T); add(f'cb1_{k}', np.asarray(cb1[k]).T)
        add(f'cw2_{k}', np.asarray(cw2[k]).T); add(f'cb2_{k}', np.asarray(cb2[k]).T)
        w3 = np.asarray(cw3[k]); b3 = np.asarray(cb3[k])
        add(f'cw3s_{k}', w3[:, :S_DIM].T); add(f'cb3s_{k}', b3[:, :S_DIM].T)
        add(f'cw3t_{k}', w3[:, S_DIM:].T); add(f'cb3t_{k}', b3[:, S_DIM:].T)

    # permutations, pre-split by the width of the (left, right) state pieces so the
    # kernel never has to concatenate: xp = PL @ left + PR @ right
    permn = np.asarray(perm)
    for ii in range(N_BLK):
        Psel = permn[ii].T                   # Psel[j, perm[j]] = 1 (transposed layout)
        split = DIM_Z if ii == 0 else dd     # block 0 sees [z(2); mlp_out(14)]
        add(f'permL_{ii}', Psel[:, :split])
        add(f'permR_{ii}', Psel[:, split:])

    # volume-preserving map: s_full = summat @ s, rows 0..6 = s, row 7 = -sum(s)
    add('summat', np.concatenate([np.eye(S_DIM, dtype=np.float32),
                                  -np.ones((1, S_DIM), np.float32)], axis=0))

    total = max(8, ((row + 7) // 8) * 8)
    slab = np.zeros((total, LANES), np.float32)
    for r0, a in chunks:
        slab[r0:r0 + a.shape[0], :a.shape[1]] = a
    return jnp.asarray(slab), entries


# ---------------- Pallas kernel ----------------
def _make_kernel(entries):
    def get(p_ref, name):
        r0, nr, nc = entries[name]
        return p_ref[r0:r0 + nr, 0:nc]           # static sub-tile slice of the slab

    def mm(a, b):
        return jnp.dot(a, b, preferred_element_type=jnp.float32)

    def kernel(z_ref, p_ref, out_ref):
        # transposed layout: activations are (features, TILE_B) -> batch on lanes
        z = z_ref[...]                                           # (DIM_Z, TB)

        # FirstNFlowLayer MLP: relu, relu, linear
        h = jnp.maximum(mm(get(p_ref, 'fw1'), z) + get(p_ref, 'fb1'), 0.0)
        h = jnp.maximum(mm(get(p_ref, 'fw2'), h) + get(p_ref, 'fb2'), 0.0)
        o = mm(get(p_ref, 'fw3'), h) + get(p_ref, 'fb3')         # (FIRST_OUT, TB)

        summat = get(p_ref, 'summat')                            # (dd, S_DIM)

        def coupling(x1, x2, k):
            hc = jnp.maximum(mm(get(p_ref, f'cw1_{k}'), x1) + get(p_ref, f'cb1_{k}'), 0.0)
            hc = jnp.maximum(mm(get(p_ref, f'cw2_{k}'), hc) + get(p_ref, f'cb2_{k}'), 0.0)
            s = 0.1 * jnp.tanh(mm(get(p_ref, f'cw3s_{k}'), hc) + get(p_ref, f'cb3s_{k}'))
            t = mm(get(p_ref, f'cw3t_{k}'), hc) + get(p_ref, f'cb3t_{k}')
            s_full = mm(summat, s)               # rows 0..6 = s, row 7 = -sum(s)
            return x2 * jnp.exp(s_full) + t      # trans_x

        # state = concat([left, right]) conceptually; never materialized
        left, right = z, o                       # (2, TB), (14, TB)
        for ii in range(N_BLK):
            # permutation as split one-hot matmuls (exact, MXU, no concat)
            xp = (mm(get(p_ref, f'permL_{ii}'), left)
                  + mm(get(p_ref, f'permR_{ii}'), right))        # (DIM_X, TB)
            x1 = xp[:dd, :]
            x2 = xp[dd:, :]
            t1 = coupling(x1, x2, 2 * ii)        # layer 1 output = [t1, x1]
            t2 = coupling(t1, x1, 2 * ii + 1)    # layer 2 output = [t2, t1]
            left, right = t2, t1

        # mdl == 'gaussian', learn_var=False; two aligned (8, TB) lane-dense stores
        out_ref[0:dd, :] = OUTPUT_SCALE * (jax.nn.sigmoid(left) - 0.5)
        out_ref[dd:DIM_X, :] = OUTPUT_SCALE * (jax.nn.sigmoid(right) - 0.5)

    return kernel


def make_decoder_gin_forward(entries, tile_b=TILE_B):
    kernel = _make_kernel(entries)

    def forward(z, slab):
        B = z.shape[0]
        b_pad = ((B + tile_b - 1) // tile_b) * tile_b
        zT = jnp.pad(z.astype(jnp.float32), ((0, b_pad - B), (0, 0))).T   # (DIM_Z, b_pad)
        grid = (b_pad // tile_b,)

        flops_per_sample = 2 * (
            DIM_Z * H + H * H + H * FIRST_OUT
            + N_COUPLING * (dd * H + H * H + H * S_DIM + H * dd + S_DIM * dd)
            + DIM_X * DIM_Z + DIM_X * FIRST_OUT
            + (N_BLK - 1) * 2 * DIM_X * dd)
        cost = pl.CostEstimate(
            flops=flops_per_sample * b_pad,
            transcendentals=(N_COUPLING * (S_DIM + dd) + DIM_X) * b_pad,
            bytes_accessed=int(slab.size) * 4 + b_pad * (DIM_Z + DIM_X) * 4)

        out_T = pl.pallas_call(
            kernel,
            out_shape=jax.ShapeDtypeStruct((DIM_X, b_pad), jnp.float32),
            grid=grid,
            in_specs=[
                pl.BlockSpec((DIM_Z, tile_b), lambda i: (0, i)),   # batch-tiled z
                pl.BlockSpec(slab.shape, lambda i: (0, 0)),        # weights: VMEM-resident
            ],
            out_specs=pl.BlockSpec((DIM_X, tile_b), lambda i: (0, i)),
            compiler_params=pltpu.CompilerParams(
                dimension_semantics=("parallel",)),                # v7x: 2 TCs split batch
            cost_estimate=cost,
        )(zT, slab)
        return out_T[:, :B].T                                      # (B, DIM_X)

    return jax.jit(forward)


# ---------------- pure-JAX reference (original batch-major layout) ----------------
def reference_forward(z, params):
    hp = jax.lax.Precision.HIGHEST
    dot = lambda a, b: jnp.dot(a, b, precision=hp)
    (fw1, fb1, fw2, fb2, fw3, fb3,
     cw1, cb1, cw2, cb2, cw3, cb3, perm) = params
    h = jnp.maximum(dot(z, fw1) + fb1, 0.0)
    h = jnp.maximum(dot(h, fw2) + fb2, 0.0)
    x = jnp.concatenate([z, dot(h, fw3) + fb3], axis=-1)

    def coupling(x, W1, b1, W2, b2, W3, b3):
        x1, x2 = x[:, :dd], x[:, dd:]
        h = jnp.maximum(dot(x1, W1) + b1, 0.0)
        h = jnp.maximum(dot(h, W2) + b2, 0.0)
        st = dot(h, W3) + b3
        s = 0.1 * jnp.tanh(st[:, :S_DIM])
        t = st[:, S_DIM:]
        s_full = jnp.concatenate([s, -jnp.sum(s, axis=-1, keepdims=True)], axis=-1)
        return jnp.concatenate([x2 * jnp.exp(s_full) + t, x1], axis=-1)

    for ii in range(N_BLK):
        x = dot(x, perm[ii])
        for jj in range(2):
            k = 2 * ii + jj
            x = coupling(x, cw1[k], cb1[k], cw2[k], cb2[k], cw3[k], cb3[k])
    return OUTPUT_SCALE * (jax.nn.sigmoid(x) - 0.5)


if __name__ == "__main__":
    key = jax.random.PRNGKey(0)
    k_param, k_z = jax.random.split(key)
    params = build_params(k_param)
    slab, entries = pack_slab(params)

    forward = make_decoder_gin_forward(entries, tile_b=TILE_B)

    B = 500   # not a tile multiple -> exercises the padded batch grid (grid = (2,))
    z = jax.random.normal(k_z, (B, DIM_Z), jnp.float32)

    out = forward(z, slab)
    out = jax.block_until_ready(out)

    ref = reference_forward(z, params)
    # tolerance covers possible bf16 MXU passes at DEFAULT matmul precision inside the
    # kernel vs. the f32 (HIGHEST) reference; structural errors are orders larger.
    np.testing.assert_allclose(np.asarray(out), np.asarray(ref), rtol=5e-3, atol=5e-3)
    assert out.shape == (B, DIM_X) and out.dtype == jnp.float32
    print("KERNEL_OK")
</pallas_src>

<mosaic_0001>
module attributes {stable_mosaic.version = 11 : i64} {
  func.func @kernel(%arg0: i32, %arg1: memref<2x256xf32, #tpu.memory_space<vmem>>, %arg2: memref<872x128xf32, #tpu.memory_space<vmem>>, %arg3: memref<16x256xf32, #tpu.memory_space<vmem>>) attributes {dimension_semantics = [#tpu.dimension_semantics<parallel>], iteration_bounds = array<i64: 2>, scalar_prefetch = 0 : i64, scratch_operands = 0 : i64, tpu.core_type = #tpu.core_type<tc>, window_params = [{transform_indices = @transform_0, window_bounds = array<i64: 2, 256>}, {pipeline_mode = #tpu.pipeline_mode<synchronous>, transform_indices = @transform_1, window_bounds = array<i64: 872, 128>}, {transform_indices = @transform_2, window_bounds = array<i64: 16, 256>}]} {
    %c0 = arith.constant 0 : index
    %c0_0 = arith.constant 0 : index
    %0 = vector.load %arg1[%c0, %c0_0] : memref<2x256xf32, #tpu.memory_space<vmem>>, vector<2x256xf32>
    %c0_1 = arith.constant 0 : index
    %c0_2 = arith.constant 0 : index
    %1 = vector.load %arg2[%c0_1, %c0_2] : memref<872x128xf32, #tpu.memory_space<vmem>>, vector<30x2xf32>
    %cst = arith.constant dense<0.000000e+00> : vector<30x256xf32>
    %2 = tpu.matmul %1, %0, %cst {dimension_numbers = #tpu.dot_dimension_numbers<[1], [0], [0], [1], [0, 0, 1, 1], [], []>} : vector<30x2xf32>, vector<2x256xf32>, vector<30x256xf32> -> vector<30x256xf32>
    %c32 = arith.constant 32 : index
    %c0_3 = arith.constant 0 : index
    %3 = vector.load %arg2[%c32, %c0_3] : memref<872x128xf32, #tpu.memory_space<vmem>>, vector<30x1xf32>
    %4 = vector.broadcast %3 : vector<30x1xf32> to vector<30x256xf32>
    %5 = arith.addf %2, %4 : vector<30x256xf32>
    %cst_4 = arith.constant 0.000000e+00 : f32
    %6 = vector.broadcast %cst_4 : f32 to vector<30x256xf32>
    %7 = arith.maximumf %5, %6 : vector<30x256xf32>
    %c64 = arith.constant 64 : index
    %c0_5 = arith.constant 0 : index
    %8 = vector.load %arg2[%c64, %c0_5] : memref<872x128xf32, #tpu.memory_space<vmem>>, vector<30x30xf32>
    %cst_6 = arith.constant dense<0.000000e+00> : vector<30x256xf32>
    %9 = tpu.matmul %8, %7, %cst_6 {dimension_numbers = #tpu.dot_dimension_numbers<[1], [0], [0], [1], [0, 0, 1, 1], [], []>} : vector<30x30xf32>, vector<30x256xf32>, vector<30x256xf32> -> vector<30x256xf32>
    %c96 = arith.constant 96 : index
    %c0_7 = arith.constant 0 : index
    %10 = vector.load %arg2[%c96, %c0_7] : memref<872x128xf32, #tpu.memory_space<vmem>>, vector<30x1xf32>
    %11 = vector.broadcast %10 : vector<30x1xf32> to vector<30x256xf32>
    %12 = arith.addf %9, %11 : vector<30x256xf32>
    %cst_8 = arith.constant 0.000000e+00 : f32
    %13 = vector.broadcast %cst_8 : f32 to vector<30x256xf32>
    %14 = arith.maximumf %12, %13 : vector<30x256xf32>
    %c128 = arith.constant 128 : index
    %c0_9 = arith.constant 0 : index
    %15 = vector.load %arg2[%c128, %c0_9] : memref<872x128xf32, #tpu.memory_space<vmem>>, vector<14x30xf32>
    %cst_10 = arith.constant dense<0.000000e+00> : vector<14x256xf32>
    %16 = tpu.matmul %15, %14, %cst_10 {dimension_numbers = #tpu.dot_dimension_numbers<[1], [0], [0], [1], [0, 0, 1, 1], [], []>} : vector<14x30xf32>, vector<30x256xf32>, vector<14x256xf32> -> vector<14x256xf32>
    %c144 = arith.constant 144 : index
    %c0_11 = arith.constant 0 : index
    %17 = vector.load %arg2[%c144, %c0_11] : memref<872x128xf32, #tpu.memory_space<vmem>>, vector<14x1xf32>
    %18 = vector.broadcast %17 : vector<14x1xf32> to vector<14x256xf32>
    %19 = arith.addf %16, %18 : vector<14x256xf32>
    %c864 = arith.constant 864 : index
    %c0_12 = arith.constant 0 : index
    %20 = vector.load %arg2[%c864, %c0_12] : memref<872x128xf32, #tpu.memory_space<vmem>>, vector<8x7xf32>
    %c800 = arith.constant 800 : index
    %c0_13 = arith.constant 0 : index
    %21 = vector.load %arg2[%c800, %c0_13] : memref<872x128xf32, #tpu.memory_space<vmem>>, vector<16x2xf32>
    %cst_14 = arith.constant dense<0.000000e+00> : vector<16x256xf32>
    %22 = tpu.matmul %21, %0, %cst_14 {dimension_numbers = #tpu.dot_dimension_numbers<[1], [0], [0], [1], [0, 0, 1, 1], [], []>} : vector<16x2xf32>, vector<2x256xf32>, vector<16x256xf32> -> vector<16x256xf32>
    %c816 = arith.constant 816 : index
    %c0_15 = arith.constant 0 : index
    %23 = vector.load %arg2[%c816, %c0_15] : memref<872x128xf32, #tpu.memory_space<vmem>>, vector<16x14xf32>
    %cst_16 = arith.constant dense<0.000000e+00> : vector<16x256xf32>
    %24 = tpu.matmul %23, %19, %cst_16 {dimension_numbers = #tpu.dot_dimension_numbers<[1], [0], [0], [1], [0, 0, 1, 1], [], []>} : vector<16x14xf32>, vector<14x256xf32>, vector<16x256xf32> -> vector<16x256xf32>
    %25 = arith.addf %22, %24 : vector<16x256xf32>
    %26 = vector.extract_strided_slice %25 {offsets = [0, 0], sizes = [8, 256], strides = [1, 1]} : vector<16x256xf32> to vector<8x256xf32>
    %27 = vector.extract_strided_slice %25 {offsets = [8, 0], sizes = [8, 256], strides = [1, 1]} : vector<16x256xf32> to vector<8x256xf32>
    %c160 = arith.constant 160 : index
    %c0_17 = arith.constant 0 : index
    %28 = vector.load %arg2[%c160, %c0_17] : memref<872x128xf32, #tpu.memory_space<vmem>>, vector<30x8xf32>
    %cst_18 = arith.constant dense<0.000000e+00> : vector<30x256xf32>
    %29 = tpu.matmul %28, %26, %cst_18 {dimension_numbers = #tpu.dot_dimension_numbers<[1], [0], [0], [1], [0, 0, 1, 1], [], []>} : vector<30x8xf32>, vector<8x256xf32>, vector<30x256xf32> -> vector<30x256xf32>
    %c192 = arith.constant 192 : index
    %c0_19 = arith.constant 0 : index
    %30 = vector.load %arg2[%c192, %c0_19] : memref<872x128xf32, #tpu.memory_space<vmem>>, vector<30x1xf32>
    %31 = vector.broadcast %30 : vector<30x1xf32> to vector<30x256xf32>
    %32 = arith.addf %29, %31 : vector<30x256xf32>
    %cst_20 = arith.constant 0.000000e+00 : f32
    %33 = vector.broadcast %cst_20 : f32 to vector<30x256xf32>
    %34 = arith.maximumf %32, %33 : vector<30x256xf32>
    %c224 = arith.constant 224 : index
    %c0_21 = arith.constant 0 : index
    %35 = vector.load %arg2[%c224, %c0_21] : memref<872x128xf32, #tpu.memory_space<vmem>>, vector<30x30xf32>
    %cst_22 = arith.constant dense<0.000000e+00> : vector<30x256xf32>
    %36 = tpu.matmul %35, %34, %cst_22 {dimension_numbers = #tpu.dot_dimension_numbers<[1], [0], [0], [1], [0, 0, 1, 1], [], []>} : vector<30x30xf32>, vector<30x256xf32>, vector<30x256xf32> -> vector<30x256xf32>
    %c256 = arith.constant 256 : index
    %c0_23 = arith.constant 0 : index
    %37 = vector.load %arg2[%c256, %c0_23] : memref<872x128xf32, #tpu.memory_space<vmem>>, vector<30x1xf32>
    %38 = vector.broadcast %37 : vector<30x1xf32> to vector<30x256xf32>
    %39 = arith.addf %36, %38 : vector<30x256xf32>
    %cst_24 = arith.constant 0.000000e+00 : f32
    %40 = vector.broadcast %cst_24 : f32 to vector<30x256xf32>
    %41 = arith.maximumf %39, %40 : vector<30x256xf32>
    %c288 = arith.constant 288 : index
    %c0_25 = arith.constant 0 : index
    %42 = vector.load %arg2[%c288, %c0_25] : memref<872x128xf32, #tpu.memory_space<vmem>>, vector<7x30xf32>
    %cst_26 = arith.constant dense<0.000000e+00> : vector<7x256xf32>
    %43 = tpu.matmul %42, %41, %cst_26 {dimension_numbers = #tpu.dot_dimension_numbers<[1], [0], [0], [1], [0, 0, 1, 1], [], []>} : vector<7x30xf32>, vector<30x256xf32>, vector<7x256xf32> -> vector<7x256xf32>
    %c296 = arith.constant 296 : index
    %c0_27 = arith.constant 0 : index
    %44 = vector.load %arg2[%c296, %c0_27] : memref<872x128xf32, #tpu.memory_space<vmem>>, vector<7x1xf32>
    %45 = vector.broadcast %44 : vector<7x1xf32> to vector<7x256xf32>
    %46 = arith.addf %43, %45 : vector<7x256xf32>
    %47 = math.tanh %46 : vector<7x256xf32>
    %cst_28 = arith.constant 1.000000e-01 : f32
    %48 = vector.broadcast %cst_28 : f32 to vector<7x256xf32>
    %49 = arith.mulf %48, %47 : vector<7x256xf32>
    %c304 = arith.constant 304 : index
    %c0_29 = arith.constant 0 : index
    %50 = vector.load %arg2[%c304, %c0_29] : memref<872x128xf32, #tpu.memory_space<vmem>>, vector<8x30xf32>
    %cst_30 = arith.constant dense<0.000000e+00> : vector<8x256xf32>
    %51 = tpu.matmul %50, %41, %cst_30 {dimension_numbers = #tpu.dot_dimension_numbers<[1], [0], [0], [1], [0, 0, 1, 1], [], []>} : vector<8x30xf32>, vector<30x256xf32>, vector<8x256xf32> -> vector<8x256xf32>
    %c312 = arith.constant 312 : index
    %c0_31 = arith.constant 0 : index
    %52 = vector.load %arg2[%c312, %c0_31] : memref<872x128xf32, #tpu.memory_space<vmem>>, vector<8x1xf32>
    %53 = vector.broadcast %52 : vector<8x1xf32> to vector<8x256xf32>
    %54 = arith.addf %51, %53 : vector<8x256xf32>
    %cst_32 = arith.constant dense<0.000000e+00> : vector<8x256xf32>
    %55 = tpu.matmul %20, %49, %cst_32 {dimension_numbers = #tpu.dot_dimension_numbers<[1], [0], [0], [1], [0, 0, 1, 1], [], []>} : vector<8x7xf32>, vector<7x256xf32>, vector<8x256xf32> -> vector<8x256xf32>
    %56 = math.exp %55 : vector<8x256xf32>
    %57 = arith.mulf %27, %56 : vector<8x256xf32>
    %58 = arith.addf %57, %54 : vector<8x256xf32>
    %c320 = arith.constant 320 : index
    %c0_33 = arith.constant 0 : index
    %59 = vector.load %arg2[%c320, %c0_33] : memref<872x128xf32, #tpu.memory_space<vmem>>, vector<30x8xf32>
    %cst_34 = arith.constant dense<0.000000e+00> : vector<30x256xf32>
    %60 = tpu.matmul %59, %58, %cst_34 {dimension_numbers = #tpu.dot_dimension_numbers<[1], [0], [0], [1], [0, 0, 1, 1], [], []>} : vector<30x8xf32>, vector<8x256xf32>, vector<30x256xf32> -> vector<30x256xf32>
    %c352 = arith.constant 352 : index
    %c0_35 = arith.constant 0 : index
    %61 = vector.load %arg2[%c352, %c0_35] : memref<872x128xf32, #tpu.memory_space<vmem>>, vector<30x1xf32>
    %62 = vector.broadcast %61 : vector<30x1xf32> to vector<30x256xf32>
    %63 = arith.addf %60, %62 : vector<30x256xf32>
    %cst_36 = arith.constant 0.000000e+00 : f32
    %64 = vector.broadcast %cst_36 : f32 to vector<30x256xf32>
    %65 = arith.maximumf %63, %64 : vector<30x256xf32>
    %c384 = arith.constant 384 : index
    %c0_37 = arith.constant 0 : index
    %66 = vector.load %arg2[%c384, %c0_37] : memref<872x128xf32, #tpu.memory_space<vmem>>, vector<30x30xf32>
    %cst_38 = arith.constant dense<0.000000e+00> : vector<30x256xf32>
    %67 = tpu.matmul %66, %65, %cst_38 {dimension_numbers = #tpu.dot_dimension_numbers<[1], [0], [0], [1], [0, 0, 1, 1], [], []>} : vector<30x30xf32>, vector<30x256xf32>, vector<30x256xf32> -> vector<30x256xf32>
    %c416 = arith.constant 416 : index
    %c0_39 = arith.constant 0 : index
    %68 = vector.load %arg2[%c416, %c0_39] : memref<872x128xf32, #tpu.memory_space<vmem>>, vector<30x1xf32>
    %69 = vector.broadcast %68 : vector<30x1xf32> to vector<30x256xf32>
    %70 = arith.addf %67, %69 : vector<30x256xf32>
    %cst_40 = arith.constant 0.000000e+00 : f32
    %71 = vector.broadcast %cst_40 : f32 to vector<30x256xf32>
    %72 = arith.maximumf %70, %71 : vector<30x256xf32>
    %c448 = arith.constant 448 : index
    %c0_41 = arith.constant 0 : index
    %73 = vector.load %arg2[%c448, %c0_41] : memref<872x128xf32, #tpu.memory_space<vmem>>, vector<7x30xf32>
    %cst_42 = arith.constant dense<0.000000e+00> : vector<7x256xf32>
    %74 = tpu.matmul %73, %72, %cst_42 {dimension_numbers = #tpu.dot_dimension_numbers<[1], [0], [0], [1], [0, 0, 1, 1], [], []>} : vector<7x30xf32>, vector<30x256xf32>, vector<7x256xf32> -> vector<7x256xf32>
    %c456 = arith.constant 456 : index
    %c0_43 = arith.constant 0 : index
    %75 = vector.load %arg2[%c456, %c0_43] : memref<872x128xf32, #tpu.memory_space<vmem>>, vector<7x1xf32>
    %76 = vector.broadcast %75 : vector<7x1xf32> to vector<7x256xf32>
    %77 = arith.addf %74, %76 : vector<7x256xf32>
    %78 = math.tanh %77 : vector<7x256xf32>
    %cst_44 = arith.constant 1.000000e-01 : f32
    %79 = vector.broadcast %cst_44 : f32 to vector<7x256xf32>
    %80 = arith.mulf %79, %78 : vector<7x256xf32>
    %c464 = arith.constant 464 : index
    %c0_45 = arith.constant 0 : index
    %81 = vector.load %arg2[%c464, %c0_45] : memref<872x128xf32, #tpu.memory_space<vmem>>, vector<8x30xf32>
    %cst_46 = arith.constant dense<0.000000e+00> : vector<8x256xf32>
    %82 = tpu.matmul %81, %72, %cst_46 {dimension_numbers = #tpu.dot_dimension_numbers<[1], [0], [0], [1], [0, 0, 1, 1], [], []>} : vector<8x30xf32>, vector<30x256xf32>, vector<8x256xf32> -> vector<8x256xf32>
    %c472 = arith.constant 472 : index
    %c0_47 = arith.constant 0 : index
    %83 = vector.load %arg2[%c472, %c0_47] : memref<872x128xf32, #tpu.memory_space<vmem>>, vector<8x1xf32>
    %84 = vector.broadcast %83 : vector<8x1xf32> to vector<8x256xf32>
    %85 = arith.addf %82, %84 : vector<8x256xf32>
    %cst_48 = arith.constant dense<0.000000e+00> : vector<8x256xf32>
    %86 = tpu.matmul %20, %80, %cst_48 {dimension_numbers = #tpu.dot_dimension_numbers<[1], [0], [0], [1], [0, 0, 1, 1], [], []>} : vector<8x7xf32>, vector<7x256xf32>, vector<8x256xf32> -> vector<8x256xf32>
    %87 = math.exp %86 : vector<8x256xf32>
    %88 = arith.mulf %26, %87 : vector<8x256xf32>
    %89 = arith.addf %88, %85 : vector<8x256xf32>
    %c832 = arith.constant 832 : index
    %c0_49 = arith.constant 0 : index
    %90 = vector.load %arg2[%c832, %c0_49] : memref<872x128xf32, #tpu.memory_space<vmem>>, vector<16x8xf32>
    %cst_50 = arith.constant dense<0.000000e+00> : vector<16x256xf32>
    %91 = tpu.matmul %90, %89, %cst_50 {dimension_numbers = #tpu.dot_dimension_numbers<[1], [0], [0], [1], [0, 0, 1, 1], [], []>} : vector<16x8xf32>, vector<8x256xf32>, vector<16x256xf32> -> vector<16x256xf32>
    %c848 = arith.constant 848 : index
    %c0_51 = arith.constant 0 : index
    %92 = vector.load %arg2[%c848, %c0_51] : memref<872x128xf32, #tpu.memory_space<vmem>>, vector<16x8xf32>
    %cst_52 = arith.constant dense<0.000000e+00> : vector<16x256xf32>
    %93 = tpu.matmul %92, %58, %cst_52 {dimension_numbers = #tpu.dot_dimension_numbers<[1], [0], [0], [1], [0, 0, 1, 1], [], []>} : vector<16x8xf32>, vector<8x256xf32>, vector<16x256xf32> -> vector<16x256xf32>
    %94 = arith.addf %91, %93 : vector<16x256xf32>
    %95 = vector.extract_strided_slice %94 {offsets = [0, 0], sizes = [8, 256], strides = [1, 1]} : vector<16x256xf32> to vector<8x256xf32>
    %96 = vector.extract_strided_slice %94 {offsets = [8, 0], sizes = [8, 256], strides = [1, 1]} : vector<16x256xf32> to vector<8x256xf32>
    %c480 = arith.constant 480 : index
    %c0_53 = arith.constant 0 : index
    %97 = vector.load %arg2[%c480, %c0_53] : memref<872x128xf32, #tpu.memory_space<vmem>>, vector<30x8xf32>
    %cst_54 = arith.constant dense<0.000000e+00> : vector<30x256xf32>
    %98 = tpu.matmul %97, %95, %cst_54 {dimension_numbers = #tpu.dot_dimension_numbers<[1], [0], [0], [1], [0, 0, 1, 1], [], []>} : vector<30x8xf32>, vector<8x256xf32>, vector<30x256xf32> -> vector<30x256xf32>
    %c512 = arith.constant 512 : index
    %c0_55 = arith.constant 0 : index
    %99 = vector.load %arg2[%c512, %c0_55] : memref<872x128xf32, #tpu.memory_space<vmem>>, vector<30x1xf32>
    %100 = vector.broadcast %99 : vector<30x1xf32> to vector<30x256xf32>
    %101 = arith.addf %98, %100 : vector<30x256xf32>
    %cst_56 = arith.constant 0.000000e+00 : f32
    %102 = vector.broadcast %cst_56 : f32 to vector<30x256xf32>
    %103 = arith.maximumf %101, %102 : vector<30x256xf32>
    %c544 = arith.constant 544 : index
    %c0_57 = arith.constant 0 : index
    %104 = vector.load %arg2[%c544, %c0_57] : memref<872x128xf32, #tpu.memory_space<vmem>>, vector<30x30xf32>
    %cst_58 = arith.constant dense<0.000000e+00> : vector<30x256xf32>
    %105 = tpu.matmul %104, %103, %cst_58 {dimension_numbers = #tpu.dot_dimension_numbers<[1], [0], [0], [1], [0, 0, 1, 1], [], []>} : vector<30x30xf32>, vector<30x256xf32>, vector<30x256xf32> -> vector<30x256xf32>
    %c576 = arith.constant 576 : index
    %c0_59 = arith.constant 0 : index
    %106 = vector.load %arg2[%c576, %c0_59] : memref<872x128xf32, #tpu.memory_space<vmem>>, vector<30x1xf32>
    %107 = vector.broadcast %106 : vector<30x1xf32> to vector<30x256xf32>
    %108 = arith.addf %105, %107 : vector<30x256xf32>
    %cst_60 = arith.constant 0.000000e+00 : f32
    %109 = vector.broadcast %cst_60 : f32 to vector<30x256xf32>
    %110 = arith.maximumf %108, %109 : vector<30x256xf32>
    %c608 = arith.constant 608 : index
    %c0_61 = arith.constant 0 : index
    %111 = vector.load %arg2[%c608, %c0_61] : memref<872x128xf32, #tpu.memory_space<vmem>>, vector<7x30xf32>
    %cst_62 = arith.constant dense<0.000000e+00> : vector<7x256xf32>
    %112 = tpu.matmul %111, %110, %cst_62 {dimension_numbers = #tpu.dot_dimension_numbers<[1], [0], [0], [1], [0, 0, 1, 1], [], []>} : vector<7x30xf32>, vector<30x256xf32>, vector<7x256xf32> -> vector<7x256xf32>
    %c616 = arith.constant 616 : index
    %c0_63 = arith.constant 0 : index
    %113 = vector.load %arg2[%c616, %c0_63] : memref<872x128xf32, #tpu.memory_space<vmem>>, vector<7x1xf32>
    %114 = vector.broadcast %113 : vector<7x1xf32> to vector<7x256xf32>
    %115 = arith.addf %112, %114 : vector<7x256xf32>
    %116 = math.tanh %115 : vector<7x256xf32>
    %cst_64 = arith.constant 1.000000e-01 : f32
    %117 = vector.broadcast %cst_64 : f32 to vector<7x256xf32>
    %118 = arith.mulf %117, %116 : vector<7x256xf32>
    %c624 = arith.constant 624 : index
    %c0_65 = arith.constant 0 : index
    %119 = vector.load %arg2[%c624, %c0_65] : memref<872x128xf32, #tpu.memory_space<vmem>>, vector<8x30xf32>
    %cst_66 = arith.constant dense<0.000000e+00> : vector<8x256xf32>
    %120 = tpu.matmul %119, %110, %cst_66 {dimension_numbers = #tpu.dot_dimension_numbers<[1], [0], [0], [1], [0, 0, 1, 1], [], []>} : vector<8x30xf32>, vector<30x256xf32>, vector<8x256xf32> -> vector<8x256xf32>
    %c632 = arith.constant 632 : index
    %c0_67 = arith.constant 0 : index
    %121 = vector.load %arg2[%c632, %c0_67] : memref<872x128xf32, #tpu.memory_space<vmem>>, vector<8x1xf32>
    %122 = vector.broadcast %121 : vector<8x1xf32> to vector<8x256xf32>
    %123 = arith.addf %120, %122 : vector<8x256xf32>
    %cst_68 = arith.constant dense<0.000000e+00> : vector<8x256xf32>
    %124 = tpu.matmul %20, %118, %cst_68 {dimension_numbers = #tpu.dot_dimension_numbers<[1], [0], [0], [1], [0, 0, 1, 1], [], []>} : vector<8x7xf32>, vector<7x256xf32>, vector<8x256xf32> -> vector<8x256xf32>
    %125 = math.exp %124 : vector<8x256xf32>
    %126 = arith.mulf %96, %125 : vector<8x256xf32>
    %127 = arith.addf %126, %123 : vector<8x256xf32>
    %c640 = arith.constant 640 : index
    %c0_69 = arith.constant 0 : index
    %128 = vector.load %arg2[%c640, %c0_69] : memref<872x128xf32, #tpu.memory_space<vmem>>, vector<30x8xf32>
    %cst_70 = arith.constant dense<0.000000e+00> : vector<30x256xf32>
    %129 = tpu.matmul %128, %127, %cst_70 {dimension_numbers = #tpu.dot_dimension_numbers<[1], [0], [0], [1], [0, 0, 1, 1], [], []>} : vector<30x8xf32>, vector<8x256xf32>, vector<30x256xf32> -> vector<30x256xf32>
    %c672 = arith.constant 672 : index
    %c0_71 = arith.constant 0 : index
    %130 = vector.load %arg2[%c672, %c0_71] : memref<872x128xf32, #tpu.memory_space<vmem>>, vector<30x1xf32>
    %131 = vector.broadcast %130 : vector<30x1xf32> to vector<30x256xf32>
    %132 = arith.addf %129, %131 : vector<30x256xf32>
    %cst_72 = arith.constant 0.000000e+00 : f32
    %133 = vector.broadcast %cst_72 : f32 to vector<30x256xf32>
    %134 = arith.maximumf %132, %133 : vector<30x256xf32>
    %c704 = arith.constant 704 : index
    %c0_73 = arith.constant 0 : index
    %135 = vector.load %arg2[%c704, %c0_73] : memref<872x128xf32, #tpu.memory_space<vmem>>, vector<30x30xf32>
    %cst_74 = arith.constant dense<0.000000e+00> : vector<30x256xf32>
    %136 = tpu.matmul %135, %134, %cst_74 {dimension_numbers = #tpu.dot_dimension_numbers<[1], [0], [0], [1], [0, 0, 1, 1], [], []>} : vector<30x30xf32>, vector<30x256xf32>, vector<30x256xf32> -> vector<30x256xf32>
    %c736 = arith.constant 736 : index
    %c0_75 = arith.constant 0 : index
    %137 = vector.load %arg2[%c736, %c0_75] : memref<872x128xf32, #tpu.memory_space<vmem>>, vector<30x1xf32>
    %138 = vector.broadcast %137 : vector<30x1xf32> to vector<30x256xf32>
    %139 = arith.addf %136, %138 : vector<30x256xf32>
    %cst_76 = arith.constant 0.000000e+00 : f32
    %140 = vector.broadcast %cst_76 : f32 to vector<30x256xf32>
    %141 = arith.maximumf %139, %140 : vector<30x256xf32>
    %c768 = arith.constant 768 : index
    %c0_77 = arith.constant 0 : index
    %142 = vector.load %arg2[%c768, %c0_77] : memref<872x128xf32, #tpu.memory_space<vmem>>, vector<7x30xf32>
    %cst_78 = arith.constant dense<0.000000e+00> : vector<7x256xf32>
    %143 = tpu.matmul %142, %141, %cst_78 {dimension_numbers = #tpu.dot_dimension_numbers<[1], [0], [0], [1], [0, 0, 1, 1], [], []>} : vector<7x30xf32>, vector<30x256xf32>, vector<7x256xf32> -> vector<7x256xf32>
    %c776 = arith.constant 776 : index
    %c0_79 = arith.constant 0 : index
    %144 = vector.load %arg2[%c776, %c0_79] : memref<872x128xf32, #tpu.memory_space<vmem>>, vector<7x1xf32>
    %145 = vector.broadcast %144 : vector<7x1xf32> to vector<7x256xf32>
    %146 = arith.addf %143, %145 : vector<7x256xf32>
    %147 = math.tanh %146 : vector<7x256xf32>
    %cst_80 = arith.constant 1.000000e-01 : f32
    %148 = vector.broadcast %cst_80 : f32 to vector<7x256xf32>
    %149 = arith.mulf %148, %147 : vector<7x256xf32>
    %c784 = arith.constant 784 : index
    %c0_81 = arith.constant 0 : index
    %150 = vector.load %arg2[%c784, %c0_81] : memref<872x128xf32, #tpu.memory_space<vmem>>, vector<8x30xf32>
    %cst_82 = arith.constant dense<0.000000e+00> : vector<8x256xf32>
    %151 = tpu.matmul %150, %141, %cst_82 {dimension_numbers = #tpu.dot_dimension_numbers<[1], [0], [0], [1], [0, 0, 1, 1], [], []>} : vector<8x30xf32>, vector<30x256xf32>, vector<8x256xf32> -> vector<8x256xf32>
    %c792 = arith.constant 792 : index
    %c0_83 = arith.constant 0 : index
    %152 = vector.load %arg2[%c792, %c0_83] : memref<872x128xf32, #tpu.memory_space<vmem>>, vector<8x1xf32>
    %153 = vector.broadcast %152 : vector<8x1xf32> to vector<8x256xf32>
    %154 = arith.addf %151, %153 : vector<8x256xf32>
    %cst_84 = arith.constant dense<0.000000e+00> : vector<8x256xf32>
    %155 = tpu.matmul %20, %149, %cst_84 {dimension_numbers = #tpu.dot_dimension_numbers<[1], [0], [0], [1], [0, 0, 1, 1], [], []>} : vector<8x7xf32>, vector<7x256xf32>, vector<8x256xf32> -> vector<8x256xf32>
    %156 = math.exp %155 : vector<8x256xf32>
    %157 = arith.mulf %95, %156 : vector<8x256xf32>
    %158 = arith.addf %157, %154 : vector<8x256xf32>
    %159 = arith.negf %158 : vector<8x256xf32>
    %160 = math.exp %159 : vector<8x256xf32>
    %cst_85 = arith.constant 1.000000e+00 : f32
    %161 = vector.broadcast %cst_85 : f32 to vector<8x256xf32>
    %162 = arith.addf %161, %160 : vector<8x256xf32>
    %163 = arith.divf %161, %162 : vector<8x256xf32>
    %cst_86 = arith.constant 5.000000e-01 : f32
    %164 = vector.broadcast %cst_86 : f32 to vector<8x256xf32>
    %165 = arith.subf %163, %164 : vector<8x256xf32>
    %cst_87 = arith.constant 1.000000e+00 : f32
    %166 = vector.broadcast %cst_87 : f32 to vector<8x256xf32>
    %167 = arith.mulf %166, %165 : vector<8x256xf32>
    %c0_88 = arith.constant 0 : index
    %c0_89 = arith.constant 0 : index
    %168 = vector.load %arg3[%c0_88, %c0_89] : memref<16x256xf32, #tpu.memory_space<vmem>>, vector<8x256xf32>
    tpu.vector_store %arg3[%c0_88, %c0_89], %167 {strides = array<i32>} : memref<16x256xf32, #tpu.memory_space<vmem>>, vector<8x256xf32>,
    %169 = arith.negf %127 : vector<8x256xf32>
    %170 = math.exp %169 : vector<8x256xf32>
    %cst_90 = arith.constant 1.000000e+00 : f32
    %171 = vector.broadcast %cst_90 : f32 to vector<8x256xf32>
    %172 = arith.addf %171, %170 : vector<8x256xf32>
    %173 = arith.divf %171, %172 : vector<8x256xf32>
    %cst_91 = arith.constant 5.000000e-01 : f32
    %174 = vector.broadcast %cst_91 : f32 to vector<8x256xf32>
    %175 = arith.subf %173, %174 : vector<8x256xf32>
    %cst_92 = arith.constant 1.000000e+00 : f32
    %176 = vector.broadcast %cst_92 : f32 to vector<8x256xf32>
    %177 = arith.mulf %176, %175 : vector<8x256xf32>
    %c8 = arith.constant 8 : index
    %c0_93 = arith.constant 0 : index
    %178 = vector.load %arg3[%c8, %c0_93] : memref<16x256xf32, #tpu.memory_space<vmem>>, vector<8x256xf32>
    tpu.vector_store %arg3[%c8, %c0_93], %177 {strides = array<i32>} : memref<16x256xf32, #tpu.memory_space<vmem>>, vector<8x256xf32>,
    return
  }
  func.func @transform_0(%arg0: i32) -> (i32, i32) {
    %c0_i32 = arith.constant 0 : i32
    %c0_i32_0 = arith.constant 0 : i32
    return %c0_i32, %arg0 : i32, i32
  }
  func.func @transform_1(%arg0: i32) -> (i32, i32) {
    %c0_i32 = arith.constant 0 : i32
    %c0_i32_0 = arith.constant 0 : i32
    %c0_i32_1 = arith.constant 0 : i32
    return %c0_i32, %c0_i32_0 : i32, i32
  }
  func.func @transform_2(%arg0: i32) -> (i32, i32) {
    %c0_i32 = arith.constant 0 : i32
    %c0_i32_0 = arith.constant 0 : i32
    return %c0_i32, %arg0 : i32, i32
  }
}

</mosaic_0001>

<llo_original>
// kernel: forward.1
$region0: #{forward.1}
  #allocation0 [shape = 'u32[]', space=smem, size = 0x4, offset = 0x4, fixed_abs, tag = 'smem constant byte address 0x4 - core index']
  #allocation1 [shape = 'u32[144,128]{1,0:T(1,128)}', space=vmem, size = 0x12000, scoped, tag = 'internal scratch']
  %s0 = inlined_call_operand.vmem [shape: f32[2,512], index: 0, kind: input, shape index: {}]
  %s1 = inlined_call_operand.hbm [shape: f32[872,128], index: 1, kind: input, shape index: {}]
  %s2 = inlined_call_operand.vmem [shape: f32[16,512], index: 2, kind: output, shape index: {}]
  %s3 = sld [smem:[#allocation0]]
  $region64: #{forward.1} parent=0
    _
  %s5 = ssub.s32 1, %s3
  %s6 = scalar_select 0, %s5, %s3
  $region1: #{forward.1} parent=0
    #allocation2 [shape = 'u8[446464]{0}', space=vmem, size = 0x6d000, scoped, tag = 'input window, operand 1, single buffered']
    #allocation3 [shape = 's32[2]{0}', space=sflag, size = 0x8, scoped, tag = 'scoped memory for forward.1']
    #allocation4 [shape = 'u8[32768]{0}', space=vmem, size = 0x8000, scoped, tag = 'output window, operand 0']
    %7 = vsyncpa [#allocation3], 0
    loop: start=0, step=1, limit=4
    $region2: #{forward.1} parent=1 // loop_pre_header
      _
    $region3: #{forward.1} parent=1 // loop_header
      %s9 = sphi 0, %s13
      %p10 = scmp.ge.s32.totalorder %s9, 4
      %s19 = sphi 0, %s21
      %s22 = sphi 0, %s19
      %s23 = sphi 0, %s22
      %s39 = sphi 0, %s23
      %s43 = sphi 0, %s43
      %s45 = sphi 0, %s43
      %s46 = sphi 0, %s45
      %s60 = sphi 0, %s46
      %s66 = sphi 0, %s68
      %s69 = sphi 0, %s66
      %s70 = sphi 0, %s69
      %s86 = sphi 0, %s70
    $region4: #{forward.1} parent=1 // loop_header_branch
      %12 = sbr.rel (%p10) target = $region8
    $region5: #{forward.1} parent=1 // loop_body
      %s14 = ssub.s32 %s9, 1
      %s15 = ssub.s32 %s9, 2
      %s16 = sadd.s32 %s9, 1
      %s17 = ssub.s32 %s9, %s16
      %p18 = scmp.eq.s32.totalorder %s17, 0
      %s20 = sadd.s32 %s19, 1
      %s21 = scalar_select %p18, %s19, %s20
      %p24 = pneg %p18
      %p25 = scmp.eq.s32.totalorder %s9, 1
      %p26 = por %p24, %p25
      %p27 = scmp.ne.s32.totalorder %s19, %s22
      %p28 = scmp.eq.s32.totalorder %s9, 0
      %p29 = por %p27, %p28
      %p30 = scmp.ne.s32.totalorder %s19, %s22
      %p31 = scmp.eq.s32.totalorder %s14, 1
      %p32 = por %p30, %p31
      %p33 = scmp.ne.s32.totalorder %s22, %s23
      %p34 = scmp.eq.s32.totalorder %s14, 0
      %p35 = por %p33, %p34
      %p36 = scmp.ne.s32.totalorder %s22, %s23
      %p37 = scmp.eq.s32.totalorder %s15, 1
      %p38 = por %p36, %p37
      %p40 = scmp.ne.s32.totalorder %s23, %s39
      %p41 = scmp.eq.s32.totalorder %s15, 0
      %p42 = por %p40, %p41
      %s44 = sadd.s32 %s43, 1
      %p47 = scmp.eq.s32.totalorder %s9, 1
      %p48 = scmp.ne.s32.totalorder %s43, %s45
      %p49 = scmp.eq.s32.totalorder %s9, 0
      %p50 = por %p48, %p49
      %p51 = scmp.ne.s32.totalorder %s43, %s45
      %p52 = scmp.eq.s32.totalorder %s14, 1
      %p53 = por %p51, %p52
      %p54 = scmp.ne.s32.totalorder %s45, %s46
      %p55 = scmp.eq.s32.totalorder %s14, 0
      %p56 = por %p54, %p55
      %p57 = scmp.ne.s32.totalorder %s45, %s46
      %p58 = scmp.eq.s32.totalorder %s15, 1
      %p59 = por %p57, %p58
      %p61 = scmp.ne.s32.totalorder %s46, %s60
      %p62 = scmp.eq.s32.totalorder %s15, 0
      %p63 = por %p61, %p62
      %s64 = ssub.s32 %s9, %s16
      %p65 = scmp.eq.s32.totalorder %s64, 0
      %s67 = sadd.s32 %s66, 1
      %s68 = scalar_select %p65, %s66, %s67
      %p71 = pneg %p65
      %p72 = scmp.eq.s32.totalorder %s9, 1
      %p73 = por %p71, %p72
      %p74 = scmp.ne.s32.totalorder %s66, %s69
      %p75 = scmp.eq.s32.totalorder %s9, 0
      %p76 = por %p74, %p75
      %p77 = scmp.ne.s32.totalorder %s66, %s69
      %p78 = scmp.eq.s32.totalorder %s14, 1
      %p79 = por %p77, %p78
      %p80 = scmp.ne.s32.totalorder %s69, %s70
      %p81 = scmp.eq.s32.totalorder %s14, 0
      %p82 = por %p80, %p81
      %p83 = scmp.ne.s32.totalorder %s69, %s70
      %p84 = scmp.eq.s32.totalorder %s15, 1
      %p85 = por %p83, %p84
      %p87 = scmp.ne.s32.totalorder %s70, %s86
      %p88 = scmp.eq.s32.totalorder %s15, 0
      %p89 = por %p87, %p88
      %p90 = scmp.le.s32.totalorder 1, %s9
      %p91 = scmp.lt.s32.totalorder %s9, 3
      %p92 = pnand %p90, %p91
      %p93 = pneg %p92
      // Predicated region
      $region9: #{forward.1} parent=5 // pred_check
        _
      $region10: #{forward.1} parent=5 // pred_check_branch
        %95 = sbr.rel (%p92) target = $region12
      $region11: #{forward.1} parent=5 // pred_region
        %s96 = ssub.s32 %s9, 1
        // Predicated region
        $region13: #{forward.1} parent=11 // pred_check
          %p97 = pneg %p56
        $region14: #{forward.1} parent=11 // pred_check_branch
          %99 = sbr.rel (%p97) target = $region16
        $region15: #{forward.1} parent=11 // pred_region
          %s101 = ssub.s32 13952, 13952
          %102 = vsyncadd [#allocation3], %s101
          %s103 = sshll.u32 [#allocation2], 4
          %s104 = int_to_ptr.vmem [resolvable:$true] %s103
          %109 = dma.hbm_to_vmem [thread:$0]  %s1, 13952, %s104, [#allocation3], 128, 128, 8
        $region16: #{forward.1} parent=11 // pred_fallthru
          _
      $region12: #{forward.1} parent=5 // pred_fallthru
        _
      %p110 = scmp.lt.s32.totalorder %s9, 2
      // Predicated region
      $region17: #{forward.1} parent=5 // pred_check
        %p111 = pneg %p110
      $region18: #{forward.1} parent=5 // pred_check_branch
        %113 = sbr.rel (%p111) target = $region20
      $region19: #{forward.1} parent=5 // pred_region
        // Predicated region
        $region21: #{forward.1} parent=19 // pred_check
          %p114 = pneg %p29
        $region22: #{forward.1} parent=19 // pred_check_branch
          %116 = sbr.rel (%p114) target = $region24
        $region23: #{forward.1} parent=19 // pred_region
          %s117 = smul.u32 2, %s9
          %p118 = scmp.lt.s32.totalorder %s117, 3
          %s119 = scalar_select %p118, %s117, 3
          %s120 = smul.addr %s119, 2
          %s121 = scalar_lea.vmem %s0, %s120
          %s122 = smul.u32 2, %s9
        $region24: #{forward.1} parent=19 // pred_fallthru
          _
      $region20: #{forward.1} parent=5 // pred_fallthru
        _
      %p123 = scmp.le.s32.totalorder 1, %s9
      %p124 = scmp.lt.s32.totalorder %s9, 3
      %p125 = pnand %p123, %p124
      %p126 = pneg %p125
      // Predicated region
      $region25: #{forward.1} parent=5 // pred_check
        _
      $region26: #{forward.1} parent=5 // pred_check_branch
        %128 = sbr.rel (%p125) target = $region28
      $region27: #{forward.1} parent=5 // pred_region
        %s129 = ssub.s32 %s9, 1
        // Predicated region
        $region29: #{forward.1} parent=27 // pred_check
          %p130 = pneg %p56
        $region30: #{forward.1} parent=27 // pred_check_branch
          %132 = sbr.rel (%p130) target = $region32
        $region31: #{forward.1} parent=27 // pred_region
          %133 = dma.done [#allocation3], 13952
        $region32: #{forward.1} parent=27 // pred_fallthru
          _
        %s134 = smul.u32 2, %s14
        %p135 = scmp.lt.s32.totalorder %s134, 3
        %s136 = scalar_select %p135, %s134, 3
        %s137 = smul.addr %s136, 2
        %s138 = scalar_lea.vmem %s0, %s137
        %p139 = pneg %p35
        %p140 = pneg %p32
        %p141 = pneg %p56
        %p142 = pneg %p53
        %p143 = pneg %p82
        %p144 = pneg %p79
        %s145 = sand.u32 %s69, 1
        %s146 = sand.u32 %s69, 1
        %s147 = smul.addr %s146, 32
        %s148 = scalar_lea.vmem [#allocation4], %s147
        %s149 = smul.u32 2, %s14
        %p150 = scmp.lt.s32.totalorder %s149, 3
        %s151 = scalar_select %p150, %s149, 3
        %s152 = smul.addr %s151, 2
        %s153 = scalar_lea.vmem %s0, %s152
        %s154 = smul.u32 2, %s14
        %s155 = smul.u32 2, %s14
        %v156 = vld [vmem:[%s153] sm:$0xf]
        %v157 = vld [vmem:[#allocation2] sm:$0xff]
        %v158 = vld [vmem:[#allocation2 + $0x8] sm:$0xff]
        %v159 = vld [vmem:[#allocation2 + $0x10] sm:$0xff]
        %v160 = vld [vmem:[#allocation2 + $0x18] sm:$0x3f]
        %v161 = vld [vmem:[#allocation2 + $0x20] sm:$0xff]
        %v162 = vld [vmem:[#allocation2 + $0x28] sm:$0xff]
        %v163 = vld [vmem:[#allocation2 + $0x30] sm:$0xff]
        %v164 = vld [vmem:[#allocation2 + $0x38] sm:$0x3f]
        %166 = vset.pattern.permute.xlu0 0
        %167 = vperm.xlu0 %166, %v161
        %v168 = vpop.permute.xlu0 %167
        %171 = vset.pattern.permute.xlu0 0
        %172 = vperm.xlu0 %171, %v162
        %v173 = vpop.permute.xlu0 %172
        %176 = vset.pattern.permute.xlu0 0
        %177 = vperm.xlu0 %176, %v163
        %v178 = vpop.permute.xlu0 %177
        %181 = vset.pattern.permute.xlu0 0
        %182 = vperm.xlu0 %181, %v164
        %v183 = vpop.permute.xlu0 %182
        %v187 = vunpack.c.l.s4 1983009808
        %v188 = vunpack.c.0.s8 %v187
        %v189 = vlaneseq
        %v190 = vshrl.u32 %v189, 7
        %v191 = vsub.s32 %v188, %v190
        %v192 = vrot.slane %v156, %v191
        %v193 = vcombine.high %v192, %v192
        %vm194 = vcmask 15360
        %v196 = vsel %vm194, %v157, 0
        %v199 = vsel %vm194, %v158, 0
        %v202 = vsel %vm194, %v159, 0
        %v205 = vsel %vm194, %v160, 0
        %vm207 = vcmask 1041408
        %v208 = vsel %vm207, %v192, 0
        %v210 = vsel %vm207, %v193, 0
        %212 = vmatprep.subr.mxu0 0.0
        %213 = vmatpush1.msra.mxu0 0.0
        %214 = vmatprep.subr.mxu0 0.0
        %215 = vmatpush1.msra.mxu0 0.0
        %216 = vmatprep.subr.mxu0 0.0
        %217 = vmatpush1.msra.mxu0 0.0
        %218 = vmatprep.subr.mxu0 0.0
        %219 = vmatpush1.msra.mxu0 0.0
        %220 = vmatprep.subr.mxu0 0.0
        %221 = vmatpush1.msra.mxu0 0.0
        %222 = vmatprep.subr.mxu0 0.0
        %223 = vmatpush1.msra.mxu0 0.0
        %224 = vmatprep.subr.mxu0 0.0
        %225 = vmatpush1.msra.mxu0 0.0
        %226 = vmatprep.subr.mxu0 0.0
        %227 = vmatpush1.msra.mxu0 0.0
        %228 = vmatprep.subr.mxu0 0.0
        %229 = vmatpush1.msra.mxu0 0.0
        %230 = vmatprep.subr.mxu0 0.0
        %231 = vmatpush1.msra.mxu0 0.0
        %232 = vmatprep.subr.mxu0 0.0
        %233 = vmatpush1.msra.mxu0 0.0
        %234 = vmatprep.subr.mxu0 0.0
        %235 = vmatpush1.msra.mxu0 0.0
        %236 = vmatprep.subr.mxu0 0.0
        %237 = vmatpush1.msra.mxu0 0.0
        %238 = vmatprep.subr.mxu0 0.0
        %239 = vmatpush1.msra.mxu0 0.0
        %240 = vmatprep.subr.mxu0 0.0
        %241 = vmatpush1.msra.mxu0 0.0
        %242 = vmatprep.subr.mxu0 %v210
        %243 = vmatpush1.msra.mxu0 %v208
        %244 = vmatprep.subr.mxu0 0.0
        %245 = vmatpush2.msra.mxu0 0.0
        %246 = vmatprep.subr.mxu0 0.0
        %247 = vmatpush2.msra.mxu0 0.0
        %248 = vmatprep.subr.mxu0 0.0
        %249 = vmatpush2.msra.mxu0 0.0
        %250 = vmatprep.subr.mxu0 0.0
        %251 = vmatpush2.msra.mxu0 0.0
        %252 = vmatprep.subr.mxu0 0.0
        %253 = vmatpush2.msra.mxu0 0.0
        %254 = vmatprep.subr.mxu0 0.0
        %255 = vmatpush2.msra.mxu0 0.0
        %256 = vmatprep.subr.mxu0 0.0
        %257 = vmatpush2.msra.mxu0 0.0
        %258 = vmatprep.subr.mxu0 0.0
        %259 = vmatpush2.msra.mxu0 0.0
        %260 = vmatprep.subr.mxu0 0.0
        %261 = vmatpush2.msra.mxu0 0.0
        %262 = vmatprep.subr.mxu0 0.0
        %263 = vmatpush2.msra.mxu0 0.0
        %264 = vmatprep.subr.mxu0 0.0
        %265 = vmatpush2.msra.mxu0 0.0
        %266 = vmatprep.subr.mxu0 0.0
        %267 = vmatpush2.msra.mxu0 0.0
        %268 = vmatprep.subr.mxu0 0.0
        %269 = vmatpush2.msra.mxu0 0.0
        %270 = vmatprep.subr.mxu0 0.0
        %271 = vmatpush2.msra.mxu0 0.0
        %272 = vmatprep.subr.mxu0 0.0
        %273 = vmatpush2.msra.mxu0 0.0
        %274 = vmatprep.subr.mxu0 0.0
        %275 = vmatpush2.msra.mxu0 0.0
        %276 = vmatprep.mubr.f32.mxu0 0.0
        %277 = vmatmul.mubr.f32.gmra.mxu0 %v196
        %v278 = vpop.f32.mrf.mxu0
        %v279 = vadd.f32 %v168, %v278
        %v280 = vpop.f32.mrf.mxu0
        %v281 = vadd.f32 %v168, %v280
        %282 = vmatprep.mubr.f32.mxu0 0.0
        %283 = vmatmul.mubr.f32.gmra.mxu0 %v199
        %v284 = vpop.f32.mrf.mxu0
        %v285 = vadd.f32 %v173, %v284
        %v286 = vpop.f32.mrf.mxu0
        %v287 = vadd.f32 %v173, %v286
        %288 = vmatprep.mubr.f32.mxu0 0.0
        %289 = vmatmul.mubr.f32.gmra.mxu0 %v202
        %v290 = vpop.f32.mrf.mxu0
        %v291 = vadd.f32 %v178, %v290
        %v292 = vpop.f32.mrf.mxu0
        %v293 = vadd.f32 %v178, %v292
        %294 = vmatprep.mubr.f32.mxu0 0.0
        %295 = vmatmul.mubr.f32.gmra.mxu0 %v205
        %v296 = vpop.f32.mrf.mxu0
        %v297 = vadd.f32 %v183, %v296
        %v298 = vpop.f32.mrf.mxu0
        %v299 = vadd.f32 %v183, %v298
        %300 = vdwg.mxu0
        %v301 = vmax.f32 %v279, 0.0
        %v302 = vmax.f32 %v281, 0.0
        %v303 = vmax.f32 %v285, 0.0
        %v304 = vmax.f32 %v287, 0.0
        %v305 = vmax.f32 %v291, 0.0
        %v306 = vmax.f32 %v293, 0.0
        %v307 = vmax.f32 %v297, 0.0
        %v308 = vmax.f32 %v299, 0.0
        %v309 = vld [vmem:[#allocation2 + $0x40] sm:$0xff]
        %v310 = vld [vmem:[#allocation2 + $0x48] sm:$0xff]
        %v311 = vld [vmem:[#allocation2 + $0x50] sm:$0xff]
        %v312 = vld [vmem:[#allocation2 + $0x58] sm:$0x3f]
        %v313 = vld [vmem:[#allocation2 + $0x60] sm:$0xff]
        %v314 = vld [vmem:[#allocation2 + $0x68] sm:$0xff]
        %v315 = vld [vmem:[#allocation2 + $0x70] sm:$0xff]
        %v316 = vld [vmem:[#allocation2 + $0x78] sm:$0x3f]
        %318 = vset.pattern.permute.xlu0 0
        %319 = vperm.xlu0 %318, %v313
        %v320 = vpop.permute.xlu0 %319
        %323 = vset.pattern.permute.xlu0 0
        %324 = vperm.xlu0 %323, %v314
        %v325 = vpop.permute.xlu0 %324
        %328 = vset.pattern.permute.xlu0 0
        %329 = vperm.xlu0 %328, %v315
        %v330 = vpop.permute.xlu0 %329
        %333 = vset.pattern.permute.xlu0 0
        %334 = vperm.xlu0 %333, %v316
        %v335 = vpop.permute.xlu0 %334
        %vm337 = vcmask 244736
        %v339 = vsel %vm337, %v309, 0
        %v342 = vsel %vm337, %v310, 0
        %v345 = vsel %vm337, %v311, 0
        %v348 = vsel %vm337, %v312, 0
        %vm350 = vcmask 1045504
        %v352 = vsel %vm350, %v307, 0
        %v355 = vsel %vm350, %v308, 0
        %357 = vmatprep.subr.mxu0 0.0
        %358 = vmatpush1.msra.mxu0 0.0
        %359 = vmatprep.subr.mxu0 0.0
        %360 = vmatpush1.msra.mxu0 0.0
        %361 = vmatprep.subr.mxu0 0.0
        %362 = vmatpush1.msra.mxu0 0.0
        %363 = vmatprep.subr.mxu0 0.0
        %364 = vmatpush1.msra.mxu0 0.0
        %365 = vmatprep.subr.mxu0 0.0
        %366 = vmatpush1.msra.mxu0 0.0
        %367 = vmatprep.subr.mxu0 0.0
        %368 = vmatpush1.msra.mxu0 0.0
        %369 = vmatprep.subr.mxu0 0.0
        %370 = vmatpush1.msra.mxu0 0.0
        %371 = vmatprep.subr.mxu0 0.0
        %372 = vmatpush1.msra.mxu0 0.0
        %373 = vmatprep.subr.mxu0 0.0
        %374 = vmatpush1.msra.mxu0 0.0
        %375 = vmatprep.subr.mxu0 0.0
        %376 = vmatpush1.msra.mxu0 0.0
        %377 = vmatprep.subr.mxu0 0.0
        %378 = vmatpush1.msra.mxu0 0.0
        %379 = vmatprep.subr.mxu0 0.0
        %380 = vmatpush1.msra.mxu0 0.0
        %381 = vmatprep.subr.mxu0 %v355
        %382 = vmatpush1.msra.mxu0 %v352
        %383 = vmatprep.subr.mxu0 %v306
        %384 = vmatpush1.msra.mxu0 %v305
        %385 = vmatprep.subr.mxu0 %v304
        %386 = vmatpush1.msra.mxu0 %v303
        %387 = vmatprep.subr.mxu0 %v302
        %388 = vmatpush1.msra.mxu0 %v301
        %389 = vmatprep.subr.mxu0 0.0
        %390 = vmatpush2.msra.mxu0 0.0
        %391 = vmatprep.subr.mxu0 0.0
        %392 = vmatpush2.msra.mxu0 0.0
        %393 = vmatprep.subr.mxu0 0.0
        %394 = vmatpush2.msra.mxu0 0.0
        %395 = vmatprep.subr.mxu0 0.0
        %396 = vmatpush2.msra.mxu0 0.0
        %397 = vmatprep.subr.mxu0 0.0
        %398 = vmatpush2.msra.mxu0 0.0
        %399 = vmatprep.subr.mxu0 0.0
        %400 = vmatpush2.msra.mxu0 0.0
        %401 = vmatprep.subr.mxu0 0.0
        %402 = vmatpush2.msra.mxu0 0.0
        %403 = vmatprep.subr.mxu0 0.0
        %404 = vmatpush2.msra.mxu0 0.0
        %405 = vmatprep.subr.mxu0 0.0
        %406 = vmatpush2.msra.mxu0 0.0
        %407 = vmatprep.subr.mxu0 0.0
        %408 = vmatpush2.msra.mxu0 0.0
        %409 = vmatprep.subr.mxu0 0.0
        %410 = vmatpush2.msra.mxu0 0.0
        %411 = vmatprep.subr.mxu0 0.0
        %412 = vmatpush2.msra.mxu0 0.0
        %413 = vmatprep.subr.mxu0 0.0
        %414 = vmatpush2.msra.mxu0 0.0
        %415 = vmatprep.subr.mxu0 0.0
        %416 = vmatpush2.msra.mxu0 0.0
        %417 = vmatprep.subr.mxu0 0.0
        %418 = vmatpush2.msra.mxu0 0.0
        %419 = vmatprep.subr.mxu0 0.0
        %420 = vmatpush2.msra.mxu0 0.0
        %421 = vmatprep.mubr.f32.mxu0 0.0
        %422 = vmatmul.mubr.f32.gmra.mxu0 %v339
        %v423 = vpop.f32.mrf.mxu0
        %v424 = vadd.f32 %v320, %v423
        %v425 = vpop.f32.mrf.mxu0
        %v426 = vadd.f32 %v320, %v425
        %427 = vmatprep.mubr.f32.mxu0 0.0
        %428 = vmatmul.mubr.f32.gmra.mxu0 %v342
        %v429 = vpop.f32.mrf.mxu0
        %v430 = vadd.f32 %v325, %v429
        %v431 = vpop.f32.mrf.mxu0
        %v432 = vadd.f32 %v325, %v431
        %433 = vmatprep.mubr.f32.mxu0 0.0
        %434 = vmatmul.mubr.f32.gmra.mxu0 %v345
        %v435 = vpop.f32.mrf.mxu0
        %v436 = vadd.f32 %v330, %v435
        %v437 = vpop.f32.mrf.mxu0
        %v438 = vadd.f32 %v330, %v437
        %439 = vmatprep.mubr.f32.mxu0 0.0
        %440 = vmatmul.mubr.f32.gmra.mxu0 %v348
        %v441 = vpop.f32.mrf.mxu0
        %v442 = vadd.f32 %v335, %v441
        %v443 = vpop.f32.mrf.mxu0
        %v444 = vadd.f32 %v335, %v443
        %445 = vdwg.mxu0
        %v446 = vmax.f32 %v424, 0.0
        %v447 = vmax.f32 %v426, 0.0
        %v448 = vmax.f32 %v430, 0.0
        %v449 = vmax.f32 %v432, 0.0
        %v450 = vmax.f32 %v436, 0.0
        %v451 = vmax.f32 %v438, 0.0
        %v452 = vmax.f32 %v442, 0.0
        %v453 = vmax.f32 %v444, 0.0
        %v454 = vld [vmem:[#allocation2 + $0x80] sm:$0xff]
        %v455 = vld [vmem:[#allocation2 + $0x88] sm:$0x3f]
        %v456 = vld [vmem:[#allocation2 + $0x90] sm:$0xff]
        %v457 = vld [vmem:[#allocation2 + $0x98] sm:$0x3f]
        %459 = vset.pattern.permute.xlu0 0
        %460 = vperm.xlu0 %459, %v456
        %v461 = vpop.permute.xlu0 %460
        %464 = vset.pattern.permute.xlu0 0
        %465 = vperm.xlu0 %464, %v457
        %v466 = vpop.permute.xlu0 %465
        %v469 = vsel %vm337, %v454, 0
        %v472 = vsel %vm337, %v455, 0
        %v475 = vsel %vm350, %v452, 0
        %v478 = vsel %vm350, %v453, 0
        %480 = vmatprep.subr.mxu0 0.0
        %481 = vmatpush1.msra.mxu0 0.0
        %482 = vmatprep.subr.mxu0 0.0
        %483 = vmatpush1.msra.mxu0 0.0
        %484 = vmatprep.subr.mxu0 0.0
        %485 = vmatpush1.msra.mxu0 0.0
        %486 = vmatprep.subr.mxu0 0.0
        %487 = vmatpush1.msra.mxu0 0.0
        %488 = vmatprep.subr.mxu0 0.0
        %489 = vmatpush1.msra.mxu0 0.0
        %490 = vmatprep.subr.mxu0 0.0
        %491 = vmatpush1.msra.mxu0 0.0
        %492 = vmatprep.subr.mxu0 0.0
        %493 = vmatpush1.msra.mxu0 0.0
        %494 = vmatprep.subr.mxu0 0.0
        %495 = vmatpush1.msra.mxu0 0.0
        %496 = vmatprep.subr.mxu0 0.0
        %497 = vmatpush1.msra.mxu0 0.0
        %498 = vmatprep.subr.mxu0 0.0
        %499 = vmatpush1.msra.mxu0 0.0
        %500 = vmatprep.subr.mxu0 0.0
        %501 = vmatpush1.msra.mxu0 0.0
        %502 = vmatprep.subr.mxu0 0.0
        %503 = vmatpush1.msra.mxu0 0.0
        %504 = vmatprep.subr.mxu0 %v478
        %505 = vmatpush1.msra.mxu0 %v475
        %506 = vmatprep.subr.mxu0 %v451
        %507 = vmatpush1.msra.mxu0 %v450
        %508 = vmatprep.subr.mxu0 %v449
        %509 = vmatpush1.msra.mxu0 %v448
        %510 = vmatprep.subr.mxu0 %v447
        %511 = vmatpush1.msra.mxu0 %v446
        %512 = vmatprep.subr.mxu0 0.0
        %513 = vmatpush2.msra.mxu0 0.0
        %514 = vmatprep.subr.mxu0 0.0
        %515 = vmatpush2.msra.mxu0 0.0
        %516 = vmatprep.subr.mxu0 0.0
        %517 = vmatpush2.msra.mxu0 0.0
        %518 = vmatprep.subr.mxu0 0.0
        %519 = vmatpush2.msra.mxu0 0.0
        %520 = vmatprep.subr.mxu0 0.0
        %521 = vmatpush2.msra.mxu0 0.0
        %522 = vmatprep.subr.mxu0 0.0
        %523 = vmatpush2.msra.mxu0 0.0
        %524 = vmatprep.subr.mxu0 0.0
        %525 = vmatpush2.msra.mxu0 0.0
        %526 = vmatprep.subr.mxu0 0.0
        %527 = vmatpush2.msra.mxu0 0.0
        %528 = vmatprep.subr.mxu0 0.0
        %529 = vmatpush2.msra.mxu0 0.0
        %530 = vmatprep.subr.mxu0 0.0
        %531 = vmatpush2.msra.mxu0 0.0
        %532 = vmatprep.subr.mxu0 0.0
        %533 = vmatpush2.msra.mxu0 0.0
        %534 = vmatprep.subr.mxu0 0.0
        %535 = vmatpush2.msra.mxu0 0.0
        %536 = vmatprep.subr.mxu0 0.0
        %537 = vmatpush2.msra.mxu0 0.0
        %538 = vmatprep.subr.mxu0 0.0
        %539 = vmatpush2.msra.mxu0 0.0
        %540 = vmatprep.subr.mxu0 0.0
        %541 = vmatpush2.msra.mxu0 0.0
        %542 = vmatprep.subr.mxu0 0.0
        %543 = vmatpush2.msra.mxu0 0.0
        %544 = vmatprep.mubr.f32.mxu0 0.0
        %545 = vmatmul.mubr.f32.gmra.mxu0 %v469
        %v546 = vpop.f32.mrf.mxu0
        %v547 = vadd.f32 %v461, %v546
        %v548 = vpop.f32.mrf.mxu0
        %v549 = vadd.f32 %v461, %v548
        %550 = vmatprep.mubr.f32.mxu0 0.0
        %551 = vmatmul.mubr.f32.gmra.mxu0 %v472
        %v552 = vpop.f32.mrf.mxu0
        %v553 = vadd.f32 %v466, %v552
        %v554 = vpop.f32.mrf.mxu0
        %v555 = vadd.f32 %v466, %v554
        %556 = vdwg.mxu0
        %v557 = vld [vmem:[#allocation2 + $0x360] sm:$0xff]
        %v558 = vld [vmem:[#allocation2 + $0x320] sm:$0xff]
        %v559 = vld [vmem:[#allocation2 + $0x328] sm:$0xff]
        %v560 = vld [vmem:[#allocation2 + $0x330] sm:$0xff]
        %v561 = vld [vmem:[#allocation2 + $0x338] sm:$0xff]
        %vm562 = vcmask 113664
        %v564 = vsel %vm562, %v560, 0
        %v567 = vsel %vm562, %v561, 0
        %v570 = vsel %vm350, %v553, 0
        %v573 = vsel %vm350, %v555, 0
        %575 = vmatprep.subr.mxu0 0.0
        %576 = vmatpush1.msra.mxu0 0.0
        %577 = vmatprep.subr.mxu0 0.0
        %578 = vmatpush1.msra.mxu0 0.0
        %579 = vmatprep.subr.mxu0 0.0
        %580 = vmatpush1.msra.mxu0 0.0
        %581 = vmatprep.subr.mxu0 0.0
        %582 = vmatpush1.msra.mxu0 0.0
        %583 = vmatprep.subr.mxu0 0.0
        %584 = vmatpush1.msra.mxu0 0.0
        %585 = vmatprep.subr.mxu0 0.0
        %586 = vmatpush1.msra.mxu0 0.0
        %587 = vmatprep.subr.mxu0 0.0
        %588 = vmatpush1.msra.mxu0 0.0
        %589 = vmatprep.subr.mxu0 0.0
        %590 = vmatpush1.msra.mxu0 0.0
        %591 = vmatprep.subr.mxu0 0.0
        %592 = vmatpush1.msra.mxu0 0.0
        %593 = vmatprep.subr.mxu0 0.0
        %594 = vmatpush1.msra.mxu0 0.0
        %595 = vmatprep.subr.mxu0 0.0
        %596 = vmatpush1.msra.mxu0 0.0
        %597 = vmatprep.subr.mxu0 0.0
        %598 = vmatpush1.msra.mxu0 0.0
        %599 = vmatprep.subr.mxu0 0.0
        %600 = vmatpush1.msra.mxu0 0.0
        %601 = vmatprep.subr.mxu0 0.0
        %602 = vmatpush1.msra.mxu0 0.0
        %603 = vmatprep.subr.mxu0 %v573
        %604 = vmatpush1.msra.mxu0 %v570
        %605 = vmatprep.subr.mxu0 %v549
        %606 = vmatpush1.msra.mxu0 %v547
        %607 = vmatprep.subr.mxu0 0.0
        %608 = vmatpush2.msra.mxu0 0.0
        %609 = vmatprep.subr.mxu0 0.0
        %610 = vmatpush2.msra.mxu0 0.0
        %611 = vmatprep.subr.mxu0 0.0
        %612 = vmatpush2.msra.mxu0 0.0
        %613 = vmatprep.subr.mxu0 0.0
        %614 = vmatpush2.msra.mxu0 0.0
        %615 = vmatprep.subr.mxu0 0.0
        %616 = vmatpush2.msra.mxu0 0.0
        %617 = vmatprep.subr.mxu0 0.0
        %618 = vmatpush2.msra.mxu0 0.0
        %619 = vmatprep.subr.mxu0 0.0
        %620 = vmatpush2.msra.mxu0 0.0
        %621 = vmatprep.subr.mxu0 0.0
        %622 = vmatpush2.msra.mxu0 0.0
        %623 = vmatprep.subr.mxu0 0.0
        %624 = vmatpush2.msra.mxu0 0.0
        %625 = vmatprep.subr.mxu0 0.0
        %626 = vmatpush2.msra.mxu0 0.0
        %627 = vmatprep.subr.mxu0 0.0
        %628 = vmatpush2.msra.mxu0 0.0
        %629 = vmatprep.subr.mxu0 0.0
        %630 = vmatpush2.msra.mxu0 0.0
        %631 = vmatprep.subr.mxu0 0.0
        %632 = vmatpush2.msra.mxu0 0.0
        %633 = vmatprep.subr.mxu0 0.0
        %634 = vmatpush2.msra.mxu0 0.0
        %635 = vmatprep.subr.mxu0 0.0
        %636 = vmatpush2.msra.mxu0 0.0
        %637 = vmatprep.subr.mxu0 0.0
        %638 = vmatpush2.msra.mxu0 0.0
        %639 = vmatprep.mubr.f32.mxu0 0.0
        %640 = vmatmul.mubr.f32.gmra.mxu0 %v564
        %v641 = vpop.f32.mrf.mxu0
        %v642 = vadd.f32 0.0, %v641
        %v643 = vpop.f32.mrf.mxu0
        %v644 = vadd.f32 0.0, %v643
        %645 = vmatprep.mubr.f32.mxu0 0.0
        %646 = vmatmul.mubr.f32.gmra.mxu0 %v567
        %v647 = vpop.f32.mrf.mxu0
        %v648 = vadd.f32 0.0, %v647
        %v649 = vpop.f32.mrf.mxu0
        %v650 = vadd.f32 0.0, %v649
        %651 = vdwg.mxu0
        %v653 = vsel %vm194, %v558, 0
        %v656 = vsel %vm194, %v559, 0
        %658 = vmatprep.subr.mxu0 0.0
        %659 = vmatpush1.msra.mxu0 0.0
        %660 = vmatprep.subr.mxu0 0.0
        %661 = vmatpush1.msra.mxu0 0.0
        %662 = vmatprep.subr.mxu0 0.0
        %663 = vmatpush1.msra.mxu0 0.0
        %664 = vmatprep.subr.mxu0 0.0
        %665 = vmatpush1.msra.mxu0 0.0
        %666 = vmatprep.subr.mxu0 0.0
        %667 = vmatpush1.msra.mxu0 0.0
        %668 = vmatprep.subr.mxu0 0.0
        %669 = vmatpush1.msra.mxu0 0.0
        %670 = vmatprep.subr.mxu0 0.0
        %671 = vmatpush1.msra.mxu0 0.0
        %672 = vmatprep.subr.mxu0 0.0
        %673 = vmatpush1.msra.mxu0 0.0
        %674 = vmatprep.subr.mxu0 0.0
        %675 = vmatpush1.msra.mxu0 0.0
        %676 = vmatprep.subr.mxu0 0.0
        %677 = vmatpush1.msra.mxu0 0.0
        %678 = vmatprep.subr.mxu0 0.0
        %679 = vmatpush1.msra.mxu0 0.0
        %680 = vmatprep.subr.mxu0 0.0
        %681 = vmatpush1.msra.mxu0 0.0
        %682 = vmatprep.subr.mxu0 0.0
        %683 = vmatpush1.msra.mxu0 0.0
        %684 = vmatprep.subr.mxu0 0.0
        %685 = vmatpush1.msra.mxu0 0.0
        %686 = vmatprep.subr.mxu0 0.0
        %687 = vmatpush1.msra.mxu0 0.0
        %688 = vmatprep.subr.mxu0 %v210
        %689 = vmatpush1.msra.mxu0 %v208
        %690 = vmatprep.subr.mxu0 0.0
        %691 = vmatpush2.msra.mxu0 0.0
        %692 = vmatprep.subr.mxu0 0.0
        %693 = vmatpush2.msra.mxu0 0.0
        %694 = vmatprep.subr.mxu0 0.0
        %695 = vmatpush2.msra.mxu0 0.0
        %696 = vmatprep.subr.mxu0 0.0
        %697 = vmatpush2.msra.mxu0 0.0
        %698 = vmatprep.subr.mxu0 0.0
        %699 = vmatpush2.msra.mxu0 0.0
        %700 = vmatprep.subr.mxu0 0.0
        %701 = vmatpush2.msra.mxu0 0.0
        %702 = vmatprep.subr.mxu0 0.0
        %703 = vmatpush2.msra.mxu0 0.0
        %704 = vmatprep.subr.mxu0 0.0
        %705 = vmatpush2.msra.mxu0 0.0
        %706 = vmatprep.subr.mxu0 0.0
        %707 = vmatpush2.msra.mxu0 0.0
        %708 = vmatprep.subr.mxu0 0.0
        %709 = vmatpush2.msra.mxu0 0.0
        %710 = vmatprep.subr.mxu0 0.0
        %711 = vmatpush2.msra.mxu0 0.0
        %712 = vmatprep.subr.mxu0 0.0
        %713 = vmatpush2.msra.mxu0 0.0
        %714 = vmatprep.subr.mxu0 0.0
        %715 = vmatpush2.msra.mxu0 0.0
        %716 = vmatprep.subr.mxu0 0.0
        %717 = vmatpush2.msra.mxu0 0.0
        %718 = vmatprep.subr.mxu0 0.0
        %719 = vmatpush2.msra.mxu0 0.0
        %720 = vmatprep.subr.mxu0 0.0
        %721 = vmatpush2.msra.mxu0 0.0
        %722 = vmatprep.mubr.f32.mxu0 0.0
        %723 = vmatmul.mubr.f32.gmra.mxu0 %v653
        %v724 = vpop.f32.mrf.mxu0
        %v725 = vadd.f32 %v642, %v724
        %v726 = vpop.f32.mrf.mxu0
        %v727 = vadd.f32 %v644, %v726
        %728 = vmatprep.mubr.f32.mxu0 0.0
        %729 = vmatmul.mubr.f32.gmra.mxu0 %v656
        %v730 = vpop.f32.mrf.mxu0
        %v731 = vadd.f32 %v648, %v730
        %v732 = vpop.f32.mrf.mxu0
        %v733 = vadd.f32 %v650, %v732
        %734 = vdwg.mxu0
        %v735 = vld [vmem:[#allocation2 + $0xa0] sm:$0xff]
        %v736 = vld [vmem:[#allocation2 + $0xa8] sm:$0xff]
        %v737 = vld [vmem:[#allocation2 + $0xb0] sm:$0xff]
        %v738 = vld [vmem:[#allocation2 + $0xb8] sm:$0x3f]
        %v739 = vld [vmem:[#allocation2 + $0xc0] sm:$0xff]
        %v740 = vld [vmem:[#allocation2 + $0xc8] sm:$0xff]
        %v741 = vld [vmem:[#allocation2 + $0xd0] sm:$0xff]
        %v742 = vld [vmem:[#allocation2 + $0xd8] sm:$0x3f]
        %744 = vset.pattern.permute.xlu0 0
        %745 = vperm.xlu0 %744, %v739
        %v746 = vpop.permute.xlu0 %745
        %749 = vset.pattern.permute.xlu0 0
        %750 = vperm.xlu0 %749, %v740
        %v751 = vpop.permute.xlu0 %750
        %754 = vset.pattern.permute.xlu0 0
        %755 = vperm.xlu0 %754, %v741
        %v756 = vpop.permute.xlu0 %755
        %759 = vset.pattern.permute.xlu0 0
        %760 = vperm.xlu0 %759, %v742
        %v761 = vpop.permute.xlu0 %760
        %vm763 = vcmask 64512
        %v765 = vsel %vm763, %v735, 0
        %v768 = vsel %vm763, %v736, 0
        %v771 = vsel %vm763, %v737, 0
        %v774 = vsel %vm763, %v738, 0
        %776 = vmatprep.subr.mxu0 0.0
        %777 = vmatpush1.msra.mxu0 0.0
        %778 = vmatprep.subr.mxu0 0.0
        %779 = vmatpush1.msra.mxu0 0.0
        %780 = vmatprep.subr.mxu0 0.0
        %781 = vmatpush1.msra.mxu0 0.0
        %782 = vmatprep.subr.mxu0 0.0
        %783 = vmatpush1.msra.mxu0 0.0
        %784 = vmatprep.subr.mxu0 0.0
        %785 = vmatpush1.msra.mxu0 0.0
        %786 = vmatprep.subr.mxu0 0.0
        %787 = vmatpush1.msra.mxu0 0.0
        %788 = vmatprep.subr.mxu0 0.0
        %789 = vmatpush1.msra.mxu0 0.0
        %790 = vmatprep.subr.mxu0 0.0
        %791 = vmatpush1.msra.mxu0 0.0
        %792 = vmatprep.subr.mxu0 0.0
        %793 = vmatpush1.msra.mxu0 0.0
        %794 = vmatprep.subr.mxu0 0.0
        %795 = vmatpush1.msra.mxu0 0.0
        %796 = vmatprep.subr.mxu0 0.0
        %797 = vmatpush1.msra.mxu0 0.0
        %798 = vmatprep.subr.mxu0 0.0
        %799 = vmatpush1.msra.mxu0 0.0
        %800 = vmatprep.subr.mxu0 0.0
        %801 = vmatpush1.msra.mxu0 0.0
        %802 = vmatprep.subr.mxu0 0.0
        %803 = vmatpush1.msra.mxu0 0.0
        %804 = vmatprep.subr.mxu0 0.0
        %805 = vmatpush1.msra.mxu0 0.0
        %806 = vmatprep.subr.mxu0 %v727
        %807 = vmatpush1.msra.mxu0 %v725
        %808 = vmatprep.subr.mxu0 0.0
        %809 = vmatpush2.msra.mxu0 0.0
        %810 = vmatprep.subr.mxu0 0.0
        %811 = vmatpush2.msra.mxu0 0.0
        %812 = vmatprep.subr.mxu0 0.0
        %813 = vmatpush2.msra.mxu0 0.0
        %814 = vmatprep.subr.mxu0 0.0
        %815 = vmatpush2.msra.mxu0 0.0
        %816 = vmatprep.subr.mxu0 0.0
        %817 = vmatpush2.msra.mxu0 0.0
        %818 = vmatprep.subr.mxu0 0.0
        %819 = vmatpush2.msra.mxu0 0.0
        %820 = vmatprep.subr.mxu0 0.0
        %821 = vmatpush2.msra.mxu0 0.0
        %822 = vmatprep.subr.mxu0 0.0
        %823 = vmatpush2.msra.mxu0 0.0
        %824 = vmatprep.subr.mxu0 0.0
        %825 = vmatpush2.msra.mxu0 0.0
        %826 = vmatprep.subr.mxu0 0.0
        %827 = vmatpush2.msra.mxu0 0.0
        %828 = vmatprep.subr.mxu0 0.0
        %829 = vmatpush2.msra.mxu0 0.0
        %830 = vmatprep.subr.mxu0 0.0
        %831 = vmatpush2.msra.mxu0 0.0
        %832 = vmatprep.subr.mxu0 0.0
        %833 = vmatpush2.msra.mxu0 0.0
        %834 = vmatprep.subr.mxu0 0.0
        %835 = vmatpush2.msra.mxu0 0.0
        %836 = vmatprep.subr.mxu0 0.0
        %837 = vmatpush2.msra.mxu0 0.0
        %838 = vmatprep.subr.mxu0 0.0
        %839 = vmatpush2.msra.mxu0 0.0
        %840 = vmatprep.mubr.f32.mxu0 0.0
        %841 = vmatmul.mubr.f32.gmra.mxu0 %v765
        %v842 = vpop.f32.mrf.mxu0
        %v843 = vadd.f32 %v746, %v842
        %v844 = vpop.f32.mrf.mxu0
        %v845 = vadd.f32 %v746, %v844
        %846 = vmatprep.mubr.f32.mxu0 0.0
        %847 = vmatmul.mubr.f32.gmra.mxu0 %v768
        %v848 = vpop.f32.mrf.mxu0
        %v849 = vadd.f32 %v751, %v848
        %v850 = vpop.f32.mrf.mxu0
        %v851 = vadd.f32 %v751, %v850
        %852 = vmatprep.mubr.f32.mxu0 0.0
        %853 = vmatmul.mubr.f32.gmra.mxu0 %v771
        %v854 = vpop.f32.mrf.mxu0
        %v855 = vadd.f32 %v756, %v854
        %v856 = vpop.f32.mrf.mxu0
        %v857 = vadd.f32 %v756, %v856
        %858 = vmatprep.mubr.f32.mxu0 0.0
        %859 = vmatmul.mubr.f32.gmra.mxu0 %v774
        %v860 = vpop.f32.mrf.mxu0
        %v861 = vadd.f32 %v761, %v860
        %v862 = vpop.f32.mrf.mxu0
        %v863 = vadd.f32 %v761, %v862
        %864 = vdwg.mxu0
        %v865 = vmax.f32 %v843, 0.0
        %v866 = vmax.f32 %v845, 0.0
        %v867 = vmax.f32 %v849, 0.0
        %v868 = vmax.f32 %v851, 0.0
        %v869 = vmax.f32 %v855, 0.0
        %v870 = vmax.f32 %v857, 0.0
        %v871 = vmax.f32 %v861, 0.0
        %v872 = vmax.f32 %v863, 0.0
        %v873 = vld [vmem:[#allocation2 + $0xe0] sm:$0xff]
        %v874 = vld [vmem:[#allocation2 + $0xe8] sm:$0xff]
        %v875 = vld [vmem:[#allocation2 + $0xf0] sm:$0xff]
        %v876 = vld [vmem:[#allocation2 + $0xf8] sm:$0x3f]
        %v877 = vld [vmem:[#allocation2 + $0x100] sm:$0xff]
        %v878 = vld [vmem:[#allocation2 + $0x108] sm:$0xff]
        %v879 = vld [vmem:[#allocation2 + $0x110] sm:$0xff]
        %v880 = vld [vmem:[#allocation2 + $0x118] sm:$0x3f]
        %882 = vset.pattern.permute.xlu0 0
        %883 = vperm.xlu0 %882, %v877
        %v884 = vpop.permute.xlu0 %883
        %887 = vset.pattern.permute.xlu0 0
        %888 = vperm.xlu0 %887, %v878
        %v889 = vpop.permute.xlu0 %888
        %892 = vset.pattern.permute.xlu0 0
        %893 = vperm.xlu0 %892, %v879
        %v894 = vpop.permute.xlu0 %893
        %897 = vset.pattern.permute.xlu0 0
        %898 = vperm.xlu0 %897, %v880
        %v899 = vpop.permute.xlu0 %898
        %v902 = vsel %vm337, %v873, 0
        %v905 = vsel %vm337, %v874, 0
        %v908 = vsel %vm337, %v875, 0
        %v911 = vsel %vm337, %v876, 0
        %v914 = vsel %vm350, %v871, 0
        %v917 = vsel %vm350, %v872, 0
        %919 = vmatprep.subr.mxu0 0.0
        %920 = vmatpush1.msra.mxu0 0.0
        %921 = vmatprep.subr.mxu0 0.0
        %922 = vmatpush1.msra.mxu0 0.0
        %923 = vmatprep.subr.mxu0 0.0
        %924 = vmatpush1.msra.mxu0 0.0
        %925 = vmatprep.subr.mxu0 0.0
        %926 = vmatpush1.msra.mxu0 0.0
        %927 = vmatprep.subr.mxu0 0.0
        %928 = vmatpush1.msra.mxu0 0.0
        %929 = vmatprep.subr.mxu0 0.0
        %930 = vmatpush1.msra.mxu0 0.0
        %931 = vmatprep.subr.mxu0 0.0
        %932 = vmatpush1.msra.mxu0 0.0
        %933 = vmatprep.subr.mxu0 0.0
        %934 = vmatpush1.msra.mxu0 0.0
        %935 = vmatprep.subr.mxu0 0.0
        %936 = vmatpush1.msra.mxu0 0.0
        %937 = vmatprep.subr.mxu0 0.0
        %938 = vmatpush1.msra.mxu0 0.0
        %939 = vmatprep.subr.mxu0 0.0
        %940 = vmatpush1.msra.mxu0 0.0
        %941 = vmatprep.subr.mxu0 0.0
        %942 = vmatpush1.msra.mxu0 0.0
        %943 = vmatprep.subr.mxu0 %v917
        %944 = vmatpush1.msra.mxu0 %v914
        %945 = vmatprep.subr.mxu0 %v870
        %946 = vmatpush1.msra.mxu0 %v869
        %947 = vmatprep.subr.mxu0 %v868
        %948 = vmatpush1.msra.mxu0 %v867
        %949 = vmatprep.subr.mxu0 %v866
        %950 = vmatpush1.msra.mxu0 %v865
        %951 = vmatprep.subr.mxu0 0.0
        %952 = vmatpush2.msra.mxu0 0.0
        %953 = vmatprep.subr.mxu0 0.0
        %954 = vmatpush2.msra.mxu0 0.0
        %955 = vmatprep.subr.mxu0 0.0
        %956 = vmatpush2.msra.mxu0 0.0
        %957 = vmatprep.subr.mxu0 0.0
        %958 = vmatpush2.msra.mxu0 0.0
        %959 = vmatprep.subr.mxu0 0.0
        %960 = vmatpush2.msra.mxu0 0.0
        %961 = vmatprep.subr.mxu0 0.0
        %962 = vmatpush2.msra.mxu0 0.0
        %963 = vmatprep.subr.mxu0 0.0
        %964 = vmatpush2.msra.mxu0 0.0
        %965 = vmatprep.subr.mxu0 0.0
        %966 = vmatpush2.msra.mxu0 0.0
        %967 = vmatprep.subr.mxu0 0.0
        %968 = vmatpush2.msra.mxu0 0.0
        %969 = vmatprep.subr.mxu0 0.0
        %970 = vmatpush2.msra.mxu0 0.0
        %971 = vmatprep.subr.mxu0 0.0
        %972 = vmatpush2.msra.mxu0 0.0
        %973 = vmatprep.subr.mxu0 0.0
        %974 = vmatpush2.msra.mxu0 0.0
        %975 = vmatprep.subr.mxu0 0.0
        %976 = vmatpush2.msra.mxu0 0.0
        %977 = vmatprep.subr.mxu0 0.0
        %978 = vmatpush2.msra.mxu0 0.0
        %979 = vmatprep.subr.mxu0 0.0
        %980 = vmatpush2.msra.mxu0 0.0
        %981 = vmatprep.subr.mxu0 0.0
        %982 = vmatpush2.msra.mxu0 0.0
        %983 = vmatprep.mubr.f32.mxu0 0.0
        %984 = vmatmul.mubr.f32.gmra.mxu0 %v902
        %v985 = vpop.f32.mrf.mxu0
        %v986 = vadd.f32 %v884, %v985
        %v987 = vpop.f32.mrf.mxu0
        %v988 = vadd.f32 %v884, %v987
        %989 = vmatprep.mubr.f32.mxu0 0.0
        %990 = vmatmul.mubr.f32.gmra.mxu0 %v905
        %v991 = vpop.f32.mrf.mxu0
        %v992 = vadd.f32 %v889, %v991
        %v993 = vpop.f32.mrf.mxu0
        %v994 = vadd.f32 %v889, %v993
        %995 = vmatprep.mubr.f32.mxu0 0.0
        %996 = vmatmul.mubr.f32.gmra.mxu0 %v908
        %v997 = vpop.f32.mrf.mxu0
        %v998 = vadd.f32 %v894, %v997
        %v999 = vpop.f32.mrf.mxu0
        %v1000 = vadd.f32 %v894, %v999
        %1001 = vmatprep.mubr.f32.mxu0 0.0
        %1002 = vmatmul.mubr.f32.gmra.mxu0 %v911
        %v1003 = vpop.f32.mrf.mxu0
        %v1004 = vadd.f32 %v899, %v1003
        %v1005 = vpop.f32.mrf.mxu0
        %v1006 = vadd.f32 %v899, %v1005
        %1007 = vdwg.mxu0
        %v1008 = vmax.f32 %v986, 0.0
        %v1009 = vmax.f32 %v988, 0.0
        %v1010 = vmax.f32 %v992, 0.0
        %v1011 = vmax.f32 %v994, 0.0
        %v1012 = vmax.f32 %v998, 0.0
        %v1013 = vmax.f32 %v1000, 0.0
        %v1014 = vmax.f32 %v1004, 0.0
        %v1015 = vmax.f32 %v1006, 0.0
        %v1016 = vld [vmem:[#allocation2 + $0x120] sm:$0x7f]
        %v1017 = vld [vmem:[#allocation2 + $0x128] sm:$0x7f]
        %1019 = vset.pattern.permute.xlu0 0
        %1020 = vperm.xlu0 %1019, %v1017
        %v1021 = vpop.permute.xlu0 %1020
        %v1024 = vsel %vm337, %v1016, 0
        %v1027 = vsel %vm350, %v1014, 0
        %v1030 = vsel %vm350, %v1015, 0
        %1032 = vmatprep.subr.mxu0 0.0
        %1033 = vmatpush1.msra.mxu0 0.0
        %1034 = vmatprep.subr.mxu0 0.0
        %1035 = vmatpush1.msra.mxu0 0.0
        %1036 = vmatprep.subr.mxu0 0.0
        %1037 = vmatpush1.msra.mxu0 0.0
        %1038 = vmatprep.subr.mxu0 0.0
        %1039 = vmatpush1.msra.mxu0 0.0
        %1040 = vmatprep.subr.mxu0 0.0
        %1041 = vmatpush1.msra.mxu0 0.0
        %1042 = vmatprep.subr.mxu0 0.0
        %1043 = vmatpush1.msra.mxu0 0.0
        %1044 = vmatprep.subr.mxu0 0.0
        %1045 = vmatpush1.msra.mxu0 0.0
        %1046 = vmatprep.subr.mxu0 0.0
        %1047 = vmatpush1.msra.mxu0 0.0
        %1048 = vmatprep.subr.mxu0 0.0
        %1049 = vmatpush1.msra.mxu0 0.0
        %1050 = vmatprep.subr.mxu0 0.0
        %1051 = vmatpush1.msra.mxu0 0.0
        %1052 = vmatprep.subr.mxu0 0.0
        %1053 = vmatpush1.msra.mxu0 0.0
        %1054 = vmatprep.subr.mxu0 0.0
        %1055 = vmatpush1.msra.mxu0 0.0
        %1056 = vmatprep.subr.mxu0 %v1030
        %1057 = vmatpush1.msra.mxu0 %v1027
        %1058 = vmatprep.subr.mxu0 %v1013
        %1059 = vmatpush1.msra.mxu0 %v1012
        %1060 = vmatprep.subr.mxu0 %v1011
        %1061 = vmatpush1.msra.mxu0 %v1010
        %1062 = vmatprep.subr.mxu0 %v1009
        %1063 = vmatpush1.msra.mxu0 %v1008
        %1064 = vmatprep.subr.mxu0 0.0
        %1065 = vmatpush2.msra.mxu0 0.0
        %1066 = vmatprep.subr.mxu0 0.0
        %1067 = vmatpush2.msra.mxu0 0.0
        %1068 = vmatprep.subr.mxu0 0.0
        %1069 = vmatpush2.msra.mxu0 0.0
        %1070 = vmatprep.subr.mxu0 0.0
        %1071 = vmatpush2.msra.mxu0 0.0
        %1072 = vmatprep.subr.mxu0 0.0
        %1073 = vmatpush2.msra.mxu0 0.0
        %1074 = vmatprep.subr.mxu0 0.0
        %1075 = vmatpush2.msra.mxu0 0.0
        %1076 = vmatprep.subr.mxu0 0.0
        %1077 = vmatpush2.msra.mxu0 0.0
        %1078 = vmatprep.subr.mxu0 0.0
        %1079 = vmatpush2.msra.mxu0 0.0
        %1080 = vmatprep.subr.mxu0 0.0
        %1081 = vmatpush2.msra.mxu0 0.0
        %1082 = vmatprep.subr.mxu0 0.0
        %1083 = vmatpush2.msra.mxu0 0.0
        %1084 = vmatprep.subr.mxu0 0.0
        %1085 = vmatpush2.msra.mxu0 0.0
        %1086 = vmatprep.subr.mxu0 0.0
        %1087 = vmatpush2.msra.mxu0 0.0
        %1088 = vmatprep.subr.mxu0 0.0
        %1089 = vmatpush2.msra.mxu0 0.0
        %1090 = vmatprep.subr.mxu0 0.0
        %1091 = vmatpush2.msra.mxu0 0.0
        %1092 = vmatprep.subr.mxu0 0.0
        %1093 = vmatpush2.msra.mxu0 0.0
        %1094 = vmatprep.subr.mxu0 0.0
        %1095 = vmatpush2.msra.mxu0 0.0
        %1096 = vmatprep.mubr.f32.mxu0 0.0
        %1097 = vmatmul.mubr.f32.gmra.mxu0 %v1024
        %v1098 = vpop.f32.mrf.mxu0
        %v1099 = vadd.f32 %v1021, %v1098
        %v1100 = vpop.f32.mrf.mxu0
        %v1101 = vadd.f32 %v1021, %v1100
        %1102 = vdwg.mxu0
        %v1103 = vtanh.pop %v1099
        %v1104 = vtanh.pop %v1101
        %v1105 = vmul.f32 %v1103, 0.1
        %v1106 = vmul.f32 %v1104, 0.1
        %v1107 = vld [vmem:[#allocation2 + $0x130] sm:$0xff]
        %v1108 = vld [vmem:[#allocation2 + $0x138] sm:$0xff]
        %1110 = vset.pattern.permute.xlu0 0
        %1111 = vperm.xlu0 %1110, %v1108
        %v1112 = vpop.permute.xlu0 %1111
        %v1115 = vsel %vm337, %v1107, 0
        %1117 = vmatprep.subr.mxu0 0.0
        %1118 = vmatpush1.msra.mxu0 0.0
        %1119 = vmatprep.subr.mxu0 0.0
        %1120 = vmatpush1.msra.mxu0 0.0
        %1121 = vmatprep.subr.mxu0 0.0
        %1122 = vmatpush1.msra.mxu0 0.0
        %1123 = vmatprep.subr.mxu0 0.0
        %1124 = vmatpush1.msra.mxu0 0.0
        %1125 = vmatprep.subr.mxu0 0.0
        %1126 = vmatpush1.msra.mxu0 0.0
        %1127 = vmatprep.subr.mxu0 0.0
        %1128 = vmatpush1.msra.mxu0 0.0
        %1129 = vmatprep.subr.mxu0 0.0
        %1130 = vmatpush1.msra.mxu0 0.0
        %1131 = vmatprep.subr.mxu0 0.0
        %1132 = vmatpush1.msra.mxu0 0.0
        %1133 = vmatprep.subr.mxu0 0.0
        %1134 = vmatpush1.msra.mxu0 0.0
        %1135 = vmatprep.subr.mxu0 0.0
        %1136 = vmatpush1.msra.mxu0 0.0
        %1137 = vmatprep.subr.mxu0 0.0
        %1138 = vmatpush1.msra.mxu0 0.0
        %1139 = vmatprep.subr.mxu0 0.0
        %1140 = vmatpush1.msra.mxu0 0.0
        %1141 = vmatprep.subr.mxu0 %v1030
        %1142 = vmatpush1.msra.mxu0 %v1027
        %1143 = vmatprep.subr.mxu0 %v1013
        %1144 = vmatpush1.msra.mxu0 %v1012
        %1145 = vmatprep.subr.mxu0 %v1011
        %1146 = vmatpush1.msra.mxu0 %v1010
        %1147 = vmatprep.subr.mxu0 %v1009
        %1148 = vmatpush1.msra.mxu0 %v1008
        %1149 = vmatprep.subr.mxu0 0.0
        %1150 = vmatpush2.msra.mxu0 0.0
        %1151 = vmatprep.subr.mxu0 0.0
        %1152 = vmatpush2.msra.mxu0 0.0
        %1153 = vmatprep.subr.mxu0 0.0
        %1154 = vmatpush2.msra.mxu0 0.0
        %1155 = vmatprep.subr.mxu0 0.0
        %1156 = vmatpush2.msra.mxu0 0.0
        %1157 = vmatprep.subr.mxu0 0.0
        %1158 = vmatpush2.msra.mxu0 0.0
        %1159 = vmatprep.subr.mxu0 0.0
        %1160 = vmatpush2.msra.mxu0 0.0
        %1161 = vmatprep.subr.mxu0 0.0
        %1162 = vmatpush2.msra.mxu0 0.0
        %1163 = vmatprep.subr.mxu0 0.0
        %1164 = vmatpush2.msra.mxu0 0.0
        %1165 = vmatprep.subr.mxu0 0.0
        %1166 = vmatpush2.msra.mxu0 0.0
        %1167 = vmatprep.subr.mxu0 0.0
        %1168 = vmatpush2.msra.mxu0 0.0
        %1169 = vmatprep.subr.mxu0 0.0
        %1170 = vmatpush2.msra.mxu0 0.0
        %1171 = vmatprep.subr.mxu0 0.0
        %1172 = vmatpush2.msra.mxu0 0.0
        %1173 = vmatprep.subr.mxu0 0.0
        %1174 = vmatpush2.msra.mxu0 0.0
        %1175 = vmatprep.subr.mxu0 0.0
        %1176 = vmatpush2.msra.mxu0 0.0
        %1177 = vmatprep.subr.mxu0 0.0
        %1178 = vmatpush2.msra.mxu0 0.0
        %1179 = vmatprep.subr.mxu0 0.0
        %1180 = vmatpush2.msra.mxu0 0.0
        %1181 = vmatprep.mubr.f32.mxu0 0.0
        %1182 = vmatmul.mubr.f32.gmra.mxu0 %v1115
        %v1183 = vpop.f32.mrf.mxu0
        %v1184 = vadd.f32 %v1112, %v1183
        %v1185 = vpop.f32.mrf.mxu0
        %v1186 = vadd.f32 %v1112, %v1185
        %1187 = vdwg.mxu0
        %vm1188 = vcmask 56320
        %v1190 = vsel %vm1188, %v557, 0
        %vm1192 = vcmask 1046528
        %v1194 = vsel %vm1192, %v1105, 0
        %v1197 = vsel %vm1192, %v1106, 0
        %1199 = vmatprep.subr.mxu0 0.0
        %1200 = vmatpush1.msra.mxu0 0.0
        %1201 = vmatprep.subr.mxu0 0.0
        %1202 = vmatpush1.msra.mxu0 0.0
        %1203 = vmatprep.subr.mxu0 0.0
        %1204 = vmatpush1.msra.mxu0 0.0
        %1205 = vmatprep.subr.mxu0 0.0
        %1206 = vmatpush1.msra.mxu0 0.0
        %1207 = vmatprep.subr.mxu0 0.0
        %1208 = vmatpush1.msra.mxu0 0.0
        %1209 = vmatprep.subr.mxu0 0.0
        %1210 = vmatpush1.msra.mxu0 0.0
        %1211 = vmatprep.subr.mxu0 0.0
        %1212 = vmatpush1.msra.mxu0 0.0
        %1213 = vmatprep.subr.mxu0 0.0
        %1214 = vmatpush1.msra.mxu0 0.0
        %1215 = vmatprep.subr.mxu0 0.0
        %1216 = vmatpush1.msra.mxu0 0.0
        %1217 = vmatprep.subr.mxu0 0.0
        %1218 = vmatpush1.msra.mxu0 0.0
        %1219 = vmatprep.subr.mxu0 0.0
        %1220 = vmatpush1.msra.mxu0 0.0
        %1221 = vmatprep.subr.mxu0 0.0
        %1222 = vmatpush1.msra.mxu0 0.0
        %1223 = vmatprep.subr.mxu0 0.0
        %1224 = vmatpush1.msra.mxu0 0.0
        %1225 = vmatprep.subr.mxu0 0.0
        %1226 = vmatpush1.msra.mxu0 0.0
        %1227 = vmatprep.subr.mxu0 0.0
        %1228 = vmatpush1.msra.mxu0 0.0
        %1229 = vmatprep.subr.mxu0 %v1197
        %1230 = vmatpush1.msra.mxu0 %v1194
        %1231 = vmatprep.subr.mxu0 0.0
        %1232 = vmatpush2.msra.mxu0 0.0
        %1233 = vmatprep.subr.mxu0 0.0
        %1234 = vmatpush2.msra.mxu0 0.0
        %1235 = vmatprep.subr.mxu0 0.0
        %1236 = vmatpush2.msra.mxu0 0.0
        %1237 = vmatprep.subr.mxu0 0.0
        %1238 = vmatpush2.msra.mxu0 0.0
        %1239 = vmatprep.subr.mxu0 0.0
        %1240 = vmatpush2.msra.mxu0 0.0
        %1241 = vmatprep.subr.mxu0 0.0
        %1242 = vmatpush2.msra.mxu0 0.0
        %1243 = vmatprep.subr.mxu0 0.0
        %1244 = vmatpush2.msra.mxu0 0.0
        %1245 = vmatprep.subr.mxu0 0.0
        %1246 = vmatpush2.msra.mxu0 0.0
        %1247 = vmatprep.subr.mxu0 0.0
        %1248 = vmatpush2.msra.mxu0 0.0
        %1249 = vmatprep.subr.mxu0 0.0
        %1250 = vmatpush2.msra.mxu0 0.0
        %1251 = vmatprep.subr.mxu0 0.0
        %1252 = vmatpush2.msra.mxu0 0.0
        %1253 = vmatprep.subr.mxu0 0.0
        %1254 = vmatpush2.msra.mxu0 0.0
        %1255 = vmatprep.subr.mxu0 0.0
        %1256 = vmatpush2.msra.mxu0 0.0
        %1257 = vmatprep.subr.mxu0 0.0
        %1258 = vmatpush2.msra.mxu0 0.0
        %1259 = vmatprep.subr.mxu0 0.0
        %1260 = vmatpush2.msra.mxu0 0.0
        %1261 = vmatprep.subr.mxu0 0.0
        %1262 = vmatpush2.msra.mxu0 0.0
        %1263 = vmatprep.mubr.f32.mxu0 0.0
        %1264 = vmatmul.mubr.f32.gmra.mxu0 %v1190
        %v1265 = vpop.f32.mrf.mxu0
        %v1266 = vadd.f32 0.0, %v1265
        %v1267 = vpop.f32.mrf.mxu0
        %v1268 = vadd.f32 0.0, %v1267
        %1269 = vdwg.mxu0
        %v1270 = vmul.f32 %v1266, 1.442695
        %v1271 = vpow.pop %v1270
        %v1272 = vmul.f32 %v1268, 1.442695
        %v1273 = vpow.pop %v1272
        %v1274 = vmul.f32 %v731, %v1271
        %v1275 = vmul.f32 %v733, %v1273
        %v1276 = vadd.f32 %v1274, %v1184
        %v1277 = vadd.f32 %v1275, %v1186
        %v1278 = vld [vmem:[#allocation2 + $0x140] sm:$0xff]
        %v1279 = vld [vmem:[#allocation2 + $0x148] sm:$0xff]
        %v1280 = vld [vmem:[#allocation2 + $0x150] sm:$0xff]
        %v1281 = vld [vmem:[#allocation2 + $0x158] sm:$0x3f]
        %v1282 = vld [vmem:[#allocation2 + $0x160] sm:$0xff]
        %v1283 = vld [vmem:[#allocation2 + $0x168] sm:$0xff]
        %v1284 = vld [vmem:[#allocation2 + $0x170] sm:$0xff]
        %v1285 = vld [vmem:[#allocation2 + $0x178] sm:$0x3f]
        %1287 = vset.pattern.permute.xlu0 0
        %1288 = vperm.xlu0 %1287, %v1282
        %v1289 = vpop.permute.xlu0 %1288
        %1292 = vset.pattern.permute.xlu0 0
        %1293 = vperm.xlu0 %1292, %v1283
        %v1294 = vpop.permute.xlu0 %1293
        %1297 = vset.pattern.permute.xlu0 0
        %1298 = vperm.xlu0 %1297, %v1284
        %v1299 = vpop.permute.xlu0 %1298
        %1302 = vset.pattern.permute.xlu0 0
        %1303 = vperm.xlu0 %1302, %v1285
        %v1304 = vpop.permute.xlu0 %1303
        %v1307 = vsel %vm763, %v1278, 0
        %v1310 = vsel %vm763, %v1279, 0
        %v1313 = vsel %vm763, %v1280, 0
        %v1316 = vsel %vm763, %v1281, 0
        %1318 = vmatprep.subr.mxu0 0.0
        %1319 = vmatpush1.msra.mxu0 0.0
        %1320 = vmatprep.subr.mxu0 0.0
        %1321 = vmatpush1.msra.mxu0 0.0
        %1322 = vmatprep.subr.mxu0 0.0
        %1323 = vmatpush1.msra.mxu0 0.0
        %1324 = vmatprep.subr.mxu0 0.0
        %1325 = vmatpush1.msra.mxu0 0.0
        %1326 = vmatprep.subr.mxu0 0.0
        %1327 = vmatpush1.msra.mxu0 0.0
        %1328 = vmatprep.subr.mxu0 0.0
        %1329 = vmatpush1.msra.mxu0 0.0
        %1330 = vmatprep.subr.mxu0 0.0
        %1331 = vmatpush1.msra.mxu0 0.0
        %1332 = vmatprep.subr.mxu0 0.0
        %1333 = vmatpush1.msra.mxu0 0.0
        %1334 = vmatprep.subr.mxu0 0.0
        %1335 = vmatpush1.msra.mxu0 0.0
        %1336 = vmatprep.subr.mxu0 0.0
        %1337 = vmatpush1.msra.mxu0 0.0
        %1338 = vmatprep.subr.mxu0 0.0
        %1339 = vmatpush1.msra.mxu0 0.0
        %1340 = vmatprep.subr.mxu0 0.0
        %1341 = vmatpush1.msra.mxu0 0.0
        %1342 = vmatprep.subr.mxu0 0.0
        %1343 = vmatpush1.msra.mxu0 0.0
        %1344 = vmatprep.subr.mxu0 0.0
        %1345 = vmatpush1.msra.mxu0 0.0
        %1346 = vmatprep.subr.mxu0 0.0
        %1347 = vmatpush1.msra.mxu0 0.0
        %1348 = vmatprep.subr.mxu0 %v1277
        %1349 = vmatpush1.msra.mxu0 %v1276
        %1350 = vmatprep.subr.mxu0 0.0
        %1351 = vmatpush2.msra.mxu0 0.0
        %1352 = vmatprep.subr.mxu0 0.0
        %1353 = vmatpush2.msra.mxu0 0.0
        %1354 = vmatprep.subr.mxu0 0.0
        %1355 = vmatpush2.msra.mxu0 0.0
        %1356 = vmatprep.subr.mxu0 0.0
        %1357 = vmatpush2.msra.mxu0 0.0
        %1358 = vmatprep.subr.mxu0 0.0
        %1359 = vmatpush2.msra.mxu0 0.0
        %1360 = vmatprep.subr.mxu0 0.0
        %1361 = vmatpush2.msra.mxu0 0.0
        %1362 = vmatprep.subr.mxu0 0.0
        %1363 = vmatpush2.msra.mxu0 0.0
        %1364 = vmatprep.subr.mxu0 0.0
        %1365 = vmatpush2.msra.mxu0 0.0
        %1366 = vmatprep.subr.mxu0 0.0
        %1367 = vmatpush2.msra.mxu0 0.0
        %1368 = vmatprep.subr.mxu0 0.0
        %1369 = vmatpush2.msra.mxu0 0.0
        %1370 = vmatprep.subr.mxu0 0.0
        %1371 = vmatpush2.msra.mxu0 0.0
        %1372 = vmatprep.subr.mxu0 0.0
        %1373 = vmatpush2.msra.mxu0 0.0
        %1374 = vmatprep.subr.mxu0 0.0
        %1375 = vmatpush2.msra.mxu0 0.0
        %1376 = vmatprep.subr.mxu0 0.0
        %1377 = vmatpush2.msra.mxu0 0.0
        %1378 = vmatprep.subr.mxu0 0.0
        %1379 = vmatpush2.msra.mxu0 0.0
        %1380 = vmatprep.subr.mxu0 0.0
        %1381 = vmatpush2.msra.mxu0 0.0
        %1382 = vmatprep.mubr.f32.mxu0 0.0
        %1383 = vmatmul.mubr.f32.gmra.mxu0 %v1307
        %v1384 = vpop.f32.mrf.mxu0
        %v1385 = vadd.f32 %v1289, %v1384
        %v1386 = vpop.f32.mrf.mxu0
        %v1387 = vadd.f32 %v1289, %v1386
        %1388 = vmatprep.mubr.f32.mxu0 0.0
        %1389 = vmatmul.mubr.f32.gmra.mxu0 %v1310
        %v1390 = vpop.f32.mrf.mxu0
        %v1391 = vadd.f32 %v1294, %v1390
        %v1392 = vpop.f32.mrf.mxu0
        %v1393 = vadd.f32 %v1294, %v1392
        %1394 = vmatprep.mubr.f32.mxu0 0.0
        %1395 = vmatmul.mubr.f32.gmra.mxu0 %v1313
        %v1396 = vpop.f32.mrf.mxu0
        %v1397 = vadd.f32 %v1299, %v1396
        %v1398 = vpop.f32.mrf.mxu0
        %v1399 = vadd.f32 %v1299, %v1398
        %1400 = vmatprep.mubr.f32.mxu0 0.0
        %1401 = vmatmul.mubr.f32.gmra.mxu0 %v1316
        %v1402 = vpop.f32.mrf.mxu0
        %v1403 = vadd.f32 %v1304, %v1402
        %v1404 = vpop.f32.mrf.mxu0
        %v1405 = vadd.f32 %v1304, %v1404
        %1406 = vdwg.mxu0
        %v1407 = vmax.f32 %v1385, 0.0
        %v1408 = vmax.f32 %v1387, 0.0
        %v1409 = vmax.f32 %v1391, 0.0
        %v1410 = vmax.f32 %v1393, 0.0
        %v1411 = vmax.f32 %v1397, 0.0
        %v1412 = vmax.f32 %v1399, 0.0
        %v1413 = vmax.f32 %v1403, 0.0
        %v1414 = vmax.f32 %v1405, 0.0
        %v1415 = vld [vmem:[#allocation2 + $0x180] sm:$0xff]
        %v1416 = vld [vmem:[#allocation2 + $0x188] sm:$0xff]
        %v1417 = vld [vmem:[#allocation2 + $0x190] sm:$0xff]
        %v1418 = vld [vmem:[#allocation2 + $0x198] sm:$0x3f]
        %v1419 = vld [vmem:[#allocation2 + $0x1a0] sm:$0xff]
        %v1420 = vld [vmem:[#allocation2 + $0x1a8] sm:$0xff]
        %v1421 = vld [vmem:[#allocation2 + $0x1b0] sm:$0xff]
        %v1422 = vld [vmem:[#allocation2 + $0x1b8] sm:$0x3f]
        %1424 = vset.pattern.permute.xlu0 0
        %1425 = vperm.xlu0 %1424, %v1419
        %v1426 = vpop.permute.xlu0 %1425
        %1429 = vset.pattern.permute.xlu0 0
        %1430 = vperm.xlu0 %1429, %v1420
        %v1431 = vpop.permute.xlu0 %1430
        %1434 = vset.pattern.permute.xlu0 0
        %1435 = vperm.xlu0 %1434, %v1421
        %v1436 = vpop.permute.xlu0 %1435
        %1439 = vset.pattern.permute.xlu0 0
        %1440 = vperm.xlu0 %1439, %v1422
        %v1441 = vpop.permute.xlu0 %1440
        %v1444 = vsel %vm337, %v1415, 0
        %v1447 = vsel %vm337, %v1416, 0
        %v1450 = vsel %vm337, %v1417, 0
        %v1453 = vsel %vm337, %v1418, 0
        %v1456 = vsel %vm350, %v1413, 0
        %v1459 = vsel %vm350, %v1414, 0
        %1461 = vmatprep.subr.mxu0 0.0
        %1462 = vmatpush1.msra.mxu0 0.0
        %1463 = vmatprep.subr.mxu0 0.0
        %1464 = vmatpush1.msra.mxu0 0.0
        %1465 = vmatprep.subr.mxu0 0.0
        %1466 = vmatpush1.msra.mxu0 0.0
        %1467 = vmatprep.subr.mxu0 0.0
        %1468 = vmatpush1.msra.mxu0 0.0
        %1469 = vmatprep.subr.mxu0 0.0
        %1470 = vmatpush1.msra.mxu0 0.0
        %1471 = vmatprep.subr.mxu0 0.0
        %1472 = vmatpush1.msra.mxu0 0.0
        %1473 = vmatprep.subr.mxu0 0.0
        %1474 = vmatpush1.msra.mxu0 0.0
        %1475 = vmatprep.subr.mxu0 0.0
        %1476 = vmatpush1.msra.mxu0 0.0
        %1477 = vmatprep.subr.mxu0 0.0
        %1478 = vmatpush1.msra.mxu0 0.0
        %1479 = vmatprep.subr.mxu0 0.0
        %1480 = vmatpush1.msra.mxu0 0.0
        %1481 = vmatprep.subr.mxu0 0.0
        %1482 = vmatpush1.msra.mxu0 0.0
        %1483 = vmatprep.subr.mxu0 0.0
        %1484 = vmatpush1.msra.mxu0 0.0
        %1485 = vmatprep.subr.mxu0 %v1459
        %1486 = vmatpush1.msra.mxu0 %v1456
        %1487 = vmatprep.subr.mxu0 %v1412
        %1488 = vmatpush1.msra.mxu0 %v1411
        %1489 = vmatprep.subr.mxu0 %v1410
        %1490 = vmatpush1.msra.mxu0 %v1409
        %1491 = vmatprep.subr.mxu0 %v1408
        %1492 = vmatpush1.msra.mxu0 %v1407
        %1493 = vmatprep.subr.mxu0 0.0
        %1494 = vmatpush2.msra.mxu0 0.0
        %1495 = vmatprep.subr.mxu0 0.0
        %1496 = vmatpush2.msra.mxu0 0.0
        %1497 = vmatprep.subr.mxu0 0.0
        %1498 = vmatpush2.msra.mxu0 0.0
        %1499 = vmatprep.subr.mxu0 0.0
        %1500 = vmatpush2.msra.mxu0 0.0
        %1501 = vmatprep.subr.mxu0 0.0
        %1502 = vmatpush2.msra.mxu0 0.0
        %1503 = vmatprep.subr.mxu0 0.0
        %1504 = vmatpush2.msra.mxu0 0.0
        %1505 = vmatprep.subr.mxu0 0.0
        %1506 = vmatpush2.msra.mxu0 0.0
        %1507 = vmatprep.subr.mxu0 0.0
        %1508 = vmatpush2.msra.mxu0 0.0
        %1509 = vmatprep.subr.mxu0 0.0
        %1510 = vmatpush2.msra.mxu0 0.0
        %1511 = vmatprep.subr.mxu0 0.0
        %1512 = vmatpush2.msra.mxu0 0.0
        %1513 = vmatprep.subr.mxu0 0.0
        %1514 = vmatpush2.msra.mxu0 0.0
        %1515 = vmatprep.subr.mxu0 0.0
        %1516 = vmatpush2.msra.mxu0 0.0
        %1517 = vmatprep.subr.mxu0 0.0
        %1518 = vmatpush2.msra.mxu0 0.0
        %1519 = vmatprep.subr.mxu0 0.0
        %1520 = vmatpush2.msra.mxu0 0.0
        %1521 = vmatprep.subr.mxu0 0.0
        %1522 = vmatpush2.msra.mxu0 0.0
        %1523 = vmatprep.subr.mxu0 0.0
        %1524 = vmatpush2.msra.mxu0 0.0
        %1525 = vmatprep.mubr.f32.mxu0 0.0
        %1526 = vmatmul.mubr.f32.gmra.mxu0 %v1444
        %v1527 = vpop.f32.mrf.mxu0
        %v1528 = vadd.f32 %v1426, %v1527
        %v1529 = vpop.f32.mrf.mxu0
        %v1530 = vadd.f32 %v1426, %v1529
        %1531 = vmatprep.mubr.f32.mxu0 0.0
        %1532 = vmatmul.mubr.f32.gmra.mxu0 %v1447
        %v1533 = vpop.f32.mrf.mxu0
        %v1534 = vadd.f32 %v1431, %v1533
        %v1535 = vpop.f32.mrf.mxu0
        %v1536 = vadd.f32 %v1431, %v1535
        %1537 = vmatprep.mubr.f32.mxu0 0.0
        %1538 = vmatmul.mubr.f32.gmra.mxu0 %v1450
        %v1539 = vpop.f32.mrf.mxu0
        %v1540 = vadd.f32 %v1436, %v1539
        %v1541 = vpop.f32.mrf.mxu0
        %v1542 = vadd.f32 %v1436, %v1541
        %1543 = vmatprep.mubr.f32.mxu0 0.0
        %1544 = vmatmul.mubr.f32.gmra.mxu0 %v1453
        %v1545 = vpop.f32.mrf.mxu0
        %v1546 = vadd.f32 %v1441, %v1545
        %v1547 = vpop.f32.mrf.mxu0
        %v1548 = vadd.f32 %v1441, %v1547
        %1549 = vdwg.mxu0
        %v1550 = vmax.f32 %v1528, 0.0
        %v1551 = vmax.f32 %v1530, 0.0
        %v1552 = vmax.f32 %v1534, 0.0
        %v1553 = vmax.f32 %v1536, 0.0
        %v1554 = vmax.f32 %v1540, 0.0
        %v1555 = vmax.f32 %v1542, 0.0
        %v1556 = vmax.f32 %v1546, 0.0
        %v1557 = vmax.f32 %v1548, 0.0
        %v1558 = vld [vmem:[#allocation2 + $0x1c0] sm:$0x7f]
        %v1559 = vld [vmem:[#allocation2 + $0x1c8] sm:$0x7f]
        %1561 = vset.pattern.permute.xlu0 0
        %1562 = vperm.xlu0 %1561, %v1559
        %v1563 = vpop.permute.xlu0 %1562
        %v1566 = vsel %vm337, %v1558, 0
        %v1569 = vsel %vm350, %v1556, 0
        %v1572 = vsel %vm350, %v1557, 0
        %1574 = vmatprep.subr.mxu0 0.0
        %1575 = vmatpush1.msra.mxu0 0.0
        %1576 = vmatprep.subr.mxu0 0.0
        %1577 = vmatpush1.msra.mxu0 0.0
        %1578 = vmatprep.subr.mxu0 0.0
        %1579 = vmatpush1.msra.mxu0 0.0
        %1580 = vmatprep.subr.mxu0 0.0
        %1581 = vmatpush1.msra.mxu0 0.0
        %1582 = vmatprep.subr.mxu0 0.0
        %1583 = vmatpush1.msra.mxu0 0.0
        %1584 = vmatprep.subr.mxu0 0.0
        %1585 = vmatpush1.msra.mxu0 0.0
        %1586 = vmatprep.subr.mxu0 0.0
        %1587 = vmatpush1.msra.mxu0 0.0
        %1588 = vmatprep.subr.mxu0 0.0
        %1589 = vmatpush1.msra.mxu0 0.0
        %1590 = vmatprep.subr.mxu0 0.0
        %1591 = vmatpush1.msra.mxu0 0.0
        %1592 = vmatprep.subr.mxu0 0.0
        %1593 = vmatpush1.msra.mxu0 0.0
        %1594 = vmatprep.subr.mxu0 0.0
        %1595 = vmatpush1.msra.mxu0 0.0
        %1596 = vmatprep.subr.mxu0 0.0
        %1597 = vmatpush1.msra.mxu0 0.0
        %1598 = vmatprep.subr.mxu0 %v1572
        %1599 = vmatpush1.msra.mxu0 %v1569
        %1600 = vmatprep.subr.mxu0 %v1555
        %1601 = vmatpush1.msra.mxu0 %v1554
        %1602 = vmatprep.subr.mxu0 %v1553
        %1603 = vmatpush1.msra.mxu0 %v1552
        %1604 = vmatprep.subr.mxu0 %v1551
        %1605 = vmatpush1.msra.mxu0 %v1550
        %1606 = vmatprep.subr.mxu0 0.0
        %1607 = vmatpush2.msra.mxu0 0.0
        %1608 = vmatprep.subr.mxu0 0.0
        %1609 = vmatpush2.msra.mxu0 0.0
        %1610 = vmatprep.subr.mxu0 0.0
        %1611 = vmatpush2.msra.mxu0 0.0
        %1612 = vmatprep.subr.mxu0 0.0
        %1613 = vmatpush2.msra.mxu0 0.0
        %1614 = vmatprep.subr.mxu0 0.0
        %1615 = vmatpush2.msra.mxu0 0.0
        %1616 = vmatprep.subr.mxu0 0.0
        %1617 = vmatpush2.msra.mxu0 0.0
        %1618 = vmatprep.subr.mxu0 0.0
        %1619 = vmatpush2.msra.mxu0 0.0
        %1620 = vmatprep.subr.mxu0 0.0
        %1621 = vmatpush2.msra.mxu0 0.0
        %1622 = vmatprep.subr.mxu0 0.0
        %1623 = vmatpush2.msra.mxu0 0.0
        %1624 = vmatprep.subr.mxu0 0.0
        %1625 = vmatpush2.msra.mxu0 0.0
        %1626 = vmatprep.subr.mxu0 0.0
        %1627 = vmatpush2.msra.mxu0 0.0
        %1628 = vmatprep.subr.mxu0 0.0
        %1629 = vmatpush2.msra.mxu0 0.0
        %1630 = vmatprep.subr.mxu0 0.0
        %1631 = vmatpush2.msra.mxu0 0.0
        %1632 = vmatprep.subr.mxu0 0.0
        %1633 = vmatpush2.msra.mxu0 0.0
        %1634 = vmatprep.subr.mxu0 0.0
        %1635 = vmatpush2.msra.mxu0 0.0
        %1636 = vmatprep.subr.mxu0 0.0
        %1637 = vmatpush2.msra.mxu0 0.0
        %1638 = vmatprep.mubr.f32.mxu0 0.0
        %1639 = vmatmul.mubr.f32.gmra.mxu0 %v1566
        %v1640 = vpop.f32.mrf.mxu0
        %v1641 = vadd.f32 %v1563, %v1640
        %v1642 = vpop.f32.mrf.mxu0
        %v1643 = vadd.f32 %v1563, %v1642
        %1644 = vdwg.mxu0
        %v1645 = vtanh.pop %v1641
        %v1646 = vtanh.pop %v1643
        %v1647 = vmul.f32 %v1645, 0.1
        %v1648 = vmul.f32 %v1646, 0.1
        %v1649 = vld [vmem:[#allocation2 + $0x1d0] sm:$0xff]
        %v1650 = vld [vmem:[#allocation2 + $0x1d8] sm:$0xff]
        %1652 = vset.pattern.permute.xlu0 0
        %1653 = vperm.xlu0 %1652, %v1650
        %v1654 = vpop.permute.xlu0 %1653
        %v1657 = vsel %vm337, %v1649, 0
        %1659 = vmatprep.subr.mxu0 0.0
        %1660 = vmatpush1.msra.mxu0 0.0
        %1661 = vmatprep.subr.mxu0 0.0
        %1662 = vmatpush1.msra.mxu0 0.0
        %1663 = vmatprep.subr.mxu0 0.0
        %1664 = vmatpush1.msra.mxu0 0.0
        %1665 = vmatprep.subr.mxu0 0.0
        %1666 = vmatpush1.msra.mxu0 0.0
        %1667 = vmatprep.subr.mxu0 0.0
        %1668 = vmatpush1.msra.mxu0 0.0
        %1669 = vmatprep.subr.mxu0 0.0
        %1670 = vmatpush1.msra.mxu0 0.0
        %1671 = vmatprep.subr.mxu0 0.0
        %1672 = vmatpush1.msra.mxu0 0.0
        %1673 = vmatprep.subr.mxu0 0.0
        %1674 = vmatpush1.msra.mxu0 0.0
        %1675 = vmatprep.subr.mxu0 0.0
        %1676 = vmatpush1.msra.mxu0 0.0
        %1677 = vmatprep.subr.mxu0 0.0
        %1678 = vmatpush1.msra.mxu0 0.0
        %1679 = vmatprep.subr.mxu0 0.0
        %1680 = vmatpush1.msra.mxu0 0.0
        %1681 = vmatprep.subr.mxu0 0.0
        %1682 = vmatpush1.msra.mxu0 0.0
        %1683 = vmatprep.subr.mxu0 %v1572
        %1684 = vmatpush1.msra.mxu0 %v1569
        %1685 = vmatprep.subr.mxu0 %v1555
        %1686 = vmatpush1.msra.mxu0 %v1554
        %1687 = vmatprep.subr.mxu0 %v1553
        %1688 = vmatpush1.msra.mxu0 %v1552
        %1689 = vmatprep.subr.mxu0 %v1551
        %1690 = vmatpush1.msra.mxu0 %v1550
        %1691 = vmatprep.subr.mxu0 0.0
        %1692 = vmatpush2.msra.mxu0 0.0
        %1693 = vmatprep.subr.mxu0 0.0
        %1694 = vmatpush2.msra.mxu0 0.0
        %1695 = vmatprep.subr.mxu0 0.0
        %1696 = vmatpush2.msra.mxu0 0.0
        %1697 = vmatprep.subr.mxu0 0.0
        %1698 = vmatpush2.msra.mxu0 0.0
        %1699 = vmatprep.subr.mxu0 0.0
        %1700 = vmatpush2.msra.mxu0 0.0
        %1701 = vmatprep.subr.mxu0 0.0
        %1702 = vmatpush2.msra.mxu0 0.0
        %1703 = vmatprep.subr.mxu0 0.0
        %1704 = vmatpush2.msra.mxu0 0.0
        %1705 = vmatprep.subr.mxu0 0.0
        %1706 = vmatpush2.msra.mxu0 0.0
        %1707 = vmatprep.subr.mxu0 0.0
        %1708 = vmatpush2.msra.mxu0 0.0
        %1709 = vmatprep.subr.mxu0 0.0
        %1710 = vmatpush2.msra.mxu0 0.0
        %1711 = vmatprep.subr.mxu0 0.0
        %1712 = vmatpush2.msra.mxu0 0.0
        %1713 = vmatprep.subr.mxu0 0.0
        %1714 = vmatpush2.msra.mxu0 0.0
        %1715 = vmatprep.subr.mxu0 0.0
        %1716 = vmatpush2.msra.mxu0 0.0
        %1717 = vmatprep.subr.mxu0 0.0
        %1718 = vmatpush2.msra.mxu0 0.0
        %1719 = vmatprep.subr.mxu0 0.0
        %1720 = vmatpush2.msra.mxu0 0.0
        %1721 = vmatprep.subr.mxu0 0.0
        %1722 = vmatpush2.msra.mxu0 0.0
        %1723 = vmatprep.mubr.f32.mxu0 0.0
        %1724 = vmatmul.mubr.f32.gmra.mxu0 %v1657
        %v1725 = vpop.f32.mrf.mxu0
        %v1726 = vadd.f32 %v1654, %v1725
        %v1727 = vpop.f32.mrf.mxu0
        %v1728 = vadd.f32 %v1654, %v1727
        %1729 = vdwg.mxu0
        %v1731 = vsel %vm1192, %v1647, 0
        %v1734 = vsel %vm1192, %v1648, 0
        %1736 = vmatprep.subr.mxu0 0.0
        %1737 = vmatpush1.msra.mxu0 0.0
        %1738 = vmatprep.subr.mxu0 0.0
        %1739 = vmatpush1.msra.mxu0 0.0
        %1740 = vmatprep.subr.mxu0 0.0
        %1741 = vmatpush1.msra.mxu0 0.0
        %1742 = vmatprep.subr.mxu0 0.0
        %1743 = vmatpush1.msra.mxu0 0.0
        %1744 = vmatprep.subr.mxu0 0.0
        %1745 = vmatpush1.msra.mxu0 0.0
        %1746 = vmatprep.subr.mxu0 0.0
        %1747 = vmatpush1.msra.mxu0 0.0
        %1748 = vmatprep.subr.mxu0 0.0
        %1749 = vmatpush1.msra.mxu0 0.0
        %1750 = vmatprep.subr.mxu0 0.0
        %1751 = vmatpush1.msra.mxu0 0.0
        %1752 = vmatprep.subr.mxu0 0.0
        %1753 = vmatpush1.msra.mxu0 0.0
        %1754 = vmatprep.subr.mxu0 0.0
        %1755 = vmatpush1.msra.mxu0 0.0
        %1756 = vmatprep.subr.mxu0 0.0
        %1757 = vmatpush1.msra.mxu0 0.0
        %1758 = vmatprep.subr.mxu0 0.0
        %1759 = vmatpush1.msra.mxu0 0.0
        %1760 = vmatprep.subr.mxu0 0.0
        %1761 = vmatpush1.msra.mxu0 0.0
        %1762 = vmatprep.subr.mxu0 0.0
        %1763 = vmatpush1.msra.mxu0 0.0
        %1764 = vmatprep.subr.mxu0 0.0
        %1765 = vmatpush1.msra.mxu0 0.0
        %1766 = vmatprep.subr.mxu0 %v1734
        %1767 = vmatpush1.msra.mxu0 %v1731
        %1768 = vmatprep.subr.mxu0 0.0
        %1769 = vmatpush2.msra.mxu0 0.0
        %1770 = vmatprep.subr.mxu0 0.0
        %1771 = vmatpush2.msra.mxu0 0.0
        %1772 = vmatprep.subr.mxu0 0.0
        %1773 = vmatpush2.msra.mxu0 0.0
        %1774 = vmatprep.subr.mxu0 0.0
        %1775 = vmatpush2.msra.mxu0 0.0
        %1776 = vmatprep.subr.mxu0 0.0
        %1777 = vmatpush2.msra.mxu0 0.0
        %1778 = vmatprep.subr.mxu0 0.0
        %1779 = vmatpush2.msra.mxu0 0.0
        %1780 = vmatprep.subr.mxu0 0.0
        %1781 = vmatpush2.msra.mxu0 0.0
        %1782 = vmatprep.subr.mxu0 0.0
        %1783 = vmatpush2.msra.mxu0 0.0
        %1784 = vmatprep.subr.mxu0 0.0
        %1785 = vmatpush2.msra.mxu0 0.0
        %1786 = vmatprep.subr.mxu0 0.0
        %1787 = vmatpush2.msra.mxu0 0.0
        %1788 = vmatprep.subr.mxu0 0.0
        %1789 = vmatpush2.msra.mxu0 0.0
        %1790 = vmatprep.subr.mxu0 0.0
        %1791 = vmatpush2.msra.mxu0 0.0
        %1792 = vmatprep.subr.mxu0 0.0
        %1793 = vmatpush2.msra.mxu0 0.0
        %1794 = vmatprep.subr.mxu0 0.0
        %1795 = vmatpush2.msra.mxu0 0.0
        %1796 = vmatprep.subr.mxu0 0.0
        %1797 = vmatpush2.msra.mxu0 0.0
        %1798 = vmatprep.subr.mxu0 0.0
        %1799 = vmatpush2.msra.mxu0 0.0
        %1800 = vmatprep.mubr.f32.mxu0 0.0
        %1801 = vmatmul.mubr.f32.gmra.mxu0 %v1190
        %v1802 = vpop.f32.mrf.mxu0
        %v1803 = vadd.f32 0.0, %v1802
        %v1804 = vpop.f32.mrf.mxu0
        %v1805 = vadd.f32 0.0, %v1804
        %1806 = vdwg.mxu0
        %v1807 = vmul.f32 %v1803, 1.442695
        %v1808 = vpow.pop %v1807
        %v1809 = vmul.f32 %v1805, 1.442695
        %v1810 = vpow.pop %v1809
        %v1811 = vmul.f32 %v725, %v1808
        %v1812 = vmul.f32 %v727, %v1810
        %v1813 = vadd.f32 %v1811, %v1726
        %v1814 = vadd.f32 %v1812, %v1728
        %v1815 = vld [vmem:[#allocation2 + $0x340] sm:$0xff]
        %v1816 = vld [vmem:[#allocation2 + $0x348] sm:$0xff]
        %v1817 = vld [vmem:[#allocation2 + $0x350] sm:$0xff]
        %v1818 = vld [vmem:[#allocation2 + $0x358] sm:$0xff]
        %v1820 = vsel %vm763, %v1817, 0
        %v1823 = vsel %vm763, %v1818, 0
        %1825 = vmatprep.subr.mxu0 0.0
        %1826 = vmatpush1.msra.mxu0 0.0
        %1827 = vmatprep.subr.mxu0 0.0
        %1828 = vmatpush1.msra.mxu0 0.0
        %1829 = vmatprep.subr.mxu0 0.0
        %1830 = vmatpush1.msra.mxu0 0.0
        %1831 = vmatprep.subr.mxu0 0.0
        %1832 = vmatpush1.msra.mxu0 0.0
        %1833 = vmatprep.subr.mxu0 0.0
        %1834 = vmatpush1.msra.mxu0 0.0
        %1835 = vmatprep.subr.mxu0 0.0
        %1836 = vmatpush1.msra.mxu0 0.0
        %1837 = vmatprep.subr.mxu0 0.0
        %1838 = vmatpush1.msra.mxu0 0.0
        %1839 = vmatprep.subr.mxu0 0.0
        %1840 = vmatpush1.msra.mxu0 0.0
        %1841 = vmatprep.subr.mxu0 0.0
        %1842 = vmatpush1.msra.mxu0 0.0
        %1843 = vmatprep.subr.mxu0 0.0
        %1844 = vmatpush1.msra.mxu0 0.0
        %1845 = vmatprep.subr.mxu0 0.0
        %1846 = vmatpush1.msra.mxu0 0.0
        %1847 = vmatprep.subr.mxu0 0.0
        %1848 = vmatpush1.msra.mxu0 0.0
        %1849 = vmatprep.subr.mxu0 0.0
        %1850 = vmatpush1.msra.mxu0 0.0
        %1851 = vmatprep.subr.mxu0 0.0
        %1852 = vmatpush1.msra.mxu0 0.0
        %1853 = vmatprep.subr.mxu0 0.0
        %1854 = vmatpush1.msra.mxu0 0.0
        %1855 = vmatprep.subr.mxu0 %v1277
        %1856 = vmatpush1.msra.mxu0 %v1276
        %1857 = vmatprep.subr.mxu0 0.0
        %1858 = vmatpush2.msra.mxu0 0.0
        %1859 = vmatprep.subr.mxu0 0.0
        %1860 = vmatpush2.msra.mxu0 0.0
        %1861 = vmatprep.subr.mxu0 0.0
        %1862 = vmatpush2.msra.mxu0 0.0
        %1863 = vmatprep.subr.mxu0 0.0
        %1864 = vmatpush2.msra.mxu0 0.0
        %1865 = vmatprep.subr.mxu0 0.0
        %1866 = vmatpush2.msra.mxu0 0.0
        %1867 = vmatprep.subr.mxu0 0.0
        %1868 = vmatpush2.msra.mxu0 0.0
        %1869 = vmatprep.subr.mxu0 0.0
        %1870 = vmatpush2.msra.mxu0 0.0
        %1871 = vmatprep.subr.mxu0 0.0
        %1872 = vmatpush2.msra.mxu0 0.0
        %1873 = vmatprep.subr.mxu0 0.0
        %1874 = vmatpush2.msra.mxu0 0.0
        %1875 = vmatprep.subr.mxu0 0.0
        %1876 = vmatpush2.msra.mxu0 0.0
        %1877 = vmatprep.subr.mxu0 0.0
        %1878 = vmatpush2.msra.mxu0 0.0
        %1879 = vmatprep.subr.mxu0 0.0
        %1880 = vmatpush2.msra.mxu0 0.0
        %1881 = vmatprep.subr.mxu0 0.0
        %1882 = vmatpush2.msra.mxu0 0.0
        %1883 = vmatprep.subr.mxu0 0.0
        %1884 = vmatpush2.msra.mxu0 0.0
        %1885 = vmatprep.subr.mxu0 0.0
        %1886 = vmatpush2.msra.mxu0 0.0
        %1887 = vmatprep.subr.mxu0 0.0
        %1888 = vmatpush2.msra.mxu0 0.0
        %1889 = vmatprep.mubr.f32.mxu0 0.0
        %1890 = vmatmul.mubr.f32.gmra.mxu0 %v1820
        %v1891 = vpop.f32.mrf.mxu0
        %v1892 = vadd.f32 0.0, %v1891
        %v1893 = vpop.f32.mrf.mxu0
        %v1894 = vadd.f32 0.0, %v1893
        %1895 = vmatprep.mubr.f32.mxu0 0.0
        %1896 = vmatmul.mubr.f32.gmra.mxu0 %v1823
        %v1897 = vpop.f32.mrf.mxu0
        %v1898 = vadd.f32 0.0, %v1897
        %v1899 = vpop.f32.mrf.mxu0
        %v1900 = vadd.f32 0.0, %v1899
        %1901 = vdwg.mxu0
        %v1903 = vsel %vm763, %v1815, 0
        %v1906 = vsel %vm763, %v1816, 0
        %1908 = vmatprep.subr.mxu0 0.0
        %1909 = vmatpush1.msra.mxu0 0.0
        %1910 = vmatprep.subr.mxu0 0.0
        %1911 = vmatpush1.msra.mxu0 0.0
        %1912 = vmatprep.subr.mxu0 0.0
        %1913 = vmatpush1.msra.mxu0 0.0
        %1914 = vmatprep.subr.mxu0 0.0
        %1915 = vmatpush1.msra.mxu0 0.0
        %1916 = vmatprep.subr.mxu0 0.0
        %1917 = vmatpush1.msra.mxu0 0.0
        %1918 = vmatprep.subr.mxu0 0.0
        %1919 = vmatpush1.msra.mxu0 0.0
        %1920 = vmatprep.subr.mxu0 0.0
        %1921 = vmatpush1.msra.mxu0 0.0
        %1922 = vmatprep.subr.mxu0 0.0
        %1923 = vmatpush1.msra.mxu0 0.0
        %1924 = vmatprep.subr.mxu0 0.0
        %1925 = vmatpush1.msra.mxu0 0.0
        %1926 = vmatprep.subr.mxu0 0.0
        %1927 = vmatpush1.msra.mxu0 0.0
        %1928 = vmatprep.subr.mxu0 0.0
        %1929 = vmatpush1.msra.mxu0 0.0
        %1930 = vmatprep.subr.mxu0 0.0
        %1931 = vmatpush1.msra.mxu0 0.0
        %1932 = vmatprep.subr.mxu0 0.0
        %1933 = vmatpush1.msra.mxu0 0.0
        %1934 = vmatprep.subr.mxu0 0.0
        %1935 = vmatpush1.msra.mxu0 0.0
        %1936 = vmatprep.subr.mxu0 0.0
        %1937 = vmatpush1.msra.mxu0 0.0
        %1938 = vmatprep.subr.mxu0 %v1814
        %1939 = vmatpush1.msra.mxu0 %v1813
        %1940 = vmatprep.subr.mxu0 0.0
        %1941 = vmatpush2.msra.mxu0 0.0
        %1942 = vmatprep.subr.mxu0 0.0
        %1943 = vmatpush2.msra.mxu0 0.0
        %1944 = vmatprep.subr.mxu0 0.0
        %1945 = vmatpush2.msra.mxu0 0.0
        %1946 = vmatprep.subr.mxu0 0.0
        %1947 = vmatpush2.msra.mxu0 0.0
        %1948 = vmatprep.subr.mxu0 0.0
        %1949 = vmatpush2.msra.mxu0 0.0
        %1950 = vmatprep.subr.mxu0 0.0
        %1951 = vmatpush2.msra.mxu0 0.0
        %1952 = vmatprep.subr.mxu0 0.0
        %1953 = vmatpush2.msra.mxu0 0.0
        %1954 = vmatprep.subr.mxu0 0.0
        %1955 = vmatpush2.msra.mxu0 0.0
        %1956 = vmatprep.subr.mxu0 0.0
        %1957 = vmatpush2.msra.mxu0 0.0
        %1958 = vmatprep.subr.mxu0 0.0
        %1959 = vmatpush2.msra.mxu0 0.0
        %1960 = vmatprep.subr.mxu0 0.0
        %1961 = vmatpush2.msra.mxu0 0.0
        %1962 = vmatprep.subr.mxu0 0.0
        %1963 = vmatpush2.msra.mxu0 0.0
        %1964 = vmatprep.subr.mxu0 0.0
        %1965 = vmatpush2.msra.mxu0 0.0
        %1966 = vmatprep.subr.mxu0 0.0
        %1967 = vmatpush2.msra.mxu0 0.0
        %1968 = vmatprep.subr.mxu0 0.0
        %1969 = vmatpush2.msra.mxu0 0.0
        %1970 = vmatprep.subr.mxu0 0.0
        %1971 = vmatpush2.msra.mxu0 0.0
        %1972 = vmatprep.mubr.f32.mxu0 0.0
        %1973 = vmatmul.mubr.f32.gmra.mxu0 %v1903
        %v1974 = vpop.f32.mrf.mxu0
        %v1975 = vadd.f32 %v1892, %v1974
        %v1976 = vpop.f32.mrf.mxu0
        %v1977 = vadd.f32 %v1894, %v1976
        %1978 = vmatprep.mubr.f32.mxu0 0.0
        %1979 = vmatmul.mubr.f32.gmra.mxu0 %v1906
        %v1980 = vpop.f32.mrf.mxu0
        %v1981 = vadd.f32 %v1898, %v1980
        %v1982 = vpop.f32.mrf.mxu0
        %v1983 = vadd.f32 %v1900, %v1982
        %1984 = vdwg.mxu0
        %v1985 = vld [vmem:[#allocation2 + $0x1e0] sm:$0xff]
        %v1986 = vld [vmem:[#allocation2 + $0x1e8] sm:$0xff]
        %v1987 = vld [vmem:[#allocation2 + $0x1f0] sm:$0xff]
        %v1988 = vld [vmem:[#allocation2 + $0x1f8] sm:$0x3f]
        %v1989 = vld [vmem:[#allocation2 + $0x200] sm:$0xff]
        %v1990 = vld [vmem:[#allocation2 + $0x208] sm:$0xff]
        %v1991 = vld [vmem:[#allocation2 + $0x210] sm:$0xff]
        %v1992 = vld [vmem:[#allocation2 + $0x218] sm:$0x3f]
        %1994 = vset.pattern.permute.xlu0 0
        %1995 = vperm.xlu0 %1994, %v1989
        %v1996 = vpop.permute.xlu0 %1995
        %1999 = vset.pattern.permute.xlu0 0
        %2000 = vperm.xlu0 %1999, %v1990
        %v2001 = vpop.permute.xlu0 %2000
        %2004 = vset.pattern.permute.xlu0 0
        %2005 = vperm.xlu0 %2004, %v1991
        %v2006 = vpop.permute.xlu0 %2005
        %2009 = vset.pattern.permute.xlu0 0
        %2010 = vperm.xlu0 %2009, %v1992
        %v2011 = vpop.permute.xlu0 %2010
        %v2014 = vsel %vm763, %v1985, 0
        %v2017 = vsel %vm763, %v1986, 0
        %v2020 = vsel %vm763, %v1987, 0
        %v2023 = vsel %vm763, %v1988, 0
        %2025 = vmatprep.subr.mxu0 0.0
        %2026 = vmatpush1.msra.mxu0 0.0
        %2027 = vmatprep.subr.mxu0 0.0
        %2028 = vmatpush1.msra.mxu0 0.0
        %2029 = vmatprep.subr.mxu0 0.0
        %2030 = vmatpush1.msra.mxu0 0.0
        %2031 = vmatprep.subr.mxu0 0.0
        %2032 = vmatpush1.msra.mxu0 0.0
        %2033 = vmatprep.subr.mxu0 0.0
        %2034 = vmatpush1.msra.mxu0 0.0
        %2035 = vmatprep.subr.mxu0 0.0
        %2036 = vmatpush1.msra.mxu0 0.0
        %2037 = vmatprep.subr.mxu0 0.0
        %2038 = vmatpush1.msra.mxu0 0.0
        %2039 = vmatprep.subr.mxu0 0.0
        %2040 = vmatpush1.msra.mxu0 0.0
        %2041 = vmatprep.subr.mxu0 0.0
        %2042 = vmatpush1.msra.mxu0 0.0
        %2043 = vmatprep.subr.mxu0 0.0
        %2044 = vmatpush1.msra.mxu0 0.0
        %2045 = vmatprep.subr.mxu0 0.0
        %2046 = vmatpush1.msra.mxu0 0.0
        %2047 = vmatprep.subr.mxu0 0.0
        %2048 = vmatpush1.msra.mxu0 0.0
        %2049 = vmatprep.subr.mxu0 0.0
        %2050 = vmatpush1.msra.mxu0 0.0
        %2051 = vmatprep.subr.mxu0 0.0
        %2052 = vmatpush1.msra.mxu0 0.0
        %2053 = vmatprep.subr.mxu0 0.0
        %2054 = vmatpush1.msra.mxu0 0.0
        %2055 = vmatprep.subr.mxu0 %v1977
        %2056 = vmatpush1.msra.mxu0 %v1975
        %2057 = vmatprep.subr.mxu0 0.0
        %2058 = vmatpush2.msra.mxu0 0.0
        %2059 = vmatprep.subr.mxu0 0.0
        %2060 = vmatpush2.msra.mxu0 0.0
        %2061 = vmatprep.subr.mxu0 0.0
        %2062 = vmatpush2.msra.mxu0 0.0
        %2063 = vmatprep.subr.mxu0 0.0
        %2064 = vmatpush2.msra.mxu0 0.0
        %2065 = vmatprep.subr.mxu0 0.0
        %2066 = vmatpush2.msra.mxu0 0.0
        %2067 = vmatprep.subr.mxu0 0.0
        %2068 = vmatpush2.msra.mxu0 0.0
        %2069 = vmatprep.subr.mxu0 0.0
        %2070 = vmatpush2.msra.mxu0 0.0
        %2071 = vmatprep.subr.mxu0 0.0
        %2072 = vmatpush2.msra.mxu0 0.0
        %2073 = vmatprep.subr.mxu0 0.0
        %2074 = vmatpush2.msra.mxu0 0.0
        %2075 = vmatprep.subr.mxu0 0.0
        %2076 = vmatpush2.msra.mxu0 0.0
        %2077 = vmatprep.subr.mxu0 0.0
        %2078 = vmatpush2.msra.mxu0 0.0
        %2079 = vmatprep.subr.mxu0 0.0
        %2080 = vmatpush2.msra.mxu0 0.0
        %2081 = vmatprep.subr.mxu0 0.0
        %2082 = vmatpush2.msra.mxu0 0.0
        %2083 = vmatprep.subr.mxu0 0.0
        %2084 = vmatpush2.msra.mxu0 0.0
        %2085 = vmatprep.subr.mxu0 0.0
        %2086 = vmatpush2.msra.mxu0 0.0
        %2087 = vmatprep.subr.mxu0 0.0
        %2088 = vmatpush2.msra.mxu0 0.0
        %2089 = vmatprep.mubr.f32.mxu0 0.0
        %2090 = vmatmul.mubr.f32.gmra.mxu0 %v2014
        %v2091 = vpop.f32.mrf.mxu0
        %v2092 = vadd.f32 %v1996, %v2091
        %v2093 = vpop.f32.mrf.mxu0
        %v2094 = vadd.f32 %v1996, %v2093
        %2095 = vmatprep.mubr.f32.mxu0 0.0
        %2096 = vmatmul.mubr.f32.gmra.mxu0 %v2017
        %v2097 = vpop.f32.mrf.mxu0
        %v2098 = vadd.f32 %v2001, %v2097
        %v2099 = vpop.f32.mrf.mxu0
        %v2100 = vadd.f32 %v2001, %v2099
        %2101 = vmatprep.mubr.f32.mxu0 0.0
        %2102 = vmatmul.mubr.f32.gmra.mxu0 %v2020
        %v2103 = vpop.f32.mrf.mxu0
        %v2104 = vadd.f32 %v2006, %v2103
        %v2105 = vpop.f32.mrf.mxu0
        %v2106 = vadd.f32 %v2006, %v2105
        %2107 = vmatprep.mubr.f32.mxu0 0.0
        %2108 = vmatmul.mubr.f32.gmra.mxu0 %v2023
        %v2109 = vpop.f32.mrf.mxu0
        %v2110 = vadd.f32 %v2011, %v2109
        %v2111 = vpop.f32.mrf.mxu0
        %v2112 = vadd.f32 %v2011, %v2111
        %2113 = vdwg.mxu0
        %v2114 = vmax.f32 %v2092, 0.0
        %v2115 = vmax.f32 %v2094, 0.0
        %v2116 = vmax.f32 %v2098, 0.0
        %v2117 = vmax.f32 %v2100, 0.0
        %v2118 = vmax.f32 %v2104, 0.0
        %v2119 = vmax.f32 %v2106, 0.0
        %v2120 = vmax.f32 %v2110, 0.0
        %v2121 = vmax.f32 %v2112, 0.0
        %v2122 = vld [vmem:[#allocation2 + $0x220] sm:$0xff]
        %v2123 = vld [vmem:[#allocation2 + $0x228] sm:$0xff]
        %v2124 = vld [vmem:[#allocation2 + $0x230] sm:$0xff]
        %v2125 = vld [vmem:[#allocation2 + $0x238] sm:$0x3f]
        %v2126 = vld [vmem:[#allocation2 + $0x240] sm:$0xff]
        %v2127 = vld [vmem:[#allocation2 + $0x248] sm:$0xff]
        %v2128 = vld [vmem:[#allocation2 + $0x250] sm:$0xff]
        %v2129 = vld [vmem:[#allocation2 + $0x258] sm:$0x3f]
        %2131 = vset.pattern.permute.xlu0 0
        %2132 = vperm.xlu0 %2131, %v2126
        %v2133 = vpop.permute.xlu0 %2132
        %2136 = vset.pattern.permute.xlu0 0
        %2137 = vperm.xlu0 %2136, %v2127
        %v2138 = vpop.permute.xlu0 %2137
        %2141 = vset.pattern.permute.xlu0 0
        %2142 = vperm.xlu0 %2141, %v2128
        %v2143 = vpop.permute.xlu0 %2142
        %2146 = vset.pattern.permute.xlu0 0
        %2147 = vperm.xlu0 %2146, %v2129
        %v2148 = vpop.permute.xlu0 %2147
        %v2151 = vsel %vm337, %v2122, 0
        %v2154 = vsel %vm337, %v2123, 0
        %v2157 = vsel %vm337, %v2124, 0
        %v2160 = vsel %vm337, %v2125, 0
        %v2163 = vsel %vm350, %v2120, 0
        %v2166 = vsel %vm350, %v2121, 0
        %2168 = vmatprep.subr.mxu0 0.0
        %2169 = vmatpush1.msra.mxu0 0.0
        %2170 = vmatprep.subr.mxu0 0.0
        %2171 = vmatpush1.msra.mxu0 0.0
        %2172 = vmatprep.subr.mxu0 0.0
        %2173 = vmatpush1.msra.mxu0 0.0
        %2174 = vmatprep.subr.mxu0 0.0
        %2175 = vmatpush1.msra.mxu0 0.0
        %2176 = vmatprep.subr.mxu0 0.0
        %2177 = vmatpush1.msra.mxu0 0.0
        %2178 = vmatprep.subr.mxu0 0.0
        %2179 = vmatpush1.msra.mxu0 0.0
        %2180 = vmatprep.subr.mxu0 0.0
        %2181 = vmatpush1.msra.mxu0 0.0
        %2182 = vmatprep.subr.mxu0 0.0
        %2183 = vmatpush1.msra.mxu0 0.0
        %2184 = vmatprep.subr.mxu0 0.0
        %2185 = vmatpush1.msra.mxu0 0.0
        %2186 = vmatprep.subr.mxu0 0.0
        %2187 = vmatpush1.msra.mxu0 0.0
        %2188 = vmatprep.subr.mxu0 0.0
        %2189 = vmatpush1.msra.mxu0 0.0
        %2190 = vmatprep.subr.mxu0 0.0
        %2191 = vmatpush1.msra.mxu0 0.0
        %2192 = vmatprep.subr.mxu0 %v2166
        %2193 = vmatpush1.msra.mxu0 %v2163
        %2194 = vmatprep.subr.mxu0 %v2119
        %2195 = vmatpush1.msra.mxu0 %v2118
        %2196 = vmatprep.subr.mxu0 %v2117
        %2197 = vmatpush1.msra.mxu0 %v2116
        %2198 = vmatprep.subr.mxu0 %v2115
        %2199 = vmatpush1.msra.mxu0 %v2114
        %2200 = vmatprep.subr.mxu0 0.0
        %2201 = vmatpush2.msra.mxu0 0.0
        %2202 = vmatprep.subr.mxu0 0.0
        %2203 = vmatpush2.msra.mxu0 0.0
        %2204 = vmatprep.subr.mxu0 0.0
        %2205 = vmatpush2.msra.mxu0 0.0
        %2206 = vmatprep.subr.mxu0 0.0
        %2207 = vmatpush2.msra.mxu0 0.0
        %2208 = vmatprep.subr.mxu0 0.0
        %2209 = vmatpush2.msra.mxu0 0.0
        %2210 = vmatprep.subr.mxu0 0.0
        %2211 = vmatpush2.msra.mxu0 0.0
        %2212 = vmatprep.subr.mxu0 0.0
        %2213 = vmatpush2.msra.mxu0 0.0
        %2214 = vmatprep.subr.mxu0 0.0
        %2215 = vmatpush2.msra.mxu0 0.0
        %2216 = vmatprep.subr.mxu0 0.0
        %2217 = vmatpush2.msra.mxu0 0.0
        %2218 = vmatprep.subr.mxu0 0.0
        %2219 = vmatpush2.msra.mxu0 0.0
        %2220 = vmatprep.subr.mxu0 0.0
        %2221 = vmatpush2.msra.mxu0 0.0
        %2222 = vmatprep.subr.mxu0 0.0
        %2223 = vmatpush2.msra.mxu0 0.0
        %2224 = vmatprep.subr.mxu0 0.0
        %2225 = vmatpush2.msra.mxu0 0.0
        %2226 = vmatprep.subr.mxu0 0.0
        %2227 = vmatpush2.msra.mxu0 0.0
        %2228 = vmatprep.subr.mxu0 0.0
        %2229 = vmatpush2.msra.mxu0 0.0
        %2230 = vmatprep.subr.mxu0 0.0
        %2231 = vmatpush2.msra.mxu0 0.0
        %2232 = vmatprep.mubr.f32.mxu0 0.0
        %2233 = vmatmul.mubr.f32.gmra.mxu0 %v2151
        %v2234 = vpop.f32.mrf.mxu0
        %v2235 = vadd.f32 %v2133, %v2234
        %v2236 = vpop.f32.mrf.mxu0
        %v2237 = vadd.f32 %v2133, %v2236
        %2238 = vmatprep.mubr.f32.mxu0 0.0
        %2239 = vmatmul.mubr.f32.gmra.mxu0 %v2154
        %v2240 = vpop.f32.mrf.mxu0
        %v2241 = vadd.f32 %v2138, %v2240
        %v2242 = vpop.f32.mrf.mxu0
        %v2243 = vadd.f32 %v2138, %v2242
        %2244 = vmatprep.mubr.f32.mxu0 0.0
        %2245 = vmatmul.mubr.f32.gmra.mxu0 %v2157
        %v2246 = vpop.f32.mrf.mxu0
        %v2247 = vadd.f32 %v2143, %v2246
        %v2248 = vpop.f32.mrf.mxu0
        %v2249 = vadd.f32 %v2143, %v2248
        %2250 = vmatprep.mubr.f32.mxu0 0.0
        %2251 = vmatmul.mubr.f32.gmra.mxu0 %v2160
        %v2252 = vpop.f32.mrf.mxu0
        %v2253 = vadd.f32 %v2148, %v2252
        %v2254 = vpop.f32.mrf.mxu0
        %v2255 = vadd.f32 %v2148, %v2254
        %2256 = vdwg.mxu0
        %v2257 = vmax.f32 %v2235, 0.0
        %v2258 = vmax.f32 %v2237, 0.0
        %v2259 = vmax.f32 %v2241, 0.0
        %v2260 = vmax.f32 %v2243, 0.0
        %v2261 = vmax.f32 %v2247, 0.0
        %v2262 = vmax.f32 %v2249, 0.0
        %v2263 = vmax.f32 %v2253, 0.0
        %v2264 = vmax.f32 %v2255, 0.0
        %v2265 = vld [vmem:[#allocation2 + $0x260] sm:$0x7f]
        %v2266 = vld [vmem:[#allocation2 + $0x268] sm:$0x7f]
        %2268 = vset.pattern.permute.xlu0 0
        %2269 = vperm.xlu0 %2268, %v2266
        %v2270 = vpop.permute.xlu0 %2269
        %v2273 = vsel %vm337, %v2265, 0
        %v2276 = vsel %vm350, %v2263, 0
        %v2279 = vsel %vm350, %v2264, 0
        %2281 = vmatprep.subr.mxu0 0.0
        %2282 = vmatpush1.msra.mxu0 0.0
        %2283 = vmatprep.subr.mxu0 0.0
        %2284 = vmatpush1.msra.mxu0 0.0
        %2285 = vmatprep.subr.mxu0 0.0
        %2286 = vmatpush1.msra.mxu0 0.0
        %2287 = vmatprep.subr.mxu0 0.0
        %2288 = vmatpush1.msra.mxu0 0.0
        %2289 = vmatprep.subr.mxu0 0.0
        %2290 = vmatpush1.msra.mxu0 0.0
        %2291 = vmatprep.subr.mxu0 0.0
        %2292 = vmatpush1.msra.mxu0 0.0
        %2293 = vmatprep.subr.mxu0 0.0
        %2294 = vmatpush1.msra.mxu0 0.0
        %2295 = vmatprep.subr.mxu0 0.0
        %2296 = vmatpush1.msra.mxu0 0.0
        %2297 = vmatprep.subr.mxu0 0.0
        %2298 = vmatpush1.msra.mxu0 0.0
        %2299 = vmatprep.subr.mxu0 0.0
        %2300 = vmatpush1.msra.mxu0 0.0
        %2301 = vmatprep.subr.mxu0 0.0
        %2302 = vmatpush1.msra.mxu0 0.0
        %2303 = vmatprep.subr.mxu0 0.0
        %2304 = vmatpush1.msra.mxu0 0.0
        %2305 = vmatprep.subr.mxu0 %v2279
        %2306 = vmatpush1.msra.mxu0 %v2276
        %2307 = vmatprep.subr.mxu0 %v2262
        %2308 = vmatpush1.msra.mxu0 %v2261
        %2309 = vmatprep.subr.mxu0 %v2260
        %2310 = vmatpush1.msra.mxu0 %v2259
        %2311 = vmatprep.subr.mxu0 %v2258
        %2312 = vmatpush1.msra.mxu0 %v2257
        %2313 = vmatprep.subr.mxu0 0.0
        %2314 = vmatpush2.msra.mxu0 0.0
        %2315 = vmatprep.subr.mxu0 0.0
        %2316 = vmatpush2.msra.mxu0 0.0
        %2317 = vmatprep.subr.mxu0 0.0
        %2318 = vmatpush2.msra.mxu0 0.0
        %2319 = vmatprep.subr.mxu0 0.0
        %2320 = vmatpush2.msra.mxu0 0.0
        %2321 = vmatprep.subr.mxu0 0.0
        %2322 = vmatpush2.msra.mxu0 0.0
        %2323 = vmatprep.subr.mxu0 0.0
        %2324 = vmatpush2.msra.mxu0 0.0
        %2325 = vmatprep.subr.mxu0 0.0
        %2326 = vmatpush2.msra.mxu0 0.0
        %2327 = vmatprep.subr.mxu0 0.0
        %2328 = vmatpush2.msra.mxu0 0.0
        %2329 = vmatprep.subr.mxu0 0.0
        %2330 = vmatpush2.msra.mxu0 0.0
        %2331 = vmatprep.subr.mxu0 0.0
        %2332 = vmatpush2.msra.mxu0 0.0
        %2333 = vmatprep.subr.mxu0 0.0
        %2334 = vmatpush2.msra.mxu0 0.0
        %2335 = vmatprep.subr.mxu0 0.0
        %2336 = vmatpush2.msra.mxu0 0.0
        %2337 = vmatprep.subr.mxu0 0.0
        %2338 = vmatpush2.msra.mxu0 0.0
        %2339 = vmatprep.subr.mxu0 0.0
        %2340 = vmatpush2.msra.mxu0 0.0
        %2341 = vmatprep.subr.mxu0 0.0
        %2342 = vmatpush2.msra.mxu0 0.0
        %2343 = vmatprep.subr.mxu0 0.0
        %2344 = vmatpush2.msra.mxu0 0.0
        %2345 = vmatprep.mubr.f32.mxu0 0.0
        %2346 = vmatmul.mubr.f32.gmra.mxu0 %v2273
        %v2347 = vpop.f32.mrf.mxu0
        %v2348 = vadd.f32 %v2270, %v2347
        %v2349 = vpop.f32.mrf.mxu0
        %v2350 = vadd.f32 %v2270, %v2349
        %2351 = vdwg.mxu0
        %v2352 = vtanh.pop %v2348
        %v2353 = vtanh.pop %v2350
        %v2354 = vmul.f32 %v2352, 0.1
        %v2355 = vmul.f32 %v2353, 0.1
        %v2356 = vld [vmem:[#allocation2 + $0x270] sm:$0xff]
        %v2357 = vld [vmem:[#allocation2 + $0x278] sm:$0xff]
        %2359 = vset.pattern.permute.xlu0 0
        %2360 = vperm.xlu0 %2359, %v2357
        %v2361 = vpop.permute.xlu0 %2360
        %v2364 = vsel %vm337, %v2356, 0
        %2366 = vmatprep.subr.mxu0 0.0
        %2367 = vmatpush1.msra.mxu0 0.0
        %2368 = vmatprep.subr.mxu0 0.0
        %2369 = vmatpush1.msra.mxu0 0.0
        %2370 = vmatprep.subr.mxu0 0.0
        %2371 = vmatpush1.msra.mxu0 0.0
        %2372 = vmatprep.subr.mxu0 0.0
        %2373 = vmatpush1.msra.mxu0 0.0
        %2374 = vmatprep.subr.mxu0 0.0
        %2375 = vmatpush1.msra.mxu0 0.0
        %2376 = vmatprep.subr.mxu0 0.0
        %2377 = vmatpush1.msra.mxu0 0.0
        %2378 = vmatprep.subr.mxu0 0.0
        %2379 = vmatpush1.msra.mxu0 0.0
        %2380 = vmatprep.subr.mxu0 0.0
        %2381 = vmatpush1.msra.mxu0 0.0
        %2382 = vmatprep.subr.mxu0 0.0
        %2383 = vmatpush1.msra.mxu0 0.0
        %2384 = vmatprep.subr.mxu0 0.0
        %2385 = vmatpush1.msra.mxu0 0.0
        %2386 = vmatprep.subr.mxu0 0.0
        %2387 = vmatpush1.msra.mxu0 0.0
        %2388 = vmatprep.subr.mxu0 0.0
        %2389 = vmatpush1.msra.mxu0 0.0
        %2390 = vmatprep.subr.mxu0 %v2279
        %2391 = vmatpush1.msra.mxu0 %v2276
        %2392 = vmatprep.subr.mxu0 %v2262
        %2393 = vmatpush1.msra.mxu0 %v2261
        %2394 = vmatprep.subr.mxu0 %v2260
        %2395 = vmatpush1.msra.mxu0 %v2259
        %2396 = vmatprep.subr.mxu0 %v2258
        %2397 = vmatpush1.msra.mxu0 %v2257
        %2398 = vmatprep.subr.mxu0 0.0
        %2399 = vmatpush2.msra.mxu0 0.0
        %2400 = vmatprep.subr.mxu0 0.0
        %2401 = vmatpush2.msra.mxu0 0.0
        %2402 = vmatprep.subr.mxu0 0.0
        %2403 = vmatpush2.msra.mxu0 0.0
        %2404 = vmatprep.subr.mxu0 0.0
        %2405 = vmatpush2.msra.mxu0 0.0
        %2406 = vmatprep.subr.mxu0 0.0
        %2407 = vmatpush2.msra.mxu0 0.0
        %2408 = vmatprep.subr.mxu0 0.0
        %2409 = vmatpush2.msra.mxu0 0.0
        %2410 = vmatprep.subr.mxu0 0.0
        %2411 = vmatpush2.msra.mxu0 0.0
        %2412 = vmatprep.subr.mxu0 0.0
        %2413 = vmatpush2.msra.mxu0 0.0
        %2414 = vmatprep.subr.mxu0 0.0
        %2415 = vmatpush2.msra.mxu0 0.0
        %2416 = vmatprep.subr.mxu0 0.0
        %2417 = vmatpush2.msra.mxu0 0.0
        %2418 = vmatprep.subr.mxu0 0.0
        %2419 = vmatpush2.msra.mxu0 0.0
        %2420 = vmatprep.subr.mxu0 0.0
        %2421 = vmatpush2.msra.mxu0 0.0
        %2422 = vmatprep.subr.mxu0 0.0
        %2423 = vmatpush2.msra.mxu0 0.0
        %2424 = vmatprep.subr.mxu0 0.0
        %2425 = vmatpush2.msra.mxu0 0.0
        %2426 = vmatprep.subr.mxu0 0.0
        %2427 = vmatpush2.msra.mxu0 0.0
        %2428 = vmatprep.subr.mxu0 0.0
        %2429 = vmatpush2.msra.mxu0 0.0
        %2430 = vmatprep.mubr.f32.mxu0 0.0
        %2431 = vmatmul.mubr.f32.gmra.mxu0 %v2364
        %v2432 = vpop.f32.mrf.mxu0
        %v2433 = vadd.f32 %v2361, %v2432
        %v2434 = vpop.f32.mrf.mxu0
        %v2435 = vadd.f32 %v2361, %v2434
        %2436 = vdwg.mxu0
        %v2438 = vsel %vm1192, %v2354, 0
        %v2441 = vsel %vm1192, %v2355, 0
        %2443 = vmatprep.subr.mxu0 0.0
        %2444 = vmatpush1.msra.mxu0 0.0
        %2445 = vmatprep.subr.mxu0 0.0
        %2446 = vmatpush1.msra.mxu0 0.0
        %2447 = vmatprep.subr.mxu0 0.0
        %2448 = vmatpush1.msra.mxu0 0.0
        %2449 = vmatprep.subr.mxu0 0.0
        %2450 = vmatpush1.msra.mxu0 0.0
        %2451 = vmatprep.subr.mxu0 0.0
        %2452 = vmatpush1.msra.mxu0 0.0
        %2453 = vmatprep.subr.mxu0 0.0
        %2454 = vmatpush1.msra.mxu0 0.0
        %2455 = vmatprep.subr.mxu0 0.0
        %2456 = vmatpush1.msra.mxu0 0.0
        %2457 = vmatprep.subr.mxu0 0.0
        %2458 = vmatpush1.msra.mxu0 0.0
        %2459 = vmatprep.subr.mxu0 0.0
        %2460 = vmatpush1.msra.mxu0 0.0
        %2461 = vmatprep.subr.mxu0 0.0
        %2462 = vmatpush1.msra.mxu0 0.0
        %2463 = vmatprep.subr.mxu0 0.0
        %2464 = vmatpush1.msra.mxu0 0.0
        %2465 = vmatprep.subr.mxu0 0.0
        %2466 = vmatpush1.msra.mxu0 0.0
        %2467 = vmatprep.subr.mxu0 0.0
        %2468 = vmatpush1.msra.mxu0 0.0
        %2469 = vmatprep.subr.mxu0 0.0
        %2470 = vmatpush1.msra.mxu0 0.0
        %2471 = vmatprep.subr.mxu0 0.0
        %2472 = vmatpush1.msra.mxu0 0.0
        %2473 = vmatprep.subr.mxu0 %v2441
        %2474 = vmatpush1.msra.mxu0 %v2438
        %2475 = vmatprep.subr.mxu0 0.0
        %2476 = vmatpush2.msra.mxu0 0.0
        %2477 = vmatprep.subr.mxu0 0.0
        %2478 = vmatpush2.msra.mxu0 0.0
        %2479 = vmatprep.subr.mxu0 0.0
        %2480 = vmatpush2.msra.mxu0 0.0
        %2481 = vmatprep.subr.mxu0 0.0
        %2482 = vmatpush2.msra.mxu0 0.0
        %2483 = vmatprep.subr.mxu0 0.0
        %2484 = vmatpush2.msra.mxu0 0.0
        %2485 = vmatprep.subr.mxu0 0.0
        %2486 = vmatpush2.msra.mxu0 0.0
        %2487 = vmatprep.subr.mxu0 0.0
        %2488 = vmatpush2.msra.mxu0 0.0
        %2489 = vmatprep.subr.mxu0 0.0
        %2490 = vmatpush2.msra.mxu0 0.0
        %2491 = vmatprep.subr.mxu0 0.0
        %2492 = vmatpush2.msra.mxu0 0.0
        %2493 = vmatprep.subr.mxu0 0.0
        %2494 = vmatpush2.msra.mxu0 0.0
        %2495 = vmatprep.subr.mxu0 0.0
        %2496 = vmatpush2.msra.mxu0 0.0
        %2497 = vmatprep.subr.mxu0 0.0
        %2498 = vmatpush2.msra.mxu0 0.0
        %2499 = vmatprep.subr.mxu0 0.0
        %2500 = vmatpush2.msra.mxu0 0.0
        %2501 = vmatprep.subr.mxu0 0.0
        %2502 = vmatpush2.msra.mxu0 0.0
        %2503 = vmatprep.subr.mxu0 0.0
        %2504 = vmatpush2.msra.mxu0 0.0
        %2505 = vmatprep.subr.mxu0 0.0
        %2506 = vmatpush2.msra.mxu0 0.0
        %2507 = vmatprep.mubr.f32.mxu0 0.0
        %2508 = vmatmul.mubr.f32.gmra.mxu0 %v1190
        %v2509 = vpop.f32.mrf.mxu0
        %v2510 = vadd.f32 0.0, %v2509
        %v2511 = vpop.f32.mrf.mxu0
        %v2512 = vadd.f32 0.0, %v2511
        %2513 = vdwg.mxu0
        %v2514 = vmul.f32 %v2510, 1.442695
        %v2515 = vpow.pop %v2514
        %v2516 = vmul.f32 %v2512, 1.442695
        %v2517 = vpow.pop %v2516
        %v2518 = vmul.f32 %v1981, %v2515
        %v2519 = vmul.f32 %v1983, %v2517
        %v2520 = vadd.f32 %v2518, %v2433
        %v2521 = vadd.f32 %v2519, %v2435
        %v2522 = vld [vmem:[#allocation2 + $0x280] sm:$0xff]
        %v2523 = vld [vmem:[#allocation2 + $0x288] sm:$0xff]
        %v2524 = vld [vmem:[#allocation2 + $0x290] sm:$0xff]
        %v2525 = vld [vmem:[#allocation2 + $0x298] sm:$0x3f]
        %v2526 = vld [vmem:[#allocation2 + $0x2a0] sm:$0xff]
        %v2527 = vld [vmem:[#allocation2 + $0x2a8] sm:$0xff]
        %v2528 = vld [vmem:[#allocation2 + $0x2b0] sm:$0xff]
        %v2529 = vld [vmem:[#allocation2 + $0x2b8] sm:$0x3f]
        %2531 = vset.pattern.permute.xlu0 0
        %2532 = vperm.xlu0 %2531, %v2526
        %v2533 = vpop.permute.xlu0 %2532
        %2536 = vset.pattern.permute.xlu0 0
        %2537 = vperm.xlu0 %2536, %v2527
        %v2538 = vpop.permute.xlu0 %2537
        %2541 = vset.pattern.permute.xlu0 0
        %2542 = vperm.xlu0 %2541, %v2528
        %v2543 = vpop.permute.xlu0 %2542
        %2546 = vset.pattern.permute.xlu0 0
        %2547 = vperm.xlu0 %2546, %v2529
        %v2548 = vpop.permute.xlu0 %2547
        %v2551 = vsel %vm763, %v2522, 0
        %v2554 = vsel %vm763, %v2523, 0
        %v2557 = vsel %vm763, %v2524, 0
        %v2560 = vsel %vm763, %v2525, 0
        %2562 = vmatprep.subr.mxu0 0.0
        %2563 = vmatpush1.msra.mxu0 0.0
        %2564 = vmatprep.subr.mxu0 0.0
        %2565 = vmatpush1.msra.mxu0 0.0
        %2566 = vmatprep.subr.mxu0 0.0
        %2567 = vmatpush1.msra.mxu0 0.0
        %2568 = vmatprep.subr.mxu0 0.0
        %2569 = vmatpush1.msra.mxu0 0.0
        %2570 = vmatprep.subr.mxu0 0.0
        %2571 = vmatpush1.msra.mxu0 0.0
        %2572 = vmatprep.subr.mxu0 0.0
        %2573 = vmatpush1.msra.mxu0 0.0
        %2574 = vmatprep.subr.mxu0 0.0
        %2575 = vmatpush1.msra.mxu0 0.0
        %2576 = vmatprep.subr.mxu0 0.0
        %2577 = vmatpush1.msra.mxu0 0.0
        %2578 = vmatprep.subr.mxu0 0.0
        %2579 = vmatpush1.msra.mxu0 0.0
        %2580 = vmatprep.subr.mxu0 0.0
        %2581 = vmatpush1.msra.mxu0 0.0
        %2582 = vmatprep.subr.mxu0 0.0
        %2583 = vmatpush1.msra.mxu0 0.0
        %2584 = vmatprep.subr.mxu0 0.0
        %2585 = vmatpush1.msra.mxu0 0.0
        %2586 = vmatprep.subr.mxu0 0.0
        %2587 = vmatpush1.msra.mxu0 0.0
        %2588 = vmatprep.subr.mxu0 0.0
        %2589 = vmatpush1.msra.mxu0 0.0
        %2590 = vmatprep.subr.mxu0 0.0
        %2591 = vmatpush1.msra.mxu0 0.0
        %2592 = vmatprep.subr.mxu0 %v2521
        %2593 = vmatpush1.msra.mxu0 %v2520
        %2594 = vmatprep.subr.mxu0 0.0
        %2595 = vmatpush2.msra.mxu0 0.0
        %2596 = vmatprep.subr.mxu0 0.0
        %2597 = vmatpush2.msra.mxu0 0.0
        %2598 = vmatprep.subr.mxu0 0.0
        %2599 = vmatpush2.msra.mxu0 0.0
        %2600 = vmatprep.subr.mxu0 0.0
        %2601 = vmatpush2.msra.mxu0 0.0
        %2602 = vmatprep.subr.mxu0 0.0
        %2603 = vmatpush2.msra.mxu0 0.0
        %2604 = vmatprep.subr.mxu0 0.0
        %2605 = vmatpush2.msra.mxu0 0.0
        %2606 = vmatprep.subr.mxu0 0.0
        %2607 = vmatpush2.msra.mxu0 0.0
        %2608 = vmatprep.subr.mxu0 0.0
        %2609 = vmatpush2.msra.mxu0 0.0
        %2610 = vmatprep.subr.mxu0 0.0
        %2611 = vmatpush2.msra.mxu0 0.0
        %2612 = vmatprep.subr.mxu0 0.0
        %2613 = vmatpush2.msra.mxu0 0.0
        %2614 = vmatprep.subr.mxu0 0.0
        %2615 = vmatpush2.msra.mxu0 0.0
        %2616 = vmatprep.subr.mxu0 0.0
        %2617 = vmatpush2.msra.mxu0 0.0
        %2618 = vmatprep.subr.mxu0 0.0
        %2619 = vmatpush2.msra.mxu0 0.0
        %2620 = vmatprep.subr.mxu0 0.0
        %2621 = vmatpush2.msra.mxu0 0.0
        %2622 = vmatprep.subr.mxu0 0.0
        %2623 = vmatpush2.msra.mxu0 0.0
        %2624 = vmatprep.subr.mxu0 0.0
        %2625 = vmatpush2.msra.mxu0 0.0
        %2626 = vmatprep.mubr.f32.mxu0 0.0
        %2627 = vmatmul.mubr.f32.gmra.mxu0 %v2551
        %v2628 = vpop.f32.mrf.mxu0
        %v2629 = vadd.f32 %v2533, %v2628
        %v2630 = vpop.f32.mrf.mxu0
        %v2631 = vadd.f32 %v2533, %v2630
        %2632 = vmatprep.mubr.f32.mxu0 0.0
        %2633 = vmatmul.mubr.f32.gmra.mxu0 %v2554
        %v2634 = vpop.f32.mrf.mxu0
        %v2635 = vadd.f32 %v2538, %v2634
        %v2636 = vpop.f32.mrf.mxu0
        %v2637 = vadd.f32 %v2538, %v2636
        %2638 = vmatprep.mubr.f32.mxu0 0.0
        %2639 = vmatmul.mubr.f32.gmra.mxu0 %v2557
        %v2640 = vpop.f32.mrf.mxu0
        %v2641 = vadd.f32 %v2543, %v2640
        %v2642 = vpop.f32.mrf.mxu0
        %v2643 = vadd.f32 %v2543, %v2642
        %2644 = vmatprep.mubr.f32.mxu0 0.0
        %2645 = vmatmul.mubr.f32.gmra.mxu0 %v2560
        %v2646 = vpop.f32.mrf.mxu0
        %v2647 = vadd.f32 %v2548, %v2646
        %v2648 = vpop.f32.mrf.mxu0
        %v2649 = vadd.f32 %v2548, %v2648
        %2650 = vdwg.mxu0
        %v2651 = vmax.f32 %v2629, 0.0
        %v2652 = vmax.f32 %v2631, 0.0
        %v2653 = vmax.f32 %v2635, 0.0
        %v2654 = vmax.f32 %v2637, 0.0
        %v2655 = vmax.f32 %v2641, 0.0
        %v2656 = vmax.f32 %v2643, 0.0
        %v2657 = vmax.f32 %v2647, 0.0
        %v2658 = vmax.f32 %v2649, 0.0
        %v2659 = vld [vmem:[#allocation2 + $0x2c0] sm:$0xff]
        %v2660 = vld [vmem:[#allocation2 + $0x2c8] sm:$0xff]
        %v2661 = vld [vmem:[#allocation2 + $0x2d0] sm:$0xff]
        %v2662 = vld [vmem:[#allocation2 + $0x2d8] sm:$0x3f]
        %v2663 = vld [vmem:[#allocation2 + $0x2e0] sm:$0xff]
        %v2664 = vld [vmem:[#allocation2 + $0x2e8] sm:$0xff]
        %v2665 = vld [vmem:[#allocation2 + $0x2f0] sm:$0xff]
        %v2666 = vld [vmem:[#allocation2 + $0x2f8] sm:$0x3f]
        %2668 = vset.pattern.permute.xlu0 0
        %2669 = vperm.xlu0 %2668, %v2663
        %v2670 = vpop.permute.xlu0 %2669
        %2673 = vset.pattern.permute.xlu0 0
        %2674 = vperm.xlu0 %2673, %v2664
        %v2675 = vpop.permute.xlu0 %2674
        %2678 = vset.pattern.permute.xlu0 0
        %2679 = vperm.xlu0 %2678, %v2665
        %v2680 = vpop.permute.xlu0 %2679
        %2683 = vset.pattern.permute.xlu0 0
        %2684 = vperm.xlu0 %2683, %v2666
        %v2685 = vpop.permute.xlu0 %2684
        %v2688 = vsel %vm337, %v2659, 0
        %v2691 = vsel %vm337, %v2660, 0
        %v2694 = vsel %vm337, %v2661, 0
        %v2697 = vsel %vm337, %v2662, 0
        %v2700 = vsel %vm350, %v2657, 0
        %v2703 = vsel %vm350, %v2658, 0
        %2705 = vmatprep.subr.mxu0 0.0
        %2706 = vmatpush1.msra.mxu0 0.0
        %2707 = vmatprep.subr.mxu0 0.0
        %2708 = vmatpush1.msra.mxu0 0.0
        %2709 = vmatprep.subr.mxu0 0.0
        %2710 = vmatpush1.msra.mxu0 0.0
        %2711 = vmatprep.subr.mxu0 0.0
        %2712 = vmatpush1.msra.mxu0 0.0
        %2713 = vmatprep.subr.mxu0 0.0
        %2714 = vmatpush1.msra.mxu0 0.0
        %2715 = vmatprep.subr.mxu0 0.0
        %2716 = vmatpush1.msra.mxu0 0.0
        %2717 = vmatprep.subr.mxu0 0.0
        %2718 = vmatpush1.msra.mxu0 0.0
        %2719 = vmatprep.subr.mxu0 0.0
        %2720 = vmatpush1.msra.mxu0 0.0
        %2721 = vmatprep.subr.mxu0 0.0
        %2722 = vmatpush1.msra.mxu0 0.0
        %2723 = vmatprep.subr.mxu0 0.0
        %2724 = vmatpush1.msra.mxu0 0.0
        %2725 = vmatprep.subr.mxu0 0.0
        %2726 = vmatpush1.msra.mxu0 0.0
        %2727 = vmatprep.subr.mxu0 0.0
        %2728 = vmatpush1.msra.mxu0 0.0
        %2729 = vmatprep.subr.mxu0 %v2703
        %2730 = vmatpush1.msra.mxu0 %v2700
        %2731 = vmatprep.subr.mxu0 %v2656
        %2732 = vmatpush1.msra.mxu0 %v2655
        %2733 = vmatprep.subr.mxu0 %v2654
        %2734 = vmatpush1.msra.mxu0 %v2653
        %2735 = vmatprep.subr.mxu0 %v2652
        %2736 = vmatpush1.msra.mxu0 %v2651
        %2737 = vmatprep.subr.mxu0 0.0
        %2738 = vmatpush2.msra.mxu0 0.0
        %2739 = vmatprep.subr.mxu0 0.0
        %2740 = vmatpush2.msra.mxu0 0.0
        %2741 = vmatprep.subr.mxu0 0.0
        %2742 = vmatpush2.msra.mxu0 0.0
        %2743 = vmatprep.subr.mxu0 0.0
        %2744 = vmatpush2.msra.mxu0 0.0
        %2745 = vmatprep.subr.mxu0 0.0
        %2746 = vmatpush2.msra.mxu0 0.0
        %2747 = vmatprep.subr.mxu0 0.0
        %2748 = vmatpush2.msra.mxu0 0.0
        %2749 = vmatprep.subr.mxu0 0.0
        %2750 = vmatpush2.msra.mxu0 0.0
        %2751 = vmatprep.subr.mxu0 0.0
        %2752 = vmatpush2.msra.mxu0 0.0
        %2753 = vmatprep.subr.mxu0 0.0
        %2754 = vmatpush2.msra.mxu0 0.0
        %2755 = vmatprep.subr.mxu0 0.0
        %2756 = vmatpush2.msra.mxu0 0.0
        %2757 = vmatprep.subr.mxu0 0.0
        %2758 = vmatpush2.msra.mxu0 0.0
        %2759 = vmatprep.subr.mxu0 0.0
        %2760 = vmatpush2.msra.mxu0 0.0
        %2761 = vmatprep.subr.mxu0 0.0
        %2762 = vmatpush2.msra.mxu0 0.0
        %2763 = vmatprep.subr.mxu0 0.0
        %2764 = vmatpush2.msra.mxu0 0.0
        %2765 = vmatprep.subr.mxu0 0.0
        %2766 = vmatpush2.msra.mxu0 0.0
        %2767 = vmatprep.subr.mxu0 0.0
        %2768 = vmatpush2.msra.mxu0 0.0
        %2769 = vmatprep.mubr.f32.mxu0 0.0
        %2770 = vmatmul.mubr.f32.gmra.mxu0 %v2688
        %v2771 = vpop.f32.mrf.mxu0
        %v2772 = vadd.f32 %v2670, %v2771
        %v2773 = vpop.f32.mrf.mxu0
        %v2774 = vadd.f32 %v2670, %v2773
        %2775 = vmatprep.mubr.f32.mxu0 0.0
        %2776 = vmatmul.mubr.f32.gmra.mxu0 %v2691
        %v2777 = vpop.f32.mrf.mxu0
        %v2778 = vadd.f32 %v2675, %v2777
        %v2779 = vpop.f32.mrf.mxu0
        %v2780 = vadd.f32 %v2675, %v2779
        %2781 = vmatprep.mubr.f32.mxu0 0.0
        %2782 = vmatmul.mubr.f32.gmra.mxu0 %v2694
        %v2783 = vpop.f32.mrf.mxu0
        %v2784 = vadd.f32 %v2680, %v2783
        %v2785 = vpop.f32.mrf.mxu0
        %v2786 = vadd.f32 %v2680, %v2785
        %2787 = vmatprep.mubr.f32.mxu0 0.0
        %2788 = vmatmul.mubr.f32.gmra.mxu0 %v2697
        %v2789 = vpop.f32.mrf.mxu0
        %v2790 = vadd.f32 %v2685, %v2789
        %v2791 = vpop.f32.mrf.mxu0
        %v2792 = vadd.f32 %v2685, %v2791
        %2793 = vdwg.mxu0
        %v2794 = vmax.f32 %v2772, 0.0
        %v2795 = vmax.f32 %v2774, 0.0
        %v2796 = vmax.f32 %v2778, 0.0
        %v2797 = vmax.f32 %v2780, 0.0
        %v2798 = vmax.f32 %v2784, 0.0
        %v2799 = vmax.f32 %v2786, 0.0
        %v2800 = vmax.f32 %v2790, 0.0
        %v2801 = vmax.f32 %v2792, 0.0
        %v2802 = vld [vmem:[#allocation2 + $0x300] sm:$0x7f]
        %v2803 = vld [vmem:[#allocation2 + $0x308] sm:$0x7f]
        %2805 = vset.pattern.permute.xlu0 0
        %2806 = vperm.xlu0 %2805, %v2803
        %v2807 = vpop.permute.xlu0 %2806
        %v2810 = vsel %vm337, %v2802, 0
        %v2813 = vsel %vm350, %v2800, 0
        %v2816 = vsel %vm350, %v2801, 0
        %2818 = vmatprep.subr.mxu0 0.0
        %2819 = vmatpush1.msra.mxu0 0.0
        %2820 = vmatprep.subr.mxu0 0.0
        %2821 = vmatpush1.msra.mxu0 0.0
        %2822 = vmatprep.subr.mxu0 0.0
        %2823 = vmatpush1.msra.mxu0 0.0
        %2824 = vmatprep.subr.mxu0 0.0
        %2825 = vmatpush1.msra.mxu0 0.0
        %2826 = vmatprep.subr.mxu0 0.0
        %2827 = vmatpush1.msra.mxu0 0.0
        %2828 = vmatprep.subr.mxu0 0.0
        %2829 = vmatpush1.msra.mxu0 0.0
        %2830 = vmatprep.subr.mxu0 0.0
        %2831 = vmatpush1.msra.mxu0 0.0
        %2832 = vmatprep.subr.mxu0 0.0
        %2833 = vmatpush1.msra.mxu0 0.0
        %2834 = vmatprep.subr.mxu0 0.0
        %2835 = vmatpush1.msra.mxu0 0.0
        %2836 = vmatprep.subr.mxu0 0.0
        %2837 = vmatpush1.msra.mxu0 0.0
        %2838 = vmatprep.subr.mxu0 0.0
        %2839 = vmatpush1.msra.mxu0 0.0
        %2840 = vmatprep.subr.mxu0 0.0
        %2841 = vmatpush1.msra.mxu0 0.0
        %2842 = vmatprep.subr.mxu0 %v2816
        %2843 = vmatpush1.msra.mxu0 %v2813
        %2844 = vmatprep.subr.mxu0 %v2799
        %2845 = vmatpush1.msra.mxu0 %v2798
        %2846 = vmatprep.subr.mxu0 %v2797
        %2847 = vmatpush1.msra.mxu0 %v2796
        %2848 = vmatprep.subr.mxu0 %v2795
        %2849 = vmatpush1.msra.mxu0 %v2794
        %2850 = vmatprep.subr.mxu0 0.0
        %2851 = vmatpush2.msra.mxu0 0.0
        %2852 = vmatprep.subr.mxu0 0.0
        %2853 = vmatpush2.msra.mxu0 0.0
        %2854 = vmatprep.subr.mxu0 0.0
        %2855 = vmatpush2.msra.mxu0 0.0
        %2856 = vmatprep.subr.mxu0 0.0
        %2857 = vmatpush2.msra.mxu0 0.0
        %2858 = vmatprep.subr.mxu0 0.0
        %2859 = vmatpush2.msra.mxu0 0.0
        %2860 = vmatprep.subr.mxu0 0.0
        %2861 = vmatpush2.msra.mxu0 0.0
        %2862 = vmatprep.subr.mxu0 0.0
        %2863 = vmatpush2.msra.mxu0 0.0
        %2864 = vmatprep.subr.mxu0 0.0
        %2865 = vmatpush2.msra.mxu0 0.0
        %2866 = vmatprep.subr.mxu0 0.0
        %2867 = vmatpush2.msra.mxu0 0.0
        %2868 = vmatprep.subr.mxu0 0.0
        %2869 = vmatpush2.msra.mxu0 0.0
        %2870 = vmatprep.subr.mxu0 0.0
        %2871 = vmatpush2.msra.mxu0 0.0
        %2872 = vmatprep.subr.mxu0 0.0
        %2873 = vmatpush2.msra.mxu0 0.0
        %2874 = vmatprep.subr.mxu0 0.0
        %2875 = vmatpush2.msra.mxu0 0.0
        %2876 = vmatprep.subr.mxu0 0.0
        %2877 = vmatpush2.msra.mxu0 0.0
        %2878 = vmatprep.subr.mxu0 0.0
        %2879 = vmatpush2.msra.mxu0 0.0
        %2880 = vmatprep.subr.mxu0 0.0
        %2881 = vmatpush2.msra.mxu0 0.0
        %2882 = vmatprep.mubr.f32.mxu0 0.0
        %2883 = vmatmul.mubr.f32.gmra.mxu0 %v2810
        %v2884 = vpop.f32.mrf.mxu0
        %v2885 = vadd.f32 %v2807, %v2884
        %v2886 = vpop.f32.mrf.mxu0
        %v2887 = vadd.f32 %v2807, %v2886
        %2888 = vdwg.mxu0
        %v2889 = vtanh.pop %v2885
        %v2890 = vtanh.pop %v2887
        %v2891 = vmul.f32 %v2889, 0.1
        %v2892 = vmul.f32 %v2890, 0.1
        %v2893 = vld [vmem:[#allocation2 + $0x310] sm:$0xff]
        %v2894 = vld [vmem:[#allocation2 + $0x318] sm:$0xff]
        %2896 = vset.pattern.permute.xlu0 0
        %2897 = vperm.xlu0 %2896, %v2894
        %v2898 = vpop.permute.xlu0 %2897
        %v2901 = vsel %vm337, %v2893, 0
        %2903 = vmatprep.subr.mxu0 0.0
        %2904 = vmatpush1.msra.mxu0 0.0
        %2905 = vmatprep.subr.mxu0 0.0
        %2906 = vmatpush1.msra.mxu0 0.0
        %2907 = vmatprep.subr.mxu0 0.0
        %2908 = vmatpush1.msra.mxu0 0.0
        %2909 = vmatprep.subr.mxu0 0.0
        %2910 = vmatpush1.msra.mxu0 0.0
        %2911 = vmatprep.subr.mxu0 0.0
        %2912 = vmatpush1.msra.mxu0 0.0
        %2913 = vmatprep.subr.mxu0 0.0
        %2914 = vmatpush1.msra.mxu0 0.0
        %2915 = vmatprep.subr.mxu0 0.0
        %2916 = vmatpush1.msra.mxu0 0.0
        %2917 = vmatprep.subr.mxu0 0.0
        %2918 = vmatpush1.msra.mxu0 0.0
        %2919 = vmatprep.subr.mxu0 0.0
        %2920 = vmatpush1.msra.mxu0 0.0
        %2921 = vmatprep.subr.mxu0 0.0
        %2922 = vmatpush1.msra.mxu0 0.0
        %2923 = vmatprep.subr.mxu0 0.0
        %2924 = vmatpush1.msra.mxu0 0.0
        %2925 = vmatprep.subr.mxu0 0.0
        %2926 = vmatpush1.msra.mxu0 0.0
        %2927 = vmatprep.subr.mxu0 %v2816
        %2928 = vmatpush1.msra.mxu0 %v2813
        %2929 = vmatprep.subr.mxu0 %v2799
        %2930 = vmatpush1.msra.mxu0 %v2798
        %2931 = vmatprep.subr.mxu0 %v2797
        %2932 = vmatpush1.msra.mxu0 %v2796
        %2933 = vmatprep.subr.mxu0 %v2795
        %2934 = vmatpush1.msra.mxu0 %v2794
        %2935 = vmatprep.subr.mxu0 0.0
        %2936 = vmatpush2.msra.mxu0 0.0
        %2937 = vmatprep.subr.mxu0 0.0
        %2938 = vmatpush2.msra.mxu0 0.0
        %2939 = vmatprep.subr.mxu0 0.0
        %2940 = vmatpush2.msra.mxu0 0.0
        %2941 = vmatprep.subr.mxu0 0.0
        %2942 = vmatpush2.msra.mxu0 0.0
        %2943 = vmatprep.subr.mxu0 0.0
        %2944 = vmatpush2.msra.mxu0 0.0
        %2945 = vmatprep.subr.mxu0 0.0
        %2946 = vmatpush2.msra.mxu0 0.0
        %2947 = vmatprep.subr.mxu0 0.0
        %2948 = vmatpush2.msra.mxu0 0.0
        %2949 = vmatprep.subr.mxu0 0.0
        %2950 = vmatpush2.msra.mxu0 0.0
        %2951 = vmatprep.subr.mxu0 0.0
        %2952 = vmatpush2.msra.mxu0 0.0
        %2953 = vmatprep.subr.mxu0 0.0
        %2954 = vmatpush2.msra.mxu0 0.0
        %2955 = vmatprep.subr.mxu0 0.0
        %2956 = vmatpush2.msra.mxu0 0.0
        %2957 = vmatprep.subr.mxu0 0.0
        %2958 = vmatpush2.msra.mxu0 0.0
        %2959 = vmatprep.subr.mxu0 0.0
        %2960 = vmatpush2.msra.mxu0 0.0
        %2961 = vmatprep.subr.mxu0 0.0
        %2962 = vmatpush2.msra.mxu0 0.0
        %2963 = vmatprep.subr.mxu0 0.0
        %2964 = vmatpush2.msra.mxu0 0.0
        %2965 = vmatprep.subr.mxu0 0.0
        %2966 = vmatpush2.msra.mxu0 0.0
        %2967 = vmatprep.mubr.f32.mxu0 0.0
        %2968 = vmatmul.mubr.f32.gmra.mxu0 %v2901
        %v2969 = vpop.f32.mrf.mxu0
        %v2970 = vadd.f32 %v2898, %v2969
        %v2971 = vpop.f32.mrf.mxu0
        %v2972 = vadd.f32 %v2898, %v2971
        %2973 = vdwg.mxu0
        %v2975 = vsel %vm1192, %v2891, 0
        %v2978 = vsel %vm1192, %v2892, 0
        %2980 = vmatprep.subr.mxu0 0.0
        %2981 = vmatpush1.msra.mxu0 0.0
        %2982 = vmatprep.subr.mxu0 0.0
        %2983 = vmatpush1.msra.mxu0 0.0
        %2984 = vmatprep.subr.mxu0 0.0
        %2985 = vmatpush1.msra.mxu0 0.0
        %2986 = vmatprep.subr.mxu0 0.0
        %2987 = vmatpush1.msra.mxu0 0.0
        %2988 = vmatprep.subr.mxu0 0.0
        %2989 = vmatpush1.msra.mxu0 0.0
        %2990 = vmatprep.subr.mxu0 0.0
        %2991 = vmatpush1.msra.mxu0 0.0
        %2992 = vmatprep.subr.mxu0 0.0
        %2993 = vmatpush1.msra.mxu0 0.0
        %2994 = vmatprep.subr.mxu0 0.0
        %2995 = vmatpush1.msra.mxu0 0.0
        %2996 = vmatprep.subr.mxu0 0.0
        %2997 = vmatpush1.msra.mxu0 0.0
        %2998 = vmatprep.subr.mxu0 0.0
        %2999 = vmatpush1.msra.mxu0 0.0
        %3000 = vmatprep.subr.mxu0 0.0
        %3001 = vmatpush1.msra.mxu0 0.0
        %3002 = vmatprep.subr.mxu0 0.0
        %3003 = vmatpush1.msra.mxu0 0.0
        %3004 = vmatprep.subr.mxu0 0.0
        %3005 = vmatpush1.msra.mxu0 0.0
        %3006 = vmatprep.subr.mxu0 0.0
        %3007 = vmatpush1.msra.mxu0 0.0
        %3008 = vmatprep.subr.mxu0 0.0
        %3009 = vmatpush1.msra.mxu0 0.0
        %3010 = vmatprep.subr.mxu0 %v2978
        %3011 = vmatpush1.msra.mxu0 %v2975
        %3012 = vmatprep.subr.mxu0 0.0
        %3013 = vmatpush2.msra.mxu0 0.0
        %3014 = vmatprep.subr.mxu0 0.0
        %3015 = vmatpush2.msra.mxu0 0.0
        %3016 = vmatprep.subr.mxu0 0.0
        %3017 = vmatpush2.msra.mxu0 0.0
        %3018 = vmatprep.subr.mxu0 0.0
        %3019 = vmatpush2.msra.mxu0 0.0
        %3020 = vmatprep.subr.mxu0 0.0
        %3021 = vmatpush2.msra.mxu0 0.0
        %3022 = vmatprep.subr.mxu0 0.0
        %3023 = vmatpush2.msra.mxu0 0.0
        %3024 = vmatprep.subr.mxu0 0.0
        %3025 = vmatpush2.msra.mxu0 0.0
        %3026 = vmatprep.subr.mxu0 0.0
        %3027 = vmatpush2.msra.mxu0 0.0
        %3028 = vmatprep.subr.mxu0 0.0
        %3029 = vmatpush2.msra.mxu0 0.0
        %3030 = vmatprep.subr.mxu0 0.0
        %3031 = vmatpush2.msra.mxu0 0.0
        %3032 = vmatprep.subr.mxu0 0.0
        %3033 = vmatpush2.msra.mxu0 0.0
        %3034 = vmatprep.subr.mxu0 0.0
        %3035 = vmatpush2.msra.mxu0 0.0
        %3036 = vmatprep.subr.mxu0 0.0
        %3037 = vmatpush2.msra.mxu0 0.0
        %3038 = vmatprep.subr.mxu0 0.0
        %3039 = vmatpush2.msra.mxu0 0.0
        %3040 = vmatprep.subr.mxu0 0.0
        %3041 = vmatpush2.msra.mxu0 0.0
        %3042 = vmatprep.subr.mxu0 0.0
        %3043 = vmatpush2.msra.mxu0 0.0
        %3044 = vmatprep.mubr.f32.mxu0 0.0
        %3045 = vmatmul.mubr.f32.gmra.mxu0 %v1190
        %v3046 = vpop.f32.mrf.mxu0
        %v3047 = vadd.f32 0.0, %v3046
        %v3048 = vpop.f32.mrf.mxu0
        %v3049 = vadd.f32 0.0, %v3048
        %3050 = vdwg.mxu0
        %v3051 = vmul.f32 %v3047, 1.442695
        %v3052 = vpow.pop %v3051
        %v3053 = vmul.f32 %v3049, 1.442695
        %v3054 = vpow.pop %v3053
        %v3055 = vmul.f32 %v1975, %v3052
        %v3056 = vmul.f32 %v1977, %v3054
        %v3057 = vadd.f32 %v3055, %v2970
        %v3058 = vadd.f32 %v3056, %v2972
        %v3059 = vxor.u32 %v3057, 2147483648
        %v3060 = vxor.u32 %v3058, 2147483648
        %v3061 = vmul.f32 %v3059, 1.442695
        %v3062 = vpow.pop %v3061
        %v3063 = vmul.f32 %v3060, 1.442695
        %v3064 = vpow.pop %v3063
        %v3065 = vadd.f32 %v3062, 1.0
        %v3066 = vadd.f32 %v3064, 1.0
        %v3067 = vrcp.pop %v3065
        %v3068 = vmul.f32 1.0, %v3067
        %v3069 = vrcp.pop %v3066
        %v3070 = vmul.f32 1.0, %v3069
        %v3071 = vsub.f32 %v3068, 0.5
        %v3072 = vsub.f32 %v3070, 0.5
        %3073 = vst [vmem:[%s148] sm:$0xff] %v3071
        %3074 = vst [vmem:[%s148 + $0x8] sm:$0xff] %v3072
        %v3075 = vxor.u32 %v2520, 2147483648
        %v3076 = vxor.u32 %v2521, 2147483648
        %v3077 = vmul.f32 %v3075, 1.442695
        %v3078 = vpow.pop %v3077
        %v3079 = vmul.f32 %v3076, 1.442695
        %v3080 = vpow.pop %v3079
        %v3081 = vadd.f32 %v3078, 1.0
        %v3082 = vadd.f32 %v3080, 1.0
        %v3083 = vrcp.pop %v3081
        %v3084 = vmul.f32 1.0, %v3083
        %v3085 = vrcp.pop %v3082
        %v3086 = vmul.f32 1.0, %v3085
        %v3087 = vsub.f32 %v3084, 0.5
        %v3088 = vsub.f32 %v3086, 0.5
        %3089 = vst [vmem:[%s148 + $0x10] sm:$0xff] %v3087
        %3090 = vst [vmem:[%s148 + $0x18] sm:$0xff] %v3088
        %s3091 = sand.u32 %s69, 1
        %s3092 = sand.u32 %s69, 1
        %s3093 = smul.addr %s3092, 32
        %s3094 = scalar_lea.vmem [#allocation4], %s3093
        // Predicated region
        $region33: #{forward.1} parent=27 // pred_check
          %p3095 = pneg %p79
        $region34: #{forward.1} parent=27 // pred_check_branch
          %3097 = sbr.rel (%p3095) target = $region36
        $region35: #{forward.1} parent=27 // pred_region
          %s3098 = smul.u32 2, %s14
          %s3099 = smul.addr %s3098, 8
          %s3100 = scalar_lea.vmem %s2, %s3099
          // Predicated region
          $region37: #{forward.1} parent=35 // pred_check
            _
          $region38: #{forward.1} parent=35 // pred_check_branch
            %3102 = sbr.rel (0) target = $region40
          $region39: #{forward.1} parent=35 // pred_region
            // Predicated region
            $region41: #{forward.1} parent=39 // pred_check
              _
            $region42: #{forward.1} parent=39 // pred_check_branch
              %3104 = sbr.rel (0) target = $region44
            $region43: #{forward.1} parent=39 // pred_region
              loop: start=0, step=1, limit=1
              $region45: #{forward.1} parent=43 // loop_pre_header
                _
              $region46: #{forward.1} parent=43 // loop_header
                %s3106 = sphi 0, %s3110
                %p3107 = scmp.ge.s32.totalorder %s3106, 1
                %s3111 = sphi %s3094, %s3094
                %s3112 = sphi %s3100, %s3100
              $region47: #{forward.1} parent=43 // loop_header_branch
                %3109 = sbr.rel (%p3107) target = $region51
              $region48: #{forward.1} parent=43 // loop_body
                %v3113 = vld [vmem:[%s3111] sm:$0xff]
                %3114 = vst [vmem:[%s3112] sm:$0xff] %v3113
                %v3115 = vld [vmem:[%s3111 + $0x8] sm:$0xff]
                %3116 = vst [vmem:[%s3112 + $0x8] sm:$0xff] %v3115
                %v3117 = vld [vmem:[%s3111 + $0x10] sm:$0xff]
                %3118 = vst [vmem:[%s3112 + $0x20] sm:$0xff] %v3117
                %v3119 = vld [vmem:[%s3111 + $0x18] sm:$0xff]
                %3120 = vst [vmem:[%s3112 + $0x28] sm:$0xff] %v3119
              $region49: #{forward.1} parent=43 // loop_footer
                %s3110 = sadd.s32 1, %s3106
              $region50: #{forward.1} parent=43 // loop_footer_branch
                %3105 = sbr.rel target = $region46
              $region51: #{forward.1} parent=43 // loop_exit
                _
            $region44: #{forward.1} parent=39 // pred_fallthru
              _
            // Predicated region
            $region52: #{forward.1} parent=39 // pred_check
              _
            $region53: #{forward.1} parent=39 // pred_check_branch
              %3122 = sbr.rel target = $region55
            $region54: #{forward.1} parent=39 // pred_region
              _
            $region55: #{forward.1} parent=39 // pred_fallthru
              _
          $region40: #{forward.1} parent=35 // pred_fallthru
            _
          %3123 = vnop
        $region36: #{forward.1} parent=27 // pred_fallthru
          _
      $region28: #{forward.1} parent=5 // pred_fallthru
        _
      %p3124 = scmp.le.s32.totalorder 2, %s9
      // Predicated region
      $region56: #{forward.1} parent=5 // pred_check
        %p3125 = pneg %p3124
      $region57: #{forward.1} parent=5 // pred_check_branch
        %3127 = sbr.rel (%p3125) target = $region59
      $region58: #{forward.1} parent=5 // pred_region
        %s3128 = ssub.s32 %s9, 2
        // Predicated region
        $region60: #{forward.1} parent=58 // pred_check
          %p3129 = pneg %p85
        $region61: #{forward.1} parent=58 // pred_check_branch
          %3131 = sbr.rel (%p3129) target = $region63
        $region62: #{forward.1} parent=58 // pred_region
          %s3132 = sand.u32 %s70, 1
          %s3133 = sand.u32 %s70, 1
          %s3134 = smul.addr %s3133, 32
          %s3135 = scalar_lea.vmem [#allocation4], %s3134
        $region63: #{forward.1} parent=58 // pred_fallthru
          _
      $region59: #{forward.1} parent=5 // pred_fallthru
        _
    $region6: #{forward.1} parent=1 // loop_footer
      %s13 = sadd.s32 1, %s9
    $region7: #{forward.1} parent=1 // loop_footer_branch
      %8 = sbr.rel target = $region3
    $region8: #{forward.1} parent=1 // loop_exit
      _
    %3136 = vsyncpa [#allocation3], 1
    %s3137 = scalar_lea.sflag [#allocation3], 1
    %3138 = vsyncpa %s3137, 1

</llo_original>
